<compile_context>
chip_gen: v7x
topology: tpu7x:2x2x1
jax: 0.10.0
libtpu: 0.0.40
codegen_flags: <defaults>
</compile_context>

<pallas_src>
import functools

import jax
import jax.numpy as jnp
from jax.experimental import pallas as pl
from jax.experimental.pallas import tpu as pltpu

LANE = 128


def _round_up(n, m):
    return ((n + m - 1) // m) * m


def _vmem_spec():
    return pl.BlockSpec(memory_space=pltpu.MemorySpace.VMEM)


# ----------------------------------------------------------------------------
# Fused kernel: perspective MLP + 3 GRU layers, everything VMEM resident.
#   x_ref    : (T, P) f32   input sequence, lanes >= input_dim are zero
#   mlpw_ref : (3P, P) f32  [w1; w2; w3], each padded to (P, P)
#   gruw_ref : (6P, P) bf16 [wih0; whh0; wih1; whh1; wih2; whh2]
#   bias_ref : (16, P) f32  [b1, b2, b3, bih0, bhhn0, bih1, bhhn1, bih2, bhhn2]
# Gate packing: columns 0:H = r, H:2H = z, 2H:3H = n, rest zero.
# Hidden state h lives in lanes 0:H of a (1, P) row.
# ----------------------------------------------------------------------------
def mirror_fused_kernel(x_ref, mlpw_ref, gruw_ref, bias_ref,
                        persp_ref, pred_ref, *, H):
    T, P = x_ref.shape
    f32 = jnp.float32
    bf16 = jnp.bfloat16

    # ---------------- perspective MLP (parallel over T, f32 MXU) ----------------
    x = x_ref[...]                                                       # (T, P)
    h1 = jnp.dot(x, mlpw_ref[pl.ds(0, P), :], preferred_element_type=f32)
    h1 = jnp.maximum(h1 + bias_ref[pl.ds(0, 1), :], 0.0)                 # ReLU
    h2 = jnp.dot(h1, mlpw_ref[pl.ds(P, P), :], preferred_element_type=f32)
    h2 = h2 + bias_ref[pl.ds(1, 1), :]
    # Dropout(0.1): identity under eval semantics.
    # TODO(synk): training-mode dropout (pltpu.prng_random_bits mask) not emitted.
    persp_ref[...] = (
        jnp.dot(h2, mlpw_ref[pl.ds(2 * P, P), :], preferred_element_type=f32)
        + bias_ref[pl.ds(2, 1), :])

    # ---------------- 3-layer GRU (PyTorch gate order r, z, n) ----------------
    lane = jax.lax.broadcasted_iota(jnp.int32, (1, P), 1)
    hmask = lane < H                                   # valid hidden lanes 0:H

    def run_layer(seq_in, layer):
        wih_off = 2 * layer * P
        whh_off = (2 * layer + 1) * P
        bih = bias_ref[pl.ds(3 + 2 * layer, 1), :]     # r/z b_hh pre-folded in
        bhh_n = bias_ref[pl.ds(4 + 2 * layer, 1), :]   # b_hn at lanes 2H:3H

        # Hoisted input projection: one (T, P) x (P, P) bf16 matmul.
        gi_all = (jnp.dot(seq_in.astype(bf16), gruw_ref[pl.ds(wih_off, P), :],
                          preferred_element_type=f32) + bih)             # (T, P)

        h = jnp.zeros((1, P), f32)
        hs = []
        for t in range(T):                             # static unroll
            gi = gi_all[t:t + 1, :]
            if t == 0:
                # h == 0 -> gh == 0: skip the recurrent matmul entirely.
                s = jax.nn.sigmoid(gi)                                   # r, z
                r_at_n = pltpu.roll(s, shift=2 * H, axis=1)              # r -> n lanes
                n = jnp.tanh(gi + r_at_n * bhh_n)
                n_al = pltpu.roll(n, shift=P - 2 * H, axis=1)            # n -> h lanes
                z_al = pltpu.roll(s, shift=P - H, axis=1)                # z -> h lanes
                h = n_al - z_al * n_al                                   # (1-z)*n
            else:
                # Recurrent matmul: bf16 operands, f32 accumulation.  W_hh is
                # read from the ref at the point of use (no vreg hoist).
                gh = jnp.dot(h.astype(bf16), gruw_ref[pl.ds(whh_off, P), :],
                             preferred_element_type=f32)                 # (1, P)
                s = jax.nn.sigmoid(gi + gh)                              # r, z
                r_at_n = pltpu.roll(s, shift=2 * H, axis=1)
                n = jnp.tanh(gi + r_at_n * (gh + bhh_n))
                n_al = pltpu.roll(n, shift=P - 2 * H, axis=1)
                z_al = pltpu.roll(s, shift=P - H, axis=1)
                h = n_al + z_al * (h - n_al)                             # n + z*(h-n)
            h = jnp.where(hmask, h, 0.0)               # keep padded lanes exactly 0
            hs.append(h)
        return jnp.concatenate(hs, axis=0)             # (T, P), stays in vregs

    seq0 = run_layer(x, 0)
    seq1 = run_layer(seq0, 1)
    pred_ref[...] = run_layer(seq1, 2)                 # single lane-dense slab store


# ----------------------------------------------------------------------------
# Parameter init (PyTorch-equivalent uniform init, stored pre-transposed)
# ----------------------------------------------------------------------------
def _uniform(key, shape, bound):
    return jax.random.uniform(key, shape, jnp.float32, -bound, bound)


def init_mirror_engine(key, input_dim, hidden_dim, num_gru_layers=3):
    keys = iter(jax.random.split(key, 6 + 4 * num_gru_layers))

    def linear(in_d, out_d):
        b = 1.0 / float(in_d) ** 0.5
        return _uniform(next(keys), (in_d, out_d), b), _uniform(next(keys), (1, out_d), b)

    w1, b1 = linear(input_dim, hidden_dim)
    w2, b2 = linear(hidden_dim, hidden_dim)
    w3, b3 = linear(hidden_dim, input_dim)

    gru = []
    bound = 1.0 / float(hidden_dim) ** 0.5
    for layer in range(num_gru_layers):
        in_d = input_dim if layer == 0 else hidden_dim
        wih_t = _uniform(next(keys), (in_d, 3 * hidden_dim), bound)        # W_ih^T
        whh_t = _uniform(next(keys), (hidden_dim, 3 * hidden_dim), bound)  # W_hh^T
        bih = _uniform(next(keys), (1, 3 * hidden_dim), bound)
        bhh = _uniform(next(keys), (1, 3 * hidden_dim), bound)
        gru.append((wih_t, whh_t, bih, bhh))

    return (w1, b1, w2, b2, w3, b3), gru


# ----------------------------------------------------------------------------
# Pack params into three contiguous blobs (done once, outside the kernel).
# ----------------------------------------------------------------------------
def pack_params(mlp_params, gru_params, input_dim, hidden_dim):
    H = hidden_dim
    P = _round_up(max(input_dim, hidden_dim, 3 * hidden_dim), LANE)
    w1, b1, w2, b2, w3, b3 = mlp_params

    def pad2(a):
        return jnp.pad(a, ((0, P - a.shape[0]), (0, P - a.shape[1])))

    def padrow(a):
        return jnp.pad(a, ((0, 0), (0, P - a.shape[1])))

    mlp_blob = jnp.concatenate([pad2(w1), pad2(w2), pad2(w3)], axis=0)   # (3P, P) f32

    gru_mats = []
    bias_rows = [padrow(b1), padrow(b2), padrow(b3)]
    for (wih_t, whh_t, bih, bhh) in gru_params:
        gru_mats += [pad2(wih_t), pad2(whh_t)]
        # Fold the h-independent r/z halves of b_hh into b_ih; keep only the
        # n-gate b_hh separate (it lives inside r * (W_hn h + b_hn)).
        bih_fold = jnp.concatenate(
            [bih[:, :2 * H] + bhh[:, :2 * H], bih[:, 2 * H:]], axis=-1)  # (1, 3H)
        bias_rows.append(padrow(bih_fold))
        bhhn = jnp.pad(bhh[:, 2 * H:], ((0, 0), (2 * H, P - 3 * H)))     # at lanes 2H:3H
        bias_rows.append(bhhn)

    gru_blob = jnp.concatenate(gru_mats, axis=0).astype(jnp.bfloat16)    # (6P, P) bf16
    bias_blob = jnp.concatenate(bias_rows, axis=0)                       # (9, P) f32
    bias_blob = jnp.pad(bias_blob, ((0, 16 - bias_blob.shape[0]), (0, 0)))
    return (mlp_blob, gru_blob, bias_blob), P


# ----------------------------------------------------------------------------
# Forward wrapper (single pallas_call, 4 input DMAs, 2 output DMAs, no scratch)
# ----------------------------------------------------------------------------
def mirror_engine_forward(x, packed, input_dim, hidden_dim, P):
    T = x.shape[0]
    mlp_blob, gru_blob, bias_blob = packed
    x_p = jnp.pad(x, ((0, 0), (0, P - input_dim)))     # lane-dense kernel input

    kernel = functools.partial(mirror_fused_kernel, H=hidden_dim)
    persp_p, pred_p = pl.pallas_call(
        kernel,
        out_shape=(
            jax.ShapeDtypeStruct((T, P), jnp.float32),
            jax.ShapeDtypeStruct((T, P), jnp.float32),
        ),
        in_specs=[_vmem_spec() for _ in range(4)],
        out_specs=(_vmem_spec(), _vmem_spec()),
    )(x_p, mlp_blob, gru_blob, bias_blob)

    # Slice padded lanes back off (perspective, predictions)
    return persp_p[:, :input_dim], pred_p[:, :hidden_dim]


if __name__ == "__main__":
    input_dim, hidden_dim, seq = 16, 32, 8

    key = jax.random.PRNGKey(0)
    k_param, k_x = jax.random.split(key)
    mlp_params, gru_params = init_mirror_engine(k_param, input_dim, hidden_dim)
    packed, P = pack_params(mlp_params, gru_params, input_dim, hidden_dim)

    x = jax.random.normal(k_x, (seq, input_dim), dtype=jnp.float32)

    perspective, predictions = mirror_engine_forward(
        x, packed, input_dim, hidden_dim, P)
    jax.block_until_ready(perspective)
    jax.block_until_ready(predictions)

    assert perspective.shape == (seq, input_dim)
    assert predictions.shape == (seq, hidden_dim)
    assert bool(jnp.all(jnp.isfinite(perspective)))
    assert bool(jnp.all(jnp.isfinite(predictions)))
    print("KERNEL_OK")
</pallas_src>

<mosaic_0001>
module attributes {stable_mosaic.version = 11 : i64} {
  func.func @mirror_fused_kernel(%arg0: memref<8x128xf32, #tpu.memory_space<vmem>>, %arg1: memref<384x128xf32, #tpu.memory_space<vmem>>, %arg2: memref<768x128xbf16, #tpu.memory_space<vmem>>, %arg3: memref<16x128xf32, #tpu.memory_space<vmem>>, %arg4: memref<8x128xf32, #tpu.memory_space<vmem>>, %arg5: memref<8x128xf32, #tpu.memory_space<vmem>>) attributes {dimension_semantics = [], scalar_prefetch = 0 : i64, scratch_operands = 0 : i64, tpu.core_type = #tpu.core_type<tc>} {
    %c0 = arith.constant 0 : index
    %c0_0 = arith.constant 0 : index
    %0 = vector.load %arg0[%c0, %c0_0] : memref<8x128xf32, #tpu.memory_space<vmem>>, vector<8x128xf32>
    %c0_1 = arith.constant 0 : index
    %c0_2 = arith.constant 0 : index
    %1 = vector.load %arg1[%c0_1, %c0_2] : memref<384x128xf32, #tpu.memory_space<vmem>>, vector<128x128xf32>
    %cst = arith.constant dense<0.000000e+00> : vector<8x128xf32>
    %2 = tpu.matmul %0, %1, %cst {dimension_numbers = #tpu.dot_dimension_numbers<[1], [0], [0], [1], [0, 0, 1, 1], [], []>} : vector<8x128xf32>, vector<128x128xf32>, vector<8x128xf32> -> vector<8x128xf32>
    %c0_3 = arith.constant 0 : index
    %c0_4 = arith.constant 0 : index
    %3 = vector.load %arg3[%c0_3, %c0_4] : memref<16x128xf32, #tpu.memory_space<vmem>>, vector<1x128xf32>
    %4 = vector.broadcast %3 : vector<1x128xf32> to vector<8x128xf32>
    %5 = arith.addf %2, %4 : vector<8x128xf32>
    %cst_5 = arith.constant 0.000000e+00 : f32
    %6 = vector.broadcast %cst_5 : f32 to vector<8x128xf32>
    %7 = arith.maximumf %5, %6 : vector<8x128xf32>
    %c128 = arith.constant 128 : index
    %c0_6 = arith.constant 0 : index
    %8 = vector.load %arg1[%c128, %c0_6] : memref<384x128xf32, #tpu.memory_space<vmem>>, vector<128x128xf32>
    %cst_7 = arith.constant dense<0.000000e+00> : vector<8x128xf32>
    %9 = tpu.matmul %7, %8, %cst_7 {dimension_numbers = #tpu.dot_dimension_numbers<[1], [0], [0], [1], [0, 0, 1, 1], [], []>} : vector<8x128xf32>, vector<128x128xf32>, vector<8x128xf32> -> vector<8x128xf32>
    %c1 = arith.constant 1 : index
    %c0_8 = arith.constant 0 : index
    %10 = vector.load %arg3[%c1, %c0_8] : memref<16x128xf32, #tpu.memory_space<vmem>>, vector<1x128xf32>
    %11 = vector.broadcast %10 : vector<1x128xf32> to vector<8x128xf32>
    %12 = arith.addf %9, %11 : vector<8x128xf32>
    %c256 = arith.constant 256 : index
    %c0_9 = arith.constant 0 : index
    %13 = vector.load %arg1[%c256, %c0_9] : memref<384x128xf32, #tpu.memory_space<vmem>>, vector<128x128xf32>
    %cst_10 = arith.constant dense<0.000000e+00> : vector<8x128xf32>
    %14 = tpu.matmul %12, %13, %cst_10 {dimension_numbers = #tpu.dot_dimension_numbers<[1], [0], [0], [1], [0, 0, 1, 1], [], []>} : vector<8x128xf32>, vector<128x128xf32>, vector<8x128xf32> -> vector<8x128xf32>
    %c2 = arith.constant 2 : index
    %c0_11 = arith.constant 0 : index
    %15 = vector.load %arg3[%c2, %c0_11] : memref<16x128xf32, #tpu.memory_space<vmem>>, vector<1x128xf32>
    %16 = vector.broadcast %15 : vector<1x128xf32> to vector<8x128xf32>
    %17 = arith.addf %14, %16 : vector<8x128xf32>
    %c0_12 = arith.constant 0 : index
    %c0_13 = arith.constant 0 : index
    %18 = vector.load %arg4[%c0_12, %c0_13] : memref<8x128xf32, #tpu.memory_space<vmem>>, vector<8x128xf32>
    tpu.vector_store %arg4[%c0_12, %c0_13], %17 {strides = array<i32>} : memref<8x128xf32, #tpu.memory_space<vmem>>, vector<8x128xf32>,
    %19 = tpu.iota {dimensions = array<i32: 1>} : vector<1x128xi32>
    %c32_i32 = arith.constant 32 : i32
    %20 = vector.broadcast %c32_i32 : i32 to vector<1x128xi32>
    %21 = arith.cmpi slt, %19, %20 : vector<1x128xi32>
    %c3 = arith.constant 3 : index
    %c0_14 = arith.constant 0 : index
    %22 = vector.load %arg3[%c3, %c0_14] : memref<16x128xf32, #tpu.memory_space<vmem>>, vector<1x128xf32>
    %c4 = arith.constant 4 : index
    %c0_15 = arith.constant 0 : index
    %23 = vector.load %arg3[%c4, %c0_15] : memref<16x128xf32, #tpu.memory_space<vmem>>, vector<1x128xf32>
    %24 = arith.truncf %0 : vector<8x128xf32> to vector<8x128xbf16>
    %c0_16 = arith.constant 0 : index
    %c0_17 = arith.constant 0 : index
    %25 = vector.load %arg2[%c0_16, %c0_17] : memref<768x128xbf16, #tpu.memory_space<vmem>>, vector<128x128xbf16>
    %cst_18 = arith.constant dense<0.000000e+00> : vector<8x128xf32>
    %26 = tpu.matmul %24, %25, %cst_18 {dimension_numbers = #tpu.dot_dimension_numbers<[1], [0], [0], [1], [0, 0, 1, 1], [], []>} : vector<8x128xbf16>, vector<128x128xbf16>, vector<8x128xf32> -> vector<8x128xf32>
    %27 = vector.broadcast %22 : vector<1x128xf32> to vector<8x128xf32>
    %28 = arith.addf %26, %27 : vector<8x128xf32>
    %29 = vector.extract_strided_slice %28 {offsets = [0, 0], sizes = [1, 128], strides = [1, 1]} : vector<8x128xf32> to vector<1x128xf32>
    %30 = arith.negf %29 : vector<1x128xf32>
    %31 = math.exp %30 : vector<1x128xf32>
    %cst_19 = arith.constant 1.000000e+00 : f32
    %32 = vector.broadcast %cst_19 : f32 to vector<1x128xf32>
    %33 = arith.addf %32, %31 : vector<1x128xf32>
    %34 = arith.divf %32, %33 : vector<1x128xf32>
    %c64_i32 = arith.constant 64 : i32
    %35 = tpu.dynamic_rotate %34 by %c64_i32 dim 1 : vector<1x128xf32>, i32 -> vector<1x128xf32>
    %36 = arith.mulf %35, %23 : vector<1x128xf32>
    %37 = arith.addf %29, %36 : vector<1x128xf32>
    %38 = math.tanh %37 : vector<1x128xf32>
    %c64_i32_20 = arith.constant 64 : i32
    %39 = tpu.dynamic_rotate %38 by %c64_i32_20 dim 1 : vector<1x128xf32>, i32 -> vector<1x128xf32>
    %c96_i32 = arith.constant 96 : i32
    %40 = tpu.dynamic_rotate %34 by %c96_i32 dim 1 : vector<1x128xf32>, i32 -> vector<1x128xf32>
    %41 = arith.mulf %40, %39 : vector<1x128xf32>
    %42 = arith.subf %39, %41 : vector<1x128xf32>
    %cst_21 = arith.constant 0.000000e+00 : f32
    %43 = vector.broadcast %cst_21 : f32 to vector<1x128xf32>
    %44 = arith.select %21, %42, %43 : vector<1x128xi1>, vector<1x128xf32>
    %45 = vector.extract_strided_slice %28 {offsets = [1, 0], sizes = [1, 128], strides = [1, 1]} : vector<8x128xf32> to vector<1x128xf32>
    %46 = arith.truncf %44 : vector<1x128xf32> to vector<1x128xbf16>
    %c128_22 = arith.constant 128 : index
    %c0_23 = arith.constant 0 : index
    %47 = vector.load %arg2[%c128_22, %c0_23] : memref<768x128xbf16, #tpu.memory_space<vmem>>, vector<128x128xbf16>
    %cst_24 = arith.constant dense<0.000000e+00> : vector<1x128xf32>
    %48 = tpu.matmul %46, %47, %cst_24 {dimension_numbers = #tpu.dot_dimension_numbers<[1], [0], [0], [1], [0, 0, 1, 1], [], []>} : vector<1x128xbf16>, vector<128x128xbf16>, vector<1x128xf32> -> vector<1x128xf32>
    %49 = arith.addf %45, %48 : vector<1x128xf32>
    %50 = arith.negf %49 : vector<1x128xf32>
    %51 = math.exp %50 : vector<1x128xf32>
    %cst_25 = arith.constant 1.000000e+00 : f32
    %52 = vector.broadcast %cst_25 : f32 to vector<1x128xf32>
    %53 = arith.addf %52, %51 : vector<1x128xf32>
    %54 = arith.divf %52, %53 : vector<1x128xf32>
    %c64_i32_26 = arith.constant 64 : i32
    %55 = tpu.dynamic_rotate %54 by %c64_i32_26 dim 1 : vector<1x128xf32>, i32 -> vector<1x128xf32>
    %56 = arith.addf %48, %23 : vector<1x128xf32>
    %57 = arith.mulf %55, %56 : vector<1x128xf32>
    %58 = arith.addf %45, %57 : vector<1x128xf32>
    %59 = math.tanh %58 : vector<1x128xf32>
    %c64_i32_27 = arith.constant 64 : i32
    %60 = tpu.dynamic_rotate %59 by %c64_i32_27 dim 1 : vector<1x128xf32>, i32 -> vector<1x128xf32>
    %c96_i32_28 = arith.constant 96 : i32
    %61 = tpu.dynamic_rotate %54 by %c96_i32_28 dim 1 : vector<1x128xf32>, i32 -> vector<1x128xf32>
    %62 = arith.subf %44, %60 : vector<1x128xf32>
    %63 = arith.mulf %61, %62 : vector<1x128xf32>
    %64 = arith.addf %60, %63 : vector<1x128xf32>
    %cst_29 = arith.constant 0.000000e+00 : f32
    %65 = vector.broadcast %cst_29 : f32 to vector<1x128xf32>
    %66 = arith.select %21, %64, %65 : vector<1x128xi1>, vector<1x128xf32>
    %67 = vector.extract_strided_slice %28 {offsets = [2, 0], sizes = [1, 128], strides = [1, 1]} : vector<8x128xf32> to vector<1x128xf32>
    %68 = arith.truncf %66 : vector<1x128xf32> to vector<1x128xbf16>
    %c128_30 = arith.constant 128 : index
    %c0_31 = arith.constant 0 : index
    %69 = vector.load %arg2[%c128_30, %c0_31] : memref<768x128xbf16, #tpu.memory_space<vmem>>, vector<128x128xbf16>
    %cst_32 = arith.constant dense<0.000000e+00> : vector<1x128xf32>
    %70 = tpu.matmul %68, %69, %cst_32 {dimension_numbers = #tpu.dot_dimension_numbers<[1], [0], [0], [1], [0, 0, 1, 1], [], []>} : vector<1x128xbf16>, vector<128x128xbf16>, vector<1x128xf32> -> vector<1x128xf32>
    %71 = arith.addf %67, %70 : vector<1x128xf32>
    %72 = arith.negf %71 : vector<1x128xf32>
    %73 = math.exp %72 : vector<1x128xf32>
    %cst_33 = arith.constant 1.000000e+00 : f32
    %74 = vector.broadcast %cst_33 : f32 to vector<1x128xf32>
    %75 = arith.addf %74, %73 : vector<1x128xf32>
    %76 = arith.divf %74, %75 : vector<1x128xf32>
    %c64_i32_34 = arith.constant 64 : i32
    %77 = tpu.dynamic_rotate %76 by %c64_i32_34 dim 1 : vector<1x128xf32>, i32 -> vector<1x128xf32>
    %78 = arith.addf %70, %23 : vector<1x128xf32>
    %79 = arith.mulf %77, %78 : vector<1x128xf32>
    %80 = arith.addf %67, %79 : vector<1x128xf32>
    %81 = math.tanh %80 : vector<1x128xf32>
    %c64_i32_35 = arith.constant 64 : i32
    %82 = tpu.dynamic_rotate %81 by %c64_i32_35 dim 1 : vector<1x128xf32>, i32 -> vector<1x128xf32>
    %c96_i32_36 = arith.constant 96 : i32
    %83 = tpu.dynamic_rotate %76 by %c96_i32_36 dim 1 : vector<1x128xf32>, i32 -> vector<1x128xf32>
    %84 = arith.subf %66, %82 : vector<1x128xf32>
    %85 = arith.mulf %83, %84 : vector<1x128xf32>
    %86 = arith.addf %82, %85 : vector<1x128xf32>
    %cst_37 = arith.constant 0.000000e+00 : f32
    %87 = vector.broadcast %cst_37 : f32 to vector<1x128xf32>
    %88 = arith.select %21, %86, %87 : vector<1x128xi1>, vector<1x128xf32>
    %89 = vector.extract_strided_slice %28 {offsets = [3, 0], sizes = [1, 128], strides = [1, 1]} : vector<8x128xf32> to vector<1x128xf32>
    %90 = arith.truncf %88 : vector<1x128xf32> to vector<1x128xbf16>
    %c128_38 = arith.constant 128 : index
    %c0_39 = arith.constant 0 : index
    %91 = vector.load %arg2[%c128_38, %c0_39] : memref<768x128xbf16, #tpu.memory_space<vmem>>, vector<128x128xbf16>
    %cst_40 = arith.constant dense<0.000000e+00> : vector<1x128xf32>
    %92 = tpu.matmul %90, %91, %cst_40 {dimension_numbers = #tpu.dot_dimension_numbers<[1], [0], [0], [1], [0, 0, 1, 1], [], []>} : vector<1x128xbf16>, vector<128x128xbf16>, vector<1x128xf32> -> vector<1x128xf32>
    %93 = arith.addf %89, %92 : vector<1x128xf32>
    %94 = arith.negf %93 : vector<1x128xf32>
    %95 = math.exp %94 : vector<1x128xf32>
    %cst_41 = arith.constant 1.000000e+00 : f32
    %96 = vector.broadcast %cst_41 : f32 to vector<1x128xf32>
    %97 = arith.addf %96, %95 : vector<1x128xf32>
    %98 = arith.divf %96, %97 : vector<1x128xf32>
    %c64_i32_42 = arith.constant 64 : i32
    %99 = tpu.dynamic_rotate %98 by %c64_i32_42 dim 1 : vector<1x128xf32>, i32 -> vector<1x128xf32>
    %100 = arith.addf %92, %23 : vector<1x128xf32>
    %101 = arith.mulf %99, %100 : vector<1x128xf32>
    %102 = arith.addf %89, %101 : vector<1x128xf32>
    %103 = math.tanh %102 : vector<1x128xf32>
    %c64_i32_43 = arith.constant 64 : i32
    %104 = tpu.dynamic_rotate %103 by %c64_i32_43 dim 1 : vector<1x128xf32>, i32 -> vector<1x128xf32>
    %c96_i32_44 = arith.constant 96 : i32
    %105 = tpu.dynamic_rotate %98 by %c96_i32_44 dim 1 : vector<1x128xf32>, i32 -> vector<1x128xf32>
    %106 = arith.subf %88, %104 : vector<1x128xf32>
    %107 = arith.mulf %105, %106 : vector<1x128xf32>
    %108 = arith.addf %104, %107 : vector<1x128xf32>
    %cst_45 = arith.constant 0.000000e+00 : f32
    %109 = vector.broadcast %cst_45 : f32 to vector<1x128xf32>
    %110 = arith.select %21, %108, %109 : vector<1x128xi1>, vector<1x128xf32>
    %111 = vector.extract_strided_slice %28 {offsets = [4, 0], sizes = [1, 128], strides = [1, 1]} : vector<8x128xf32> to vector<1x128xf32>
    %112 = arith.truncf %110 : vector<1x128xf32> to vector<1x128xbf16>
    %c128_46 = arith.constant 128 : index
    %c0_47 = arith.constant 0 : index
    %113 = vector.load %arg2[%c128_46, %c0_47] : memref<768x128xbf16, #tpu.memory_space<vmem>>, vector<128x128xbf16>
    %cst_48 = arith.constant dense<0.000000e+00> : vector<1x128xf32>
    %114 = tpu.matmul %112, %113, %cst_48 {dimension_numbers = #tpu.dot_dimension_numbers<[1], [0], [0], [1], [0, 0, 1, 1], [], []>} : vector<1x128xbf16>, vector<128x128xbf16>, vector<1x128xf32> -> vector<1x128xf32>
    %115 = arith.addf %111, %114 : vector<1x128xf32>
    %116 = arith.negf %115 : vector<1x128xf32>
    %117 = math.exp %116 : vector<1x128xf32>
    %cst_49 = arith.constant 1.000000e+00 : f32
    %118 = vector.broadcast %cst_49 : f32 to vector<1x128xf32>
    %119 = arith.addf %118, %117 : vector<1x128xf32>
    %120 = arith.divf %118, %119 : vector<1x128xf32>
    %c64_i32_50 = arith.constant 64 : i32
    %121 = tpu.dynamic_rotate %120 by %c64_i32_50 dim 1 : vector<1x128xf32>, i32 -> vector<1x128xf32>
    %122 = arith.addf %114, %23 : vector<1x128xf32>
    %123 = arith.mulf %121, %122 : vector<1x128xf32>
    %124 = arith.addf %111, %123 : vector<1x128xf32>
    %125 = math.tanh %124 : vector<1x128xf32>
    %c64_i32_51 = arith.constant 64 : i32
    %126 = tpu.dynamic_rotate %125 by %c64_i32_51 dim 1 : vector<1x128xf32>, i32 -> vector<1x128xf32>
    %c96_i32_52 = arith.constant 96 : i32
    %127 = tpu.dynamic_rotate %120 by %c96_i32_52 dim 1 : vector<1x128xf32>, i32 -> vector<1x128xf32>
    %128 = arith.subf %110, %126 : vector<1x128xf32>
    %129 = arith.mulf %127, %128 : vector<1x128xf32>
    %130 = arith.addf %126, %129 : vector<1x128xf32>
    %cst_53 = arith.constant 0.000000e+00 : f32
    %131 = vector.broadcast %cst_53 : f32 to vector<1x128xf32>
    %132 = arith.select %21, %130, %131 : vector<1x128xi1>, vector<1x128xf32>
    %133 = vector.extract_strided_slice %28 {offsets = [5, 0], sizes = [1, 128], strides = [1, 1]} : vector<8x128xf32> to vector<1x128xf32>
    %134 = arith.truncf %132 : vector<1x128xf32> to vector<1x128xbf16>
    %c128_54 = arith.constant 128 : index
    %c0_55 = arith.constant 0 : index
    %135 = vector.load %arg2[%c128_54, %c0_55] : memref<768x128xbf16, #tpu.memory_space<vmem>>, vector<128x128xbf16>
    %cst_56 = arith.constant dense<0.000000e+00> : vector<1x128xf32>
    %136 = tpu.matmul %134, %135, %cst_56 {dimension_numbers = #tpu.dot_dimension_numbers<[1], [0], [0], [1], [0, 0, 1, 1], [], []>} : vector<1x128xbf16>, vector<128x128xbf16>, vector<1x128xf32> -> vector<1x128xf32>
    %137 = arith.addf %133, %136 : vector<1x128xf32>
    %138 = arith.negf %137 : vector<1x128xf32>
    %139 = math.exp %138 : vector<1x128xf32>
    %cst_57 = arith.constant 1.000000e+00 : f32
    %140 = vector.broadcast %cst_57 : f32 to vector<1x128xf32>
    %141 = arith.addf %140, %139 : vector<1x128xf32>
    %142 = arith.divf %140, %141 : vector<1x128xf32>
    %c64_i32_58 = arith.constant 64 : i32
    %143 = tpu.dynamic_rotate %142 by %c64_i32_58 dim 1 : vector<1x128xf32>, i32 -> vector<1x128xf32>
    %144 = arith.addf %136, %23 : vector<1x128xf32>
    %145 = arith.mulf %143, %144 : vector<1x128xf32>
    %146 = arith.addf %133, %145 : vector<1x128xf32>
    %147 = math.tanh %146 : vector<1x128xf32>
    %c64_i32_59 = arith.constant 64 : i32
    %148 = tpu.dynamic_rotate %147 by %c64_i32_59 dim 1 : vector<1x128xf32>, i32 -> vector<1x128xf32>
    %c96_i32_60 = arith.constant 96 : i32
    %149 = tpu.dynamic_rotate %142 by %c96_i32_60 dim 1 : vector<1x128xf32>, i32 -> vector<1x128xf32>
    %150 = arith.subf %132, %148 : vector<1x128xf32>
    %151 = arith.mulf %149, %150 : vector<1x128xf32>
    %152 = arith.addf %148, %151 : vector<1x128xf32>
    %cst_61 = arith.constant 0.000000e+00 : f32
    %153 = vector.broadcast %cst_61 : f32 to vector<1x128xf32>
    %154 = arith.select %21, %152, %153 : vector<1x128xi1>, vector<1x128xf32>
    %155 = vector.extract_strided_slice %28 {offsets = [6, 0], sizes = [1, 128], strides = [1, 1]} : vector<8x128xf32> to vector<1x128xf32>
    %156 = arith.truncf %154 : vector<1x128xf32> to vector<1x128xbf16>
    %c128_62 = arith.constant 128 : index
    %c0_63 = arith.constant 0 : index
    %157 = vector.load %arg2[%c128_62, %c0_63] : memref<768x128xbf16, #tpu.memory_space<vmem>>, vector<128x128xbf16>
    %cst_64 = arith.constant dense<0.000000e+00> : vector<1x128xf32>
    %158 = tpu.matmul %156, %157, %cst_64 {dimension_numbers = #tpu.dot_dimension_numbers<[1], [0], [0], [1], [0, 0, 1, 1], [], []>} : vector<1x128xbf16>, vector<128x128xbf16>, vector<1x128xf32> -> vector<1x128xf32>
    %159 = arith.addf %155, %158 : vector<1x128xf32>
    %160 = arith.negf %159 : vector<1x128xf32>
    %161 = math.exp %160 : vector<1x128xf32>
    %cst_65 = arith.constant 1.000000e+00 : f32
    %162 = vector.broadcast %cst_65 : f32 to vector<1x128xf32>
    %163 = arith.addf %162, %161 : vector<1x128xf32>
    %164 = arith.divf %162, %163 : vector<1x128xf32>
    %c64_i32_66 = arith.constant 64 : i32
    %165 = tpu.dynamic_rotate %164 by %c64_i32_66 dim 1 : vector<1x128xf32>, i32 -> vector<1x128xf32>
    %166 = arith.addf %158, %23 : vector<1x128xf32>
    %167 = arith.mulf %165, %166 : vector<1x128xf32>
    %168 = arith.addf %155, %167 : vector<1x128xf32>
    %169 = math.tanh %168 : vector<1x128xf32>
    %c64_i32_67 = arith.constant 64 : i32
    %170 = tpu.dynamic_rotate %169 by %c64_i32_67 dim 1 : vector<1x128xf32>, i32 -> vector<1x128xf32>
    %c96_i32_68 = arith.constant 96 : i32
    %171 = tpu.dynamic_rotate %164 by %c96_i32_68 dim 1 : vector<1x128xf32>, i32 -> vector<1x128xf32>
    %172 = arith.subf %154, %170 : vector<1x128xf32>
    %173 = arith.mulf %171, %172 : vector<1x128xf32>
    %174 = arith.addf %170, %173 : vector<1x128xf32>
    %cst_69 = arith.constant 0.000000e+00 : f32
    %175 = vector.broadcast %cst_69 : f32 to vector<1x128xf32>
    %176 = arith.select %21, %174, %175 : vector<1x128xi1>, vector<1x128xf32>
    %177 = vector.extract_strided_slice %28 {offsets = [7, 0], sizes = [1, 128], strides = [1, 1]} : vector<8x128xf32> to vector<1x128xf32>
    %178 = arith.truncf %176 : vector<1x128xf32> to vector<1x128xbf16>
    %c128_70 = arith.constant 128 : index
    %c0_71 = arith.constant 0 : index
    %179 = vector.load %arg2[%c128_70, %c0_71] : memref<768x128xbf16, #tpu.memory_space<vmem>>, vector<128x128xbf16>
    %cst_72 = arith.constant dense<0.000000e+00> : vector<1x128xf32>
    %180 = tpu.matmul %178, %179, %cst_72 {dimension_numbers = #tpu.dot_dimension_numbers<[1], [0], [0], [1], [0, 0, 1, 1], [], []>} : vector<1x128xbf16>, vector<128x128xbf16>, vector<1x128xf32> -> vector<1x128xf32>
    %181 = arith.addf %177, %180 : vector<1x128xf32>
    %182 = arith.negf %181 : vector<1x128xf32>
    %183 = math.exp %182 : vector<1x128xf32>
    %cst_73 = arith.constant 1.000000e+00 : f32
    %184 = vector.broadcast %cst_73 : f32 to vector<1x128xf32>
    %185 = arith.addf %184, %183 : vector<1x128xf32>
    %186 = arith.divf %184, %185 : vector<1x128xf32>
    %c64_i32_74 = arith.constant 64 : i32
    %187 = tpu.dynamic_rotate %186 by %c64_i32_74 dim 1 : vector<1x128xf32>, i32 -> vector<1x128xf32>
    %188 = arith.addf %180, %23 : vector<1x128xf32>
    %189 = arith.mulf %187, %188 : vector<1x128xf32>
    %190 = arith.addf %177, %189 : vector<1x128xf32>
    %191 = math.tanh %190 : vector<1x128xf32>
    %c64_i32_75 = arith.constant 64 : i32
    %192 = tpu.dynamic_rotate %191 by %c64_i32_75 dim 1 : vector<1x128xf32>, i32 -> vector<1x128xf32>
    %c96_i32_76 = arith.constant 96 : i32
    %193 = tpu.dynamic_rotate %186 by %c96_i32_76 dim 1 : vector<1x128xf32>, i32 -> vector<1x128xf32>
    %194 = arith.subf %176, %192 : vector<1x128xf32>
    %195 = arith.mulf %193, %194 : vector<1x128xf32>
    %196 = arith.addf %192, %195 : vector<1x128xf32>
    %cst_77 = arith.constant 0.000000e+00 : f32
    %197 = vector.broadcast %cst_77 : f32 to vector<1x128xf32>
    %198 = arith.select %21, %196, %197 : vector<1x128xi1>, vector<1x128xf32>
    %199 = tpu.concatenate %44, %66, %88, %110, %132, %154, %176, %198 in 0 : vector<1x128xf32>, vector<1x128xf32>, vector<1x128xf32>, vector<1x128xf32>, vector<1x128xf32>, vector<1x128xf32>, vector<1x128xf32>, vector<1x128xf32> -> vector<8x128xf32>
    %c5 = arith.constant 5 : index
    %c0_78 = arith.constant 0 : index
    %200 = vector.load %arg3[%c5, %c0_78] : memref<16x128xf32, #tpu.memory_space<vmem>>, vector<1x128xf32>
    %c6 = arith.constant 6 : index
    %c0_79 = arith.constant 0 : index
    %201 = vector.load %arg3[%c6, %c0_79] : memref<16x128xf32, #tpu.memory_space<vmem>>, vector<1x128xf32>
    %202 = arith.truncf %199 : vector<8x128xf32> to vector<8x128xbf16>
    %c256_80 = arith.constant 256 : index
    %c0_81 = arith.constant 0 : index
    %203 = vector.load %arg2[%c256_80, %c0_81] : memref<768x128xbf16, #tpu.memory_space<vmem>>, vector<128x128xbf16>
    %cst_82 = arith.constant dense<0.000000e+00> : vector<8x128xf32>
    %204 = tpu.matmul %202, %203, %cst_82 {dimension_numbers = #tpu.dot_dimension_numbers<[1], [0], [0], [1], [0, 0, 1, 1], [], []>} : vector<8x128xbf16>, vector<128x128xbf16>, vector<8x128xf32> -> vector<8x128xf32>
    %205 = vector.broadcast %200 : vector<1x128xf32> to vector<8x128xf32>
    %206 = arith.addf %204, %205 : vector<8x128xf32>
    %207 = vector.extract_strided_slice %206 {offsets = [0, 0], sizes = [1, 128], strides = [1, 1]} : vector<8x128xf32> to vector<1x128xf32>
    %208 = arith.negf %207 : vector<1x128xf32>
    %209 = math.exp %208 : vector<1x128xf32>
    %cst_83 = arith.constant 1.000000e+00 : f32
    %210 = vector.broadcast %cst_83 : f32 to vector<1x128xf32>
    %211 = arith.addf %210, %209 : vector<1x128xf32>
    %212 = arith.divf %210, %211 : vector<1x128xf32>
    %c64_i32_84 = arith.constant 64 : i32
    %213 = tpu.dynamic_rotate %212 by %c64_i32_84 dim 1 : vector<1x128xf32>, i32 -> vector<1x128xf32>
    %214 = arith.mulf %213, %201 : vector<1x128xf32>
    %215 = arith.addf %207, %214 : vector<1x128xf32>
    %216 = math.tanh %215 : vector<1x128xf32>
    %c64_i32_85 = arith.constant 64 : i32
    %217 = tpu.dynamic_rotate %216 by %c64_i32_85 dim 1 : vector<1x128xf32>, i32 -> vector<1x128xf32>
    %c96_i32_86 = arith.constant 96 : i32
    %218 = tpu.dynamic_rotate %212 by %c96_i32_86 dim 1 : vector<1x128xf32>, i32 -> vector<1x128xf32>
    %219 = arith.mulf %218, %217 : vector<1x128xf32>
    %220 = arith.subf %217, %219 : vector<1x128xf32>
    %cst_87 = arith.constant 0.000000e+00 : f32
    %221 = vector.broadcast %cst_87 : f32 to vector<1x128xf32>
    %222 = arith.select %21, %220, %221 : vector<1x128xi1>, vector<1x128xf32>
    %223 = vector.extract_strided_slice %206 {offsets = [1, 0], sizes = [1, 128], strides = [1, 1]} : vector<8x128xf32> to vector<1x128xf32>
    %224 = arith.truncf %222 : vector<1x128xf32> to vector<1x128xbf16>
    %c384 = arith.constant 384 : index
    %c0_88 = arith.constant 0 : index
    %225 = vector.load %arg2[%c384, %c0_88] : memref<768x128xbf16, #tpu.memory_space<vmem>>, vector<128x128xbf16>
    %cst_89 = arith.constant dense<0.000000e+00> : vector<1x128xf32>
    %226 = tpu.matmul %224, %225, %cst_89 {dimension_numbers = #tpu.dot_dimension_numbers<[1], [0], [0], [1], [0, 0, 1, 1], [], []>} : vector<1x128xbf16>, vector<128x128xbf16>, vector<1x128xf32> -> vector<1x128xf32>
    %227 = arith.addf %223, %226 : vector<1x128xf32>
    %228 = arith.negf %227 : vector<1x128xf32>
    %229 = math.exp %228 : vector<1x128xf32>
    %cst_90 = arith.constant 1.000000e+00 : f32
    %230 = vector.broadcast %cst_90 : f32 to vector<1x128xf32>
    %231 = arith.addf %230, %229 : vector<1x128xf32>
    %232 = arith.divf %230, %231 : vector<1x128xf32>
    %c64_i32_91 = arith.constant 64 : i32
    %233 = tpu.dynamic_rotate %232 by %c64_i32_91 dim 1 : vector<1x128xf32>, i32 -> vector<1x128xf32>
    %234 = arith.addf %226, %201 : vector<1x128xf32>
    %235 = arith.mulf %233, %234 : vector<1x128xf32>
    %236 = arith.addf %223, %235 : vector<1x128xf32>
    %237 = math.tanh %236 : vector<1x128xf32>
    %c64_i32_92 = arith.constant 64 : i32
    %238 = tpu.dynamic_rotate %237 by %c64_i32_92 dim 1 : vector<1x128xf32>, i32 -> vector<1x128xf32>
    %c96_i32_93 = arith.constant 96 : i32
    %239 = tpu.dynamic_rotate %232 by %c96_i32_93 dim 1 : vector<1x128xf32>, i32 -> vector<1x128xf32>
    %240 = arith.subf %222, %238 : vector<1x128xf32>
    %241 = arith.mulf %239, %240 : vector<1x128xf32>
    %242 = arith.addf %238, %241 : vector<1x128xf32>
    %cst_94 = arith.constant 0.000000e+00 : f32
    %243 = vector.broadcast %cst_94 : f32 to vector<1x128xf32>
    %244 = arith.select %21, %242, %243 : vector<1x128xi1>, vector<1x128xf32>
    %245 = vector.extract_strided_slice %206 {offsets = [2, 0], sizes = [1, 128], strides = [1, 1]} : vector<8x128xf32> to vector<1x128xf32>
    %246 = arith.truncf %244 : vector<1x128xf32> to vector<1x128xbf16>
    %c384_95 = arith.constant 384 : index
    %c0_96 = arith.constant 0 : index
    %247 = vector.load %arg2[%c384_95, %c0_96] : memref<768x128xbf16, #tpu.memory_space<vmem>>, vector<128x128xbf16>
    %cst_97 = arith.constant dense<0.000000e+00> : vector<1x128xf32>
    %248 = tpu.matmul %246, %247, %cst_97 {dimension_numbers = #tpu.dot_dimension_numbers<[1], [0], [0], [1], [0, 0, 1, 1], [], []>} : vector<1x128xbf16>, vector<128x128xbf16>, vector<1x128xf32> -> vector<1x128xf32>
    %249 = arith.addf %245, %248 : vector<1x128xf32>
    %250 = arith.negf %249 : vector<1x128xf32>
    %251 = math.exp %250 : vector<1x128xf32>
    %cst_98 = arith.constant 1.000000e+00 : f32
    %252 = vector.broadcast %cst_98 : f32 to vector<1x128xf32>
    %253 = arith.addf %252, %251 : vector<1x128xf32>
    %254 = arith.divf %252, %253 : vector<1x128xf32>
    %c64_i32_99 = arith.constant 64 : i32
    %255 = tpu.dynamic_rotate %254 by %c64_i32_99 dim 1 : vector<1x128xf32>, i32 -> vector<1x128xf32>
    %256 = arith.addf %248, %201 : vector<1x128xf32>
    %257 = arith.mulf %255, %256 : vector<1x128xf32>
    %258 = arith.addf %245, %257 : vector<1x128xf32>
    %259 = math.tanh %258 : vector<1x128xf32>
    %c64_i32_100 = arith.constant 64 : i32
    %260 = tpu.dynamic_rotate %259 by %c64_i32_100 dim 1 : vector<1x128xf32>, i32 -> vector<1x128xf32>
    %c96_i32_101 = arith.constant 96 : i32
    %261 = tpu.dynamic_rotate %254 by %c96_i32_101 dim 1 : vector<1x128xf32>, i32 -> vector<1x128xf32>
    %262 = arith.subf %244, %260 : vector<1x128xf32>
    %263 = arith.mulf %261, %262 : vector<1x128xf32>
    %264 = arith.addf %260, %263 : vector<1x128xf32>
    %cst_102 = arith.constant 0.000000e+00 : f32
    %265 = vector.broadcast %cst_102 : f32 to vector<1x128xf32>
    %266 = arith.select %21, %264, %265 : vector<1x128xi1>, vector<1x128xf32>
    %267 = vector.extract_strided_slice %206 {offsets = [3, 0], sizes = [1, 128], strides = [1, 1]} : vector<8x128xf32> to vector<1x128xf32>
    %268 = arith.truncf %266 : vector<1x128xf32> to vector<1x128xbf16>
    %c384_103 = arith.constant 384 : index
    %c0_104 = arith.constant 0 : index
    %269 = vector.load %arg2[%c384_103, %c0_104] : memref<768x128xbf16, #tpu.memory_space<vmem>>, vector<128x128xbf16>
    %cst_105 = arith.constant dense<0.000000e+00> : vector<1x128xf32>
    %270 = tpu.matmul %268, %269, %cst_105 {dimension_numbers = #tpu.dot_dimension_numbers<[1], [0], [0], [1], [0, 0, 1, 1], [], []>} : vector<1x128xbf16>, vector<128x128xbf16>, vector<1x128xf32> -> vector<1x128xf32>
    %271 = arith.addf %267, %270 : vector<1x128xf32>
    %272 = arith.negf %271 : vector<1x128xf32>
    %273 = math.exp %272 : vector<1x128xf32>
    %cst_106 = arith.constant 1.000000e+00 : f32
    %274 = vector.broadcast %cst_106 : f32 to vector<1x128xf32>
    %275 = arith.addf %274, %273 : vector<1x128xf32>
    %276 = arith.divf %274, %275 : vector<1x128xf32>
    %c64_i32_107 = arith.constant 64 : i32
    %277 = tpu.dynamic_rotate %276 by %c64_i32_107 dim 1 : vector<1x128xf32>, i32 -> vector<1x128xf32>
    %278 = arith.addf %270, %201 : vector<1x128xf32>
    %279 = arith.mulf %277, %278 : vector<1x128xf32>
    %280 = arith.addf %267, %279 : vector<1x128xf32>
    %281 = math.tanh %280 : vector<1x128xf32>
    %c64_i32_108 = arith.constant 64 : i32
    %282 = tpu.dynamic_rotate %281 by %c64_i32_108 dim 1 : vector<1x128xf32>, i32 -> vector<1x128xf32>
    %c96_i32_109 = arith.constant 96 : i32
    %283 = tpu.dynamic_rotate %276 by %c96_i32_109 dim 1 : vector<1x128xf32>, i32 -> vector<1x128xf32>
    %284 = arith.subf %266, %282 : vector<1x128xf32>
    %285 = arith.mulf %283, %284 : vector<1x128xf32>
    %286 = arith.addf %282, %285 : vector<1x128xf32>
    %cst_110 = arith.constant 0.000000e+00 : f32
    %287 = vector.broadcast %cst_110 : f32 to vector<1x128xf32>
    %288 = arith.select %21, %286, %287 : vector<1x128xi1>, vector<1x128xf32>
    %289 = vector.extract_strided_slice %206 {offsets = [4, 0], sizes = [1, 128], strides = [1, 1]} : vector<8x128xf32> to vector<1x128xf32>
    %290 = arith.truncf %288 : vector<1x128xf32> to vector<1x128xbf16>
    %c384_111 = arith.constant 384 : index
    %c0_112 = arith.constant 0 : index
    %291 = vector.load %arg2[%c384_111, %c0_112] : memref<768x128xbf16, #tpu.memory_space<vmem>>, vector<128x128xbf16>
    %cst_113 = arith.constant dense<0.000000e+00> : vector<1x128xf32>
    %292 = tpu.matmul %290, %291, %cst_113 {dimension_numbers = #tpu.dot_dimension_numbers<[1], [0], [0], [1], [0, 0, 1, 1], [], []>} : vector<1x128xbf16>, vector<128x128xbf16>, vector<1x128xf32> -> vector<1x128xf32>
    %293 = arith.addf %289, %292 : vector<1x128xf32>
    %294 = arith.negf %293 : vector<1x128xf32>
    %295 = math.exp %294 : vector<1x128xf32>
    %cst_114 = arith.constant 1.000000e+00 : f32
    %296 = vector.broadcast %cst_114 : f32 to vector<1x128xf32>
    %297 = arith.addf %296, %295 : vector<1x128xf32>
    %298 = arith.divf %296, %297 : vector<1x128xf32>
    %c64_i32_115 = arith.constant 64 : i32
    %299 = tpu.dynamic_rotate %298 by %c64_i32_115 dim 1 : vector<1x128xf32>, i32 -> vector<1x128xf32>
    %300 = arith.addf %292, %201 : vector<1x128xf32>
    %301 = arith.mulf %299, %300 : vector<1x128xf32>
    %302 = arith.addf %289, %301 : vector<1x128xf32>
    %303 = math.tanh %302 : vector<1x128xf32>
    %c64_i32_116 = arith.constant 64 : i32
    %304 = tpu.dynamic_rotate %303 by %c64_i32_116 dim 1 : vector<1x128xf32>, i32 -> vector<1x128xf32>
    %c96_i32_117 = arith.constant 96 : i32
    %305 = tpu.dynamic_rotate %298 by %c96_i32_117 dim 1 : vector<1x128xf32>, i32 -> vector<1x128xf32>
    %306 = arith.subf %288, %304 : vector<1x128xf32>
    %307 = arith.mulf %305, %306 : vector<1x128xf32>
    %308 = arith.addf %304, %307 : vector<1x128xf32>
    %cst_118 = arith.constant 0.000000e+00 : f32
    %309 = vector.broadcast %cst_118 : f32 to vector<1x128xf32>
    %310 = arith.select %21, %308, %309 : vector<1x128xi1>, vector<1x128xf32>
    %311 = vector.extract_strided_slice %206 {offsets = [5, 0], sizes = [1, 128], strides = [1, 1]} : vector<8x128xf32> to vector<1x128xf32>
    %312 = arith.truncf %310 : vector<1x128xf32> to vector<1x128xbf16>
    %c384_119 = arith.constant 384 : index
    %c0_120 = arith.constant 0 : index
    %313 = vector.load %arg2[%c384_119, %c0_120] : memref<768x128xbf16, #tpu.memory_space<vmem>>, vector<128x128xbf16>
    %cst_121 = arith.constant dense<0.000000e+00> : vector<1x128xf32>
    %314 = tpu.matmul %312, %313, %cst_121 {dimension_numbers = #tpu.dot_dimension_numbers<[1], [0], [0], [1], [0, 0, 1, 1], [], []>} : vector<1x128xbf16>, vector<128x128xbf16>, vector<1x128xf32> -> vector<1x128xf32>
    %315 = arith.addf %311, %314 : vector<1x128xf32>
    %316 = arith.negf %315 : vector<1x128xf32>
    %317 = math.exp %316 : vector<1x128xf32>
    %cst_122 = arith.constant 1.000000e+00 : f32
    %318 = vector.broadcast %cst_122 : f32 to vector<1x128xf32>
    %319 = arith.addf %318, %317 : vector<1x128xf32>
    %320 = arith.divf %318, %319 : vector<1x128xf32>
    %c64_i32_123 = arith.constant 64 : i32
    %321 = tpu.dynamic_rotate %320 by %c64_i32_123 dim 1 : vector<1x128xf32>, i32 -> vector<1x128xf32>
    %322 = arith.addf %314, %201 : vector<1x128xf32>
    %323 = arith.mulf %321, %322 : vector<1x128xf32>
    %324 = arith.addf %311, %323 : vector<1x128xf32>
    %325 = math.tanh %324 : vector<1x128xf32>
    %c64_i32_124 = arith.constant 64 : i32
    %326 = tpu.dynamic_rotate %325 by %c64_i32_124 dim 1 : vector<1x128xf32>, i32 -> vector<1x128xf32>
    %c96_i32_125 = arith.constant 96 : i32
    %327 = tpu.dynamic_rotate %320 by %c96_i32_125 dim 1 : vector<1x128xf32>, i32 -> vector<1x128xf32>
    %328 = arith.subf %310, %326 : vector<1x128xf32>
    %329 = arith.mulf %327, %328 : vector<1x128xf32>
    %330 = arith.addf %326, %329 : vector<1x128xf32>
    %cst_126 = arith.constant 0.000000e+00 : f32
    %331 = vector.broadcast %cst_126 : f32 to vector<1x128xf32>
    %332 = arith.select %21, %330, %331 : vector<1x128xi1>, vector<1x128xf32>
    %333 = vector.extract_strided_slice %206 {offsets = [6, 0], sizes = [1, 128], strides = [1, 1]} : vector<8x128xf32> to vector<1x128xf32>
    %334 = arith.truncf %332 : vector<1x128xf32> to vector<1x128xbf16>
    %c384_127 = arith.constant 384 : index
    %c0_128 = arith.constant 0 : index
    %335 = vector.load %arg2[%c384_127, %c0_128] : memref<768x128xbf16, #tpu.memory_space<vmem>>, vector<128x128xbf16>
    %cst_129 = arith.constant dense<0.000000e+00> : vector<1x128xf32>
    %336 = tpu.matmul %334, %335, %cst_129 {dimension_numbers = #tpu.dot_dimension_numbers<[1], [0], [0], [1], [0, 0, 1, 1], [], []>} : vector<1x128xbf16>, vector<128x128xbf16>, vector<1x128xf32> -> vector<1x128xf32>
    %337 = arith.addf %333, %336 : vector<1x128xf32>
    %338 = arith.negf %337 : vector<1x128xf32>
    %339 = math.exp %338 : vector<1x128xf32>
    %cst_130 = arith.constant 1.000000e+00 : f32
    %340 = vector.broadcast %cst_130 : f32 to vector<1x128xf32>
    %341 = arith.addf %340, %339 : vector<1x128xf32>
    %342 = arith.divf %340, %341 : vector<1x128xf32>
    %c64_i32_131 = arith.constant 64 : i32
    %343 = tpu.dynamic_rotate %342 by %c64_i32_131 dim 1 : vector<1x128xf32>, i32 -> vector<1x128xf32>
    %344 = arith.addf %336, %201 : vector<1x128xf32>
    %345 = arith.mulf %343, %344 : vector<1x128xf32>
    %346 = arith.addf %333, %345 : vector<1x128xf32>
    %347 = math.tanh %346 : vector<1x128xf32>
    %c64_i32_132 = arith.constant 64 : i32
    %348 = tpu.dynamic_rotate %347 by %c64_i32_132 dim 1 : vector<1x128xf32>, i32 -> vector<1x128xf32>
    %c96_i32_133 = arith.constant 96 : i32
    %349 = tpu.dynamic_rotate %342 by %c96_i32_133 dim 1 : vector<1x128xf32>, i32 -> vector<1x128xf32>
    %350 = arith.subf %332, %348 : vector<1x128xf32>
    %351 = arith.mulf %349, %350 : vector<1x128xf32>
    %352 = arith.addf %348, %351 : vector<1x128xf32>
    %cst_134 = arith.constant 0.000000e+00 : f32
    %353 = vector.broadcast %cst_134 : f32 to vector<1x128xf32>
    %354 = arith.select %21, %352, %353 : vector<1x128xi1>, vector<1x128xf32>
    %355 = vector.extract_strided_slice %206 {offsets = [7, 0], sizes = [1, 128], strides = [1, 1]} : vector<8x128xf32> to vector<1x128xf32>
    %356 = arith.truncf %354 : vector<1x128xf32> to vector<1x128xbf16>
    %c384_135 = arith.constant 384 : index
    %c0_136 = arith.constant 0 : index
    %357 = vector.load %arg2[%c384_135, %c0_136] : memref<768x128xbf16, #tpu.memory_space<vmem>>, vector<128x128xbf16>
    %cst_137 = arith.constant dense<0.000000e+00> : vector<1x128xf32>
    %358 = tpu.matmul %356, %357, %cst_137 {dimension_numbers = #tpu.dot_dimension_numbers<[1], [0], [0], [1], [0, 0, 1, 1], [], []>} : vector<1x128xbf16>, vector<128x128xbf16>, vector<1x128xf32> -> vector<1x128xf32>
    %359 = arith.addf %355, %358 : vector<1x128xf32>
    %360 = arith.negf %359 : vector<1x128xf32>
    %361 = math.exp %360 : vector<1x128xf32>
    %cst_138 = arith.constant 1.000000e+00 : f32
    %362 = vector.broadcast %cst_138 : f32 to vector<1x128xf32>
    %363 = arith.addf %362, %361 : vector<1x128xf32>
    %364 = arith.divf %362, %363 : vector<1x128xf32>
    %c64_i32_139 = arith.constant 64 : i32
    %365 = tpu.dynamic_rotate %364 by %c64_i32_139 dim 1 : vector<1x128xf32>, i32 -> vector<1x128xf32>
    %366 = arith.addf %358, %201 : vector<1x128xf32>
    %367 = arith.mulf %365, %366 : vector<1x128xf32>
    %368 = arith.addf %355, %367 : vector<1x128xf32>
    %369 = math.tanh %368 : vector<1x128xf32>
    %c64_i32_140 = arith.constant 64 : i32
    %370 = tpu.dynamic_rotate %369 by %c64_i32_140 dim 1 : vector<1x128xf32>, i32 -> vector<1x128xf32>
    %c96_i32_141 = arith.constant 96 : i32
    %371 = tpu.dynamic_rotate %364 by %c96_i32_141 dim 1 : vector<1x128xf32>, i32 -> vector<1x128xf32>
    %372 = arith.subf %354, %370 : vector<1x128xf32>
    %373 = arith.mulf %371, %372 : vector<1x128xf32>
    %374 = arith.addf %370, %373 : vector<1x128xf32>
    %cst_142 = arith.constant 0.000000e+00 : f32
    %375 = vector.broadcast %cst_142 : f32 to vector<1x128xf32>
    %376 = arith.select %21, %374, %375 : vector<1x128xi1>, vector<1x128xf32>
    %377 = tpu.concatenate %222, %244, %266, %288, %310, %332, %354, %376 in 0 : vector<1x128xf32>, vector<1x128xf32>, vector<1x128xf32>, vector<1x128xf32>, vector<1x128xf32>, vector<1x128xf32>, vector<1x128xf32>, vector<1x128xf32> -> vector<8x128xf32>
    %c7 = arith.constant 7 : index
    %c0_143 = arith.constant 0 : index
    %378 = vector.load %arg3[%c7, %c0_143] : memref<16x128xf32, #tpu.memory_space<vmem>>, vector<1x128xf32>
    %c8 = arith.constant 8 : index
    %c0_144 = arith.constant 0 : index
    %379 = vector.load %arg3[%c8, %c0_144] : memref<16x128xf32, #tpu.memory_space<vmem>>, vector<1x128xf32>
    %380 = arith.truncf %377 : vector<8x128xf32> to vector<8x128xbf16>
    %c512 = arith.constant 512 : index
    %c0_145 = arith.constant 0 : index
    %381 = vector.load %arg2[%c512, %c0_145] : memref<768x128xbf16, #tpu.memory_space<vmem>>, vector<128x128xbf16>
    %cst_146 = arith.constant dense<0.000000e+00> : vector<8x128xf32>
    %382 = tpu.matmul %380, %381, %cst_146 {dimension_numbers = #tpu.dot_dimension_numbers<[1], [0], [0], [1], [0, 0, 1, 1], [], []>} : vector<8x128xbf16>, vector<128x128xbf16>, vector<8x128xf32> -> vector<8x128xf32>
    %383 = vector.broadcast %378 : vector<1x128xf32> to vector<8x128xf32>
    %384 = arith.addf %382, %383 : vector<8x128xf32>
    %385 = vector.extract_strided_slice %384 {offsets = [0, 0], sizes = [1, 128], strides = [1, 1]} : vector<8x128xf32> to vector<1x128xf32>
    %386 = arith.negf %385 : vector<1x128xf32>
    %387 = math.exp %386 : vector<1x128xf32>
    %cst_147 = arith.constant 1.000000e+00 : f32
    %388 = vector.broadcast %cst_147 : f32 to vector<1x128xf32>
    %389 = arith.addf %388, %387 : vector<1x128xf32>
    %390 = arith.divf %388, %389 : vector<1x128xf32>
    %c64_i32_148 = arith.constant 64 : i32
    %391 = tpu.dynamic_rotate %390 by %c64_i32_148 dim 1 : vector<1x128xf32>, i32 -> vector<1x128xf32>
    %392 = arith.mulf %391, %379 : vector<1x128xf32>
    %393 = arith.addf %385, %392 : vector<1x128xf32>
    %394 = math.tanh %393 : vector<1x128xf32>
    %c64_i32_149 = arith.constant 64 : i32
    %395 = tpu.dynamic_rotate %394 by %c64_i32_149 dim 1 : vector<1x128xf32>, i32 -> vector<1x128xf32>
    %c96_i32_150 = arith.constant 96 : i32
    %396 = tpu.dynamic_rotate %390 by %c96_i32_150 dim 1 : vector<1x128xf32>, i32 -> vector<1x128xf32>
    %397 = arith.mulf %396, %395 : vector<1x128xf32>
    %398 = arith.subf %395, %397 : vector<1x128xf32>
    %cst_151 = arith.constant 0.000000e+00 : f32
    %399 = vector.broadcast %cst_151 : f32 to vector<1x128xf32>
    %400 = arith.select %21, %398, %399 : vector<1x128xi1>, vector<1x128xf32>
    %401 = vector.extract_strided_slice %384 {offsets = [1, 0], sizes = [1, 128], strides = [1, 1]} : vector<8x128xf32> to vector<1x128xf32>
    %402 = arith.truncf %400 : vector<1x128xf32> to vector<1x128xbf16>
    %c640 = arith.constant 640 : index
    %c0_152 = arith.constant 0 : index
    %403 = vector.load %arg2[%c640, %c0_152] : memref<768x128xbf16, #tpu.memory_space<vmem>>, vector<128x128xbf16>
    %cst_153 = arith.constant dense<0.000000e+00> : vector<1x128xf32>
    %404 = tpu.matmul %402, %403, %cst_153 {dimension_numbers = #tpu.dot_dimension_numbers<[1], [0], [0], [1], [0, 0, 1, 1], [], []>} : vector<1x128xbf16>, vector<128x128xbf16>, vector<1x128xf32> -> vector<1x128xf32>
    %405 = arith.addf %401, %404 : vector<1x128xf32>
    %406 = arith.negf %405 : vector<1x128xf32>
    %407 = math.exp %406 : vector<1x128xf32>
    %cst_154 = arith.constant 1.000000e+00 : f32
    %408 = vector.broadcast %cst_154 : f32 to vector<1x128xf32>
    %409 = arith.addf %408, %407 : vector<1x128xf32>
    %410 = arith.divf %408, %409 : vector<1x128xf32>
    %c64_i32_155 = arith.constant 64 : i32
    %411 = tpu.dynamic_rotate %410 by %c64_i32_155 dim 1 : vector<1x128xf32>, i32 -> vector<1x128xf32>
    %412 = arith.addf %404, %379 : vector<1x128xf32>
    %413 = arith.mulf %411, %412 : vector<1x128xf32>
    %414 = arith.addf %401, %413 : vector<1x128xf32>
    %415 = math.tanh %414 : vector<1x128xf32>
    %c64_i32_156 = arith.constant 64 : i32
    %416 = tpu.dynamic_rotate %415 by %c64_i32_156 dim 1 : vector<1x128xf32>, i32 -> vector<1x128xf32>
    %c96_i32_157 = arith.constant 96 : i32
    %417 = tpu.dynamic_rotate %410 by %c96_i32_157 dim 1 : vector<1x128xf32>, i32 -> vector<1x128xf32>
    %418 = arith.subf %400, %416 : vector<1x128xf32>
    %419 = arith.mulf %417, %418 : vector<1x128xf32>
    %420 = arith.addf %416, %419 : vector<1x128xf32>
    %cst_158 = arith.constant 0.000000e+00 : f32
    %421 = vector.broadcast %cst_158 : f32 to vector<1x128xf32>
    %422 = arith.select %21, %420, %421 : vector<1x128xi1>, vector<1x128xf32>
    %423 = vector.extract_strided_slice %384 {offsets = [2, 0], sizes = [1, 128], strides = [1, 1]} : vector<8x128xf32> to vector<1x128xf32>
    %424 = arith.truncf %422 : vector<1x128xf32> to vector<1x128xbf16>
    %c640_159 = arith.constant 640 : index
    %c0_160 = arith.constant 0 : index
    %425 = vector.load %arg2[%c640_159, %c0_160] : memref<768x128xbf16, #tpu.memory_space<vmem>>, vector<128x128xbf16>
    %cst_161 = arith.constant dense<0.000000e+00> : vector<1x128xf32>
    %426 = tpu.matmul %424, %425, %cst_161 {dimension_numbers = #tpu.dot_dimension_numbers<[1], [0], [0], [1], [0, 0, 1, 1], [], []>} : vector<1x128xbf16>, vector<128x128xbf16>, vector<1x128xf32> -> vector<1x128xf32>
    %427 = arith.addf %423, %426 : vector<1x128xf32>
    %428 = arith.negf %427 : vector<1x128xf32>
    %429 = math.exp %428 : vector<1x128xf32>
    %cst_162 = arith.constant 1.000000e+00 : f32
    %430 = vector.broadcast %cst_162 : f32 to vector<1x128xf32>
    %431 = arith.addf %430, %429 : vector<1x128xf32>
    %432 = arith.divf %430, %431 : vector<1x128xf32>
    %c64_i32_163 = arith.constant 64 : i32
    %433 = tpu.dynamic_rotate %432 by %c64_i32_163 dim 1 : vector<1x128xf32>, i32 -> vector<1x128xf32>
    %434 = arith.addf %426, %379 : vector<1x128xf32>
    %435 = arith.mulf %433, %434 : vector<1x128xf32>
    %436 = arith.addf %423, %435 : vector<1x128xf32>
    %437 = math.tanh %436 : vector<1x128xf32>
    %c64_i32_164 = arith.constant 64 : i32
    %438 = tpu.dynamic_rotate %437 by %c64_i32_164 dim 1 : vector<1x128xf32>, i32 -> vector<1x128xf32>
    %c96_i32_165 = arith.constant 96 : i32
    %439 = tpu.dynamic_rotate %432 by %c96_i32_165 dim 1 : vector<1x128xf32>, i32 -> vector<1x128xf32>
    %440 = arith.subf %422, %438 : vector<1x128xf32>
    %441 = arith.mulf %439, %440 : vector<1x128xf32>
    %442 = arith.addf %438, %441 : vector<1x128xf32>
    %cst_166 = arith.constant 0.000000e+00 : f32
    %443 = vector.broadcast %cst_166 : f32 to vector<1x128xf32>
    %444 = arith.select %21, %442, %443 : vector<1x128xi1>, vector<1x128xf32>
    %445 = vector.extract_strided_slice %384 {offsets = [3, 0], sizes = [1, 128], strides = [1, 1]} : vector<8x128xf32> to vector<1x128xf32>
    %446 = arith.truncf %444 : vector<1x128xf32> to vector<1x128xbf16>
    %c640_167 = arith.constant 640 : index
    %c0_168 = arith.constant 0 : index
    %447 = vector.load %arg2[%c640_167, %c0_168] : memref<768x128xbf16, #tpu.memory_space<vmem>>, vector<128x128xbf16>
    %cst_169 = arith.constant dense<0.000000e+00> : vector<1x128xf32>
    %448 = tpu.matmul %446, %447, %cst_169 {dimension_numbers = #tpu.dot_dimension_numbers<[1], [0], [0], [1], [0, 0, 1, 1], [], []>} : vector<1x128xbf16>, vector<128x128xbf16>, vector<1x128xf32> -> vector<1x128xf32>
    %449 = arith.addf %445, %448 : vector<1x128xf32>
    %450 = arith.negf %449 : vector<1x128xf32>
    %451 = math.exp %450 : vector<1x128xf32>
    %cst_170 = arith.constant 1.000000e+00 : f32
    %452 = vector.broadcast %cst_170 : f32 to vector<1x128xf32>
    %453 = arith.addf %452, %451 : vector<1x128xf32>
    %454 = arith.divf %452, %453 : vector<1x128xf32>
    %c64_i32_171 = arith.constant 64 : i32
    %455 = tpu.dynamic_rotate %454 by %c64_i32_171 dim 1 : vector<1x128xf32>, i32 -> vector<1x128xf32>
    %456 = arith.addf %448, %379 : vector<1x128xf32>
    %457 = arith.mulf %455, %456 : vector<1x128xf32>
    %458 = arith.addf %445, %457 : vector<1x128xf32>
    %459 = math.tanh %458 : vector<1x128xf32>
    %c64_i32_172 = arith.constant 64 : i32
    %460 = tpu.dynamic_rotate %459 by %c64_i32_172 dim 1 : vector<1x128xf32>, i32 -> vector<1x128xf32>
    %c96_i32_173 = arith.constant 96 : i32
    %461 = tpu.dynamic_rotate %454 by %c96_i32_173 dim 1 : vector<1x128xf32>, i32 -> vector<1x128xf32>
    %462 = arith.subf %444, %460 : vector<1x128xf32>
    %463 = arith.mulf %461, %462 : vector<1x128xf32>
    %464 = arith.addf %460, %463 : vector<1x128xf32>
    %cst_174 = arith.constant 0.000000e+00 : f32
    %465 = vector.broadcast %cst_174 : f32 to vector<1x128xf32>
    %466 = arith.select %21, %464, %465 : vector<1x128xi1>, vector<1x128xf32>
    %467 = vector.extract_strided_slice %384 {offsets = [4, 0], sizes = [1, 128], strides = [1, 1]} : vector<8x128xf32> to vector<1x128xf32>
    %468 = arith.truncf %466 : vector<1x128xf32> to vector<1x128xbf16>
    %c640_175 = arith.constant 640 : index
    %c0_176 = arith.constant 0 : index
    %469 = vector.load %arg2[%c640_175, %c0_176] : memref<768x128xbf16, #tpu.memory_space<vmem>>, vector<128x128xbf16>
    %cst_177 = arith.constant dense<0.000000e+00> : vector<1x128xf32>
    %470 = tpu.matmul %468, %469, %cst_177 {dimension_numbers = #tpu.dot_dimension_numbers<[1], [0], [0], [1], [0, 0, 1, 1], [], []>} : vector<1x128xbf16>, vector<128x128xbf16>, vector<1x128xf32> -> vector<1x128xf32>
    %471 = arith.addf %467, %470 : vector<1x128xf32>
    %472 = arith.negf %471 : vector<1x128xf32>
    %473 = math.exp %472 : vector<1x128xf32>
    %cst_178 = arith.constant 1.000000e+00 : f32
    %474 = vector.broadcast %cst_178 : f32 to vector<1x128xf32>
    %475 = arith.addf %474, %473 : vector<1x128xf32>
    %476 = arith.divf %474, %475 : vector<1x128xf32>
    %c64_i32_179 = arith.constant 64 : i32
    %477 = tpu.dynamic_rotate %476 by %c64_i32_179 dim 1 : vector<1x128xf32>, i32 -> vector<1x128xf32>
    %478 = arith.addf %470, %379 : vector<1x128xf32>
    %479 = arith.mulf %477, %478 : vector<1x128xf32>
    %480 = arith.addf %467, %479 : vector<1x128xf32>
    %481 = math.tanh %480 : vector<1x128xf32>
    %c64_i32_180 = arith.constant 64 : i32
    %482 = tpu.dynamic_rotate %481 by %c64_i32_180 dim 1 : vector<1x128xf32>, i32 -> vector<1x128xf32>
    %c96_i32_181 = arith.constant 96 : i32
    %483 = tpu.dynamic_rotate %476 by %c96_i32_181 dim 1 : vector<1x128xf32>, i32 -> vector<1x128xf32>
    %484 = arith.subf %466, %482 : vector<1x128xf32>
    %485 = arith.mulf %483, %484 : vector<1x128xf32>
    %486 = arith.addf %482, %485 : vector<1x128xf32>
    %cst_182 = arith.constant 0.000000e+00 : f32
    %487 = vector.broadcast %cst_182 : f32 to vector<1x128xf32>
    %488 = arith.select %21, %486, %487 : vector<1x128xi1>, vector<1x128xf32>
    %489 = vector.extract_strided_slice %384 {offsets = [5, 0], sizes = [1, 128], strides = [1, 1]} : vector<8x128xf32> to vector<1x128xf32>
    %490 = arith.truncf %488 : vector<1x128xf32> to vector<1x128xbf16>
    %c640_183 = arith.constant 640 : index
    %c0_184 = arith.constant 0 : index
    %491 = vector.load %arg2[%c640_183, %c0_184] : memref<768x128xbf16, #tpu.memory_space<vmem>>, vector<128x128xbf16>
    %cst_185 = arith.constant dense<0.000000e+00> : vector<1x128xf32>
    %492 = tpu.matmul %490, %491, %cst_185 {dimension_numbers = #tpu.dot_dimension_numbers<[1], [0], [0], [1], [0, 0, 1, 1], [], []>} : vector<1x128xbf16>, vector<128x128xbf16>, vector<1x128xf32> -> vector<1x128xf32>
    %493 = arith.addf %489, %492 : vector<1x128xf32>
    %494 = arith.negf %493 : vector<1x128xf32>
    %495 = math.exp %494 : vector<1x128xf32>
    %cst_186 = arith.constant 1.000000e+00 : f32
    %496 = vector.broadcast %cst_186 : f32 to vector<1x128xf32>
    %497 = arith.addf %496, %495 : vector<1x128xf32>
    %498 = arith.divf %496, %497 : vector<1x128xf32>
    %c64_i32_187 = arith.constant 64 : i32
    %499 = tpu.dynamic_rotate %498 by %c64_i32_187 dim 1 : vector<1x128xf32>, i32 -> vector<1x128xf32>
    %500 = arith.addf %492, %379 : vector<1x128xf32>
    %501 = arith.mulf %499, %500 : vector<1x128xf32>
    %502 = arith.addf %489, %501 : vector<1x128xf32>
    %503 = math.tanh %502 : vector<1x128xf32>
    %c64_i32_188 = arith.constant 64 : i32
    %504 = tpu.dynamic_rotate %503 by %c64_i32_188 dim 1 : vector<1x128xf32>, i32 -> vector<1x128xf32>
    %c96_i32_189 = arith.constant 96 : i32
    %505 = tpu.dynamic_rotate %498 by %c96_i32_189 dim 1 : vector<1x128xf32>, i32 -> vector<1x128xf32>
    %506 = arith.subf %488, %504 : vector<1x128xf32>
    %507 = arith.mulf %505, %506 : vector<1x128xf32>
    %508 = arith.addf %504, %507 : vector<1x128xf32>
    %cst_190 = arith.constant 0.000000e+00 : f32
    %509 = vector.broadcast %cst_190 : f32 to vector<1x128xf32>
    %510 = arith.select %21, %508, %509 : vector<1x128xi1>, vector<1x128xf32>
    %511 = vector.extract_strided_slice %384 {offsets = [6, 0], sizes = [1, 128], strides = [1, 1]} : vector<8x128xf32> to vector<1x128xf32>
    %512 = arith.truncf %510 : vector<1x128xf32> to vector<1x128xbf16>
    %c640_191 = arith.constant 640 : index
    %c0_192 = arith.constant 0 : index
    %513 = vector.load %arg2[%c640_191, %c0_192] : memref<768x128xbf16, #tpu.memory_space<vmem>>, vector<128x128xbf16>
    %cst_193 = arith.constant dense<0.000000e+00> : vector<1x128xf32>
    %514 = tpu.matmul %512, %513, %cst_193 {dimension_numbers = #tpu.dot_dimension_numbers<[1], [0], [0], [1], [0, 0, 1, 1], [], []>} : vector<1x128xbf16>, vector<128x128xbf16>, vector<1x128xf32> -> vector<1x128xf32>
    %515 = arith.addf %511, %514 : vector<1x128xf32>
    %516 = arith.negf %515 : vector<1x128xf32>
    %517 = math.exp %516 : vector<1x128xf32>
    %cst_194 = arith.constant 1.000000e+00 : f32
    %518 = vector.broadcast %cst_194 : f32 to vector<1x128xf32>
    %519 = arith.addf %518, %517 : vector<1x128xf32>
    %520 = arith.divf %518, %519 : vector<1x128xf32>
    %c64_i32_195 = arith.constant 64 : i32
    %521 = tpu.dynamic_rotate %520 by %c64_i32_195 dim 1 : vector<1x128xf32>, i32 -> vector<1x128xf32>
    %522 = arith.addf %514, %379 : vector<1x128xf32>
    %523 = arith.mulf %521, %522 : vector<1x128xf32>
    %524 = arith.addf %511, %523 : vector<1x128xf32>
    %525 = math.tanh %524 : vector<1x128xf32>
    %c64_i32_196 = arith.constant 64 : i32
    %526 = tpu.dynamic_rotate %525 by %c64_i32_196 dim 1 : vector<1x128xf32>, i32 -> vector<1x128xf32>
    %c96_i32_197 = arith.constant 96 : i32
    %527 = tpu.dynamic_rotate %520 by %c96_i32_197 dim 1 : vector<1x128xf32>, i32 -> vector<1x128xf32>
    %528 = arith.subf %510, %526 : vector<1x128xf32>
    %529 = arith.mulf %527, %528 : vector<1x128xf32>
    %530 = arith.addf %526, %529 : vector<1x128xf32>
    %cst_198 = arith.constant 0.000000e+00 : f32
    %531 = vector.broadcast %cst_198 : f32 to vector<1x128xf32>
    %532 = arith.select %21, %530, %531 : vector<1x128xi1>, vector<1x128xf32>
    %533 = vector.extract_strided_slice %384 {offsets = [7, 0], sizes = [1, 128], strides = [1, 1]} : vector<8x128xf32> to vector<1x128xf32>
    %534 = arith.truncf %532 : vector<1x128xf32> to vector<1x128xbf16>
    %c640_199 = arith.constant 640 : index
    %c0_200 = arith.constant 0 : index
    %535 = vector.load %arg2[%c640_199, %c0_200] : memref<768x128xbf16, #tpu.memory_space<vmem>>, vector<128x128xbf16>
    %cst_201 = arith.constant dense<0.000000e+00> : vector<1x128xf32>
    %536 = tpu.matmul %534, %535, %cst_201 {dimension_numbers = #tpu.dot_dimension_numbers<[1], [0], [0], [1], [0, 0, 1, 1], [], []>} : vector<1x128xbf16>, vector<128x128xbf16>, vector<1x128xf32> -> vector<1x128xf32>
    %537 = arith.addf %533, %536 : vector<1x128xf32>
    %538 = arith.negf %537 : vector<1x128xf32>
    %539 = math.exp %538 : vector<1x128xf32>
    %cst_202 = arith.constant 1.000000e+00 : f32
    %540 = vector.broadcast %cst_202 : f32 to vector<1x128xf32>
    %541 = arith.addf %540, %539 : vector<1x128xf32>
    %542 = arith.divf %540, %541 : vector<1x128xf32>
    %c64_i32_203 = arith.constant 64 : i32
    %543 = tpu.dynamic_rotate %542 by %c64_i32_203 dim 1 : vector<1x128xf32>, i32 -> vector<1x128xf32>
    %544 = arith.addf %536, %379 : vector<1x128xf32>
    %545 = arith.mulf %543, %544 : vector<1x128xf32>
    %546 = arith.addf %533, %545 : vector<1x128xf32>
    %547 = math.tanh %546 : vector<1x128xf32>
    %c64_i32_204 = arith.constant 64 : i32
    %548 = tpu.dynamic_rotate %547 by %c64_i32_204 dim 1 : vector<1x128xf32>, i32 -> vector<1x128xf32>
    %c96_i32_205 = arith.constant 96 : i32
    %549 = tpu.dynamic_rotate %542 by %c96_i32_205 dim 1 : vector<1x128xf32>, i32 -> vector<1x128xf32>
    %550 = arith.subf %532, %548 : vector<1x128xf32>
    %551 = arith.mulf %549, %550 : vector<1x128xf32>
    %552 = arith.addf %548, %551 : vector<1x128xf32>
    %cst_206 = arith.constant 0.000000e+00 : f32
    %553 = vector.broadcast %cst_206 : f32 to vector<1x128xf32>
    %554 = arith.select %21, %552, %553 : vector<1x128xi1>, vector<1x128xf32>
    %555 = tpu.concatenate %400, %422, %444, %466, %488, %510, %532, %554 in 0 : vector<1x128xf32>, vector<1x128xf32>, vector<1x128xf32>, vector<1x128xf32>, vector<1x128xf32>, vector<1x128xf32>, vector<1x128xf32>, vector<1x128xf32> -> vector<8x128xf32>
    %c0_207 = arith.constant 0 : index
    %c0_208 = arith.constant 0 : index
    %556 = vector.load %arg5[%c0_207, %c0_208] : memref<8x128xf32, #tpu.memory_space<vmem>>, vector<8x128xf32>
    tpu.vector_store %arg5[%c0_207, %c0_208], %555 {strides = array<i32>} : memref<8x128xf32, #tpu.memory_space<vmem>>, vector<8x128xf32>,
    return
  }
}

</mosaic_0001>

<llo_original>
// kernel: tpu_custom_call.1
$region0: #{tpu_custom_call.1}
  #allocation0 [shape = 'u32[]', space=smem, size = 0x4, offset = 0x4, fixed_abs, tag = 'smem constant byte address 0x4 - core index']
  #allocation1 [shape = 'u32[144,128]{1,0:T(1,128)}', space=vmem, size = 0x12000, scoped, tag = 'internal scratch']
  %s0 = inlined_call_operand.hbm [shape: f32[8,128], index: 0, kind: input, shape index: {}]
  %s1 = inlined_call_operand.hbm [shape: f32[384,128], index: 1, kind: input, shape index: {}]
  %s2 = inlined_call_operand.hbm [shape: bf16[768,128], index: 2, kind: input, shape index: {}]
  %s3 = inlined_call_operand.hbm [shape: f32[16,128], index: 3, kind: input, shape index: {}]
  %s4 = inlined_call_operand.hbm [shape: f32[8,128], index: 4, kind: output, shape index: {0}]
  %s5 = inlined_call_operand.hbm [shape: f32[8,128], index: 5, kind: output, shape index: {1}]
  %6 = xla_tuple %s4, %s5
  %s7 = sld [smem:[#allocation0]]
  $region50: #{tpu_custom_call.1} parent=0
    _
  %s9 = ssub.s32 1, %s7
  %s10 = scalar_select 0, %s9, %s7
  $region1: #{tpu_custom_call.1} parent=0
    #allocation2 [shape = 'u8[4096]{0}', space=vmem, size = 0x1000, scoped, tag = 'input window, operand 0, single buffered']
    #allocation3 [shape = 's32[1]{0}', space=sflag, size = 0x4, scoped, tag = 'scoped memory for tpu_custom_call.1']
    #allocation4 [shape = 's32[1]{0}', space=sflag, size = 0x4, scoped, tag = 'scoped memory for tpu_custom_call.1']
    #allocation5 [shape = 'u8[196608]{0}', space=vmem, size = 0x30000, scoped, tag = 'input window, operand 1, single buffered']
    #allocation6 [shape = 's32[1]{0}', space=sflag, size = 0x4, scoped, tag = 'scoped memory for tpu_custom_call.1']
    #allocation7 [shape = 'u8[196608]{0}', space=vmem, size = 0x30000, scoped, tag = 'input window, operand 2, single buffered']
    #allocation8 [shape = 'u8[8192]{0}', space=vmem, size = 0x2000, scoped, tag = 'input window, operand 3, single buffered']
    #allocation9 [shape = 's32[1]{0}', space=sflag, size = 0x4, scoped, tag = 'scoped memory for tpu_custom_call.1']
    #allocation10 [shape = 'u8[4096]{0}', space=vmem, size = 0x1000, scoped, tag = 'output window, operand 0, single buffered']
    #allocation11 [shape = 'u8[4096]{0}', space=vmem, size = 0x1000, scoped, tag = 'output window, operand 1, single buffered']
    #allocation12 [shape = 's32[1]{0}', space=sflag, size = 0x4, scoped, tag = 'scoped memory for tpu_custom_call.1']
    %11 = vsyncpa [#allocation3], 0
    %12 = vsyncpa [#allocation6], 0
    %13 = vsyncpa [#allocation9], 0
    %14 = vsyncpa [#allocation4], 0
    %15 = vsyncpa [#allocation12], 0
    // Predicated region
    $region2: #{tpu_custom_call.1} parent=1 // pred_check
      _
    $region3: #{tpu_custom_call.1} parent=1 // pred_check_branch
      %17 = sbr.rel (0) target = $region5
    $region4: #{tpu_custom_call.1} parent=1 // pred_region
      %s19 = ssub.s32 128, 128
      %20 = vsyncadd [#allocation3], %s19
      %s22 = sshll.u32 [#allocation2], 4
      %s23 = int_to_ptr.vmem [resolvable:$true] %s22
      %25 = dma.hbm_to_vmem [thread:$0]  %s0, 128, %s23, [#allocation3]
    $region5: #{tpu_custom_call.1} parent=1 // pred_fallthru
      _
    // Predicated region
    $region6: #{tpu_custom_call.1} parent=1 // pred_check
      _
    $region7: #{tpu_custom_call.1} parent=1 // pred_check_branch
      %27 = sbr.rel (0) target = $region9
    $region8: #{tpu_custom_call.1} parent=1 // pred_region
      %s29 = ssub.s32 6144, 6144
      %30 = vsyncadd [#allocation6], %s29
      %s31 = sshll.u32 [#allocation5], 4
      %s32 = int_to_ptr.vmem [resolvable:$true] %s31
      %37 = dma.hbm_to_vmem [thread:$0]  %s1, 6144, %s32, [#allocation6], 128, 128, 8
    $region9: #{tpu_custom_call.1} parent=1 // pred_fallthru
      _
    // Predicated region
    $region10: #{tpu_custom_call.1} parent=1 // pred_check
      _
    $region11: #{tpu_custom_call.1} parent=1 // pred_check_branch
      %39 = sbr.rel (0) target = $region13
    $region12: #{tpu_custom_call.1} parent=1 // pred_region
      %s41 = ssub.s32 6144, 6144
      %42 = vsyncadd [#allocation6], %s41
      %s43 = sshll.u32 [#allocation7], 4
      %s44 = int_to_ptr.vmem [resolvable:$true] %s43
      %49 = dma.hbm_to_vmem [thread:$0]  %s2, 6144, %s44, [#allocation6], 64, 64, 4
    $region13: #{tpu_custom_call.1} parent=1 // pred_fallthru
      _
    // Predicated region
    $region14: #{tpu_custom_call.1} parent=1 // pred_check
      _
    $region15: #{tpu_custom_call.1} parent=1 // pred_check_branch
      %51 = sbr.rel (0) target = $region17
    $region16: #{tpu_custom_call.1} parent=1 // pred_region
      %s53 = ssub.s32 256, 256
      %54 = vsyncadd [#allocation9], %s53
      %s55 = sshll.u32 [#allocation8], 4
      %s56 = int_to_ptr.vmem [resolvable:$true] %s55
      %61 = dma.hbm_to_vmem [thread:$0]  %s3, 256, %s56, [#allocation9], 128, 128, 8
    $region17: #{tpu_custom_call.1} parent=1 // pred_fallthru
      _
    // Predicated region
    $region18: #{tpu_custom_call.1} parent=1 // pred_check
      _
    $region19: #{tpu_custom_call.1} parent=1 // pred_check_branch
      %63 = sbr.rel (0) target = $region21
    $region20: #{tpu_custom_call.1} parent=1 // pred_region
      %64 = dma.done [#allocation3], 128
    $region21: #{tpu_custom_call.1} parent=1 // pred_fallthru
      _
    // Predicated region
    $region22: #{tpu_custom_call.1} parent=1 // pred_check
      _
    $region23: #{tpu_custom_call.1} parent=1 // pred_check_branch
      %66 = sbr.rel (0) target = $region25
    $region24: #{tpu_custom_call.1} parent=1 // pred_region
      %67 = dma.done [#allocation6], 6144
    $region25: #{tpu_custom_call.1} parent=1 // pred_fallthru
      _
    // Predicated region
    $region26: #{tpu_custom_call.1} parent=1 // pred_check
      _
    $region27: #{tpu_custom_call.1} parent=1 // pred_check_branch
      %69 = sbr.rel (0) target = $region29
    $region28: #{tpu_custom_call.1} parent=1 // pred_region
      %70 = dma.done [#allocation6], 6144
    $region29: #{tpu_custom_call.1} parent=1 // pred_fallthru
      _
    // Predicated region
    $region30: #{tpu_custom_call.1} parent=1 // pred_check
      _
    $region31: #{tpu_custom_call.1} parent=1 // pred_check_branch
      %72 = sbr.rel (0) target = $region33
    $region32: #{tpu_custom_call.1} parent=1 // pred_region
      %73 = dma.done [#allocation9], 256
    $region33: #{tpu_custom_call.1} parent=1 // pred_fallthru
      _
    %v75 = vld [vmem:[#allocation2] sm:$0xff]
    %v76 = vld [vmem:[#allocation5] sm:$0xff]
    %v77 = vld [vmem:[#allocation5 + $0x8] sm:$0xff]
    %v78 = vld [vmem:[#allocation5 + $0x10] sm:$0xff]
    %v79 = vld [vmem:[#allocation5 + $0x18] sm:$0xff]
    %v80 = vld [vmem:[#allocation5 + $0x20] sm:$0xff]
    %v81 = vld [vmem:[#allocation5 + $0x28] sm:$0xff]
    %v82 = vld [vmem:[#allocation5 + $0x30] sm:$0xff]
    %v83 = vld [vmem:[#allocation5 + $0x38] sm:$0xff]
    %v84 = vld [vmem:[#allocation5 + $0x40] sm:$0xff]
    %v85 = vld [vmem:[#allocation5 + $0x48] sm:$0xff]
    %v86 = vld [vmem:[#allocation5 + $0x50] sm:$0xff]
    %v87 = vld [vmem:[#allocation5 + $0x58] sm:$0xff]
    %v88 = vld [vmem:[#allocation5 + $0x60] sm:$0xff]
    %v89 = vld [vmem:[#allocation5 + $0x68] sm:$0xff]
    %v90 = vld [vmem:[#allocation5 + $0x70] sm:$0xff]
    %v91 = vld [vmem:[#allocation5 + $0x78] sm:$0xff]
    %v92 = vld [vmem:[#allocation8] sm:$0x1]
    %v93 = vlaneseq
    %v94 = vshrl.u32 %v93, 7
    %v95 = vsub.s32 0, %v94
    %v96 = vrot.slane %v92, %v95
    %97 = vmatprep.subr.mxu0 0.0
    %98 = vmatpush1.msra.mxu0 %v76
    %99 = vmatprep.subr.mxu0 0.0
    %100 = vmatpush1.msra.mxu0 %v77
    %101 = vmatprep.subr.mxu0 0.0
    %102 = vmatpush1.msra.mxu0 %v78
    %103 = vmatprep.subr.mxu0 0.0
    %104 = vmatpush1.msra.mxu0 %v79
    %105 = vmatprep.subr.mxu0 0.0
    %106 = vmatpush1.msra.mxu0 %v80
    %107 = vmatprep.subr.mxu0 0.0
    %108 = vmatpush1.msra.mxu0 %v81
    %109 = vmatprep.subr.mxu0 0.0
    %110 = vmatpush1.msra.mxu0 %v82
    %111 = vmatprep.subr.mxu0 0.0
    %112 = vmatpush1.msra.mxu0 %v83
    %113 = vmatprep.subr.mxu0 0.0
    %114 = vmatpush1.msra.mxu0 %v84
    %115 = vmatprep.subr.mxu0 0.0
    %116 = vmatpush1.msra.mxu0 %v85
    %117 = vmatprep.subr.mxu0 0.0
    %118 = vmatpush1.msra.mxu0 %v86
    %119 = vmatprep.subr.mxu0 0.0
    %120 = vmatpush1.msra.mxu0 %v87
    %121 = vmatprep.subr.mxu0 0.0
    %122 = vmatpush1.msra.mxu0 %v88
    %123 = vmatprep.subr.mxu0 0.0
    %124 = vmatpush1.msra.mxu0 %v89
    %125 = vmatprep.subr.mxu0 0.0
    %126 = vmatpush1.msra.mxu0 %v90
    %127 = vmatprep.subr.mxu0 0.0
    %128 = vmatpush1.msra.mxu0 %v91
    %129 = vmatprep.subr.mxu0 0.0
    %130 = vmatpush1.msra.mxu0 0.0
    %131 = vmatprep.subr.mxu0 0.0
    %132 = vmatpush1.msra.mxu0 0.0
    %133 = vmatprep.subr.mxu0 0.0
    %134 = vmatpush1.msra.mxu0 0.0
    %135 = vmatprep.subr.mxu0 0.0
    %136 = vmatpush1.msra.mxu0 0.0
    %137 = vmatprep.subr.mxu0 0.0
    %138 = vmatpush1.msra.mxu0 0.0
    %139 = vmatprep.subr.mxu0 0.0
    %140 = vmatpush1.msra.mxu0 0.0
    %141 = vmatprep.subr.mxu0 0.0
    %142 = vmatpush1.msra.mxu0 0.0
    %143 = vmatprep.subr.mxu0 0.0
    %144 = vmatpush1.msra.mxu0 0.0
    %145 = vmatprep.subr.mxu0 0.0
    %146 = vmatpush1.msra.mxu0 0.0
    %147 = vmatprep.subr.mxu0 0.0
    %148 = vmatpush1.msra.mxu0 0.0
    %149 = vmatprep.subr.mxu0 0.0
    %150 = vmatpush1.msra.mxu0 0.0
    %151 = vmatprep.subr.mxu0 0.0
    %152 = vmatpush1.msra.mxu0 0.0
    %153 = vmatprep.subr.mxu0 0.0
    %154 = vmatpush1.msra.mxu0 0.0
    %155 = vmatprep.subr.mxu0 0.0
    %156 = vmatpush1.msra.mxu0 0.0
    %157 = vmatprep.subr.mxu0 0.0
    %158 = vmatpush1.msra.mxu0 0.0
    %159 = vmatprep.subr.mxu0 0.0
    %160 = vmatpush1.msra.mxu0 0.0
    %161 = vmatprep.mubr.f32.mxu0 0.0
    %162 = vmatmul.mubr.f32.gmra.mrb[0].mxu0 %v75
    %v163 = vpop.f32.mrb[0].mxu0
    %v164 = vadd.f32 %v96, %v163
    %v165 = vpop.f32.mrb[0].mxu0
    %166 = vdwg.mxu0
    %v167 = vmax.f32 %v164, 0.0
    %v168 = vld [vmem:[#allocation5 + $0x80] sm:$0xff]
    %v169 = vld [vmem:[#allocation5 + $0x88] sm:$0xff]
    %v170 = vld [vmem:[#allocation5 + $0x90] sm:$0xff]
    %v171 = vld [vmem:[#allocation5 + $0x98] sm:$0xff]
    %v172 = vld [vmem:[#allocation5 + $0xa0] sm:$0xff]
    %v173 = vld [vmem:[#allocation5 + $0xa8] sm:$0xff]
    %v174 = vld [vmem:[#allocation5 + $0xb0] sm:$0xff]
    %v175 = vld [vmem:[#allocation5 + $0xb8] sm:$0xff]
    %v176 = vld [vmem:[#allocation5 + $0xc0] sm:$0xff]
    %v177 = vld [vmem:[#allocation5 + $0xc8] sm:$0xff]
    %v178 = vld [vmem:[#allocation5 + $0xd0] sm:$0xff]
    %v179 = vld [vmem:[#allocation5 + $0xd8] sm:$0xff]
    %v180 = vld [vmem:[#allocation5 + $0xe0] sm:$0xff]
    %v181 = vld [vmem:[#allocation5 + $0xe8] sm:$0xff]
    %v182 = vld [vmem:[#allocation5 + $0xf0] sm:$0xff]
    %v183 = vld [vmem:[#allocation5 + $0xf8] sm:$0xff]
    %v184 = vld [vmem:[#allocation8 + $0x1] sm:$0x1]
    %v185 = vlaneseq
    %v186 = vshrl.u32 %v185, 7
    %v187 = vsub.s32 0, %v186
    %v188 = vrot.slane %v184, %v187
    %189 = vmatprep.subr.mxu0 0.0
    %190 = vmatpush1.msra.mxu0 %v168
    %191 = vmatprep.subr.mxu0 0.0
    %192 = vmatpush1.msra.mxu0 %v169
    %193 = vmatprep.subr.mxu0 0.0
    %194 = vmatpush1.msra.mxu0 %v170
    %195 = vmatprep.subr.mxu0 0.0
    %196 = vmatpush1.msra.mxu0 %v171
    %197 = vmatprep.subr.mxu0 0.0
    %198 = vmatpush1.msra.mxu0 %v172
    %199 = vmatprep.subr.mxu0 0.0
    %200 = vmatpush1.msra.mxu0 %v173
    %201 = vmatprep.subr.mxu0 0.0
    %202 = vmatpush1.msra.mxu0 %v174
    %203 = vmatprep.subr.mxu0 0.0
    %204 = vmatpush1.msra.mxu0 %v175
    %205 = vmatprep.subr.mxu0 0.0
    %206 = vmatpush1.msra.mxu0 %v176
    %207 = vmatprep.subr.mxu0 0.0
    %208 = vmatpush1.msra.mxu0 %v177
    %209 = vmatprep.subr.mxu0 0.0
    %210 = vmatpush1.msra.mxu0 %v178
    %211 = vmatprep.subr.mxu0 0.0
    %212 = vmatpush1.msra.mxu0 %v179
    %213 = vmatprep.subr.mxu0 0.0
    %214 = vmatpush1.msra.mxu0 %v180
    %215 = vmatprep.subr.mxu0 0.0
    %216 = vmatpush1.msra.mxu0 %v181
    %217 = vmatprep.subr.mxu0 0.0
    %218 = vmatpush1.msra.mxu0 %v182
    %219 = vmatprep.subr.mxu0 0.0
    %220 = vmatpush1.msra.mxu0 %v183
    %221 = vmatprep.subr.mxu0 0.0
    %222 = vmatpush1.msra.mxu0 0.0
    %223 = vmatprep.subr.mxu0 0.0
    %224 = vmatpush1.msra.mxu0 0.0
    %225 = vmatprep.subr.mxu0 0.0
    %226 = vmatpush1.msra.mxu0 0.0
    %227 = vmatprep.subr.mxu0 0.0
    %228 = vmatpush1.msra.mxu0 0.0
    %229 = vmatprep.subr.mxu0 0.0
    %230 = vmatpush1.msra.mxu0 0.0
    %231 = vmatprep.subr.mxu0 0.0
    %232 = vmatpush1.msra.mxu0 0.0
    %233 = vmatprep.subr.mxu0 0.0
    %234 = vmatpush1.msra.mxu0 0.0
    %235 = vmatprep.subr.mxu0 0.0
    %236 = vmatpush1.msra.mxu0 0.0
    %237 = vmatprep.subr.mxu0 0.0
    %238 = vmatpush1.msra.mxu0 0.0
    %239 = vmatprep.subr.mxu0 0.0
    %240 = vmatpush1.msra.mxu0 0.0
    %241 = vmatprep.subr.mxu0 0.0
    %242 = vmatpush1.msra.mxu0 0.0
    %243 = vmatprep.subr.mxu0 0.0
    %244 = vmatpush1.msra.mxu0 0.0
    %245 = vmatprep.subr.mxu0 0.0
    %246 = vmatpush1.msra.mxu0 0.0
    %247 = vmatprep.subr.mxu0 0.0
    %248 = vmatpush1.msra.mxu0 0.0
    %249 = vmatprep.subr.mxu0 0.0
    %250 = vmatpush1.msra.mxu0 0.0
    %251 = vmatprep.subr.mxu0 0.0
    %252 = vmatpush1.msra.mxu0 0.0
    %253 = vmatprep.mubr.f32.mxu0 0.0
    %254 = vmatmul.mubr.f32.gmra.mrb[0].mxu0 %v167
    %v255 = vpop.f32.mrb[0].mxu0
    %v256 = vadd.f32 %v188, %v255
    %v257 = vpop.f32.mrb[0].mxu0
    %258 = vdwg.mxu0
    %v259 = vld [vmem:[#allocation5 + $0x100] sm:$0xff]
    %v260 = vld [vmem:[#allocation5 + $0x108] sm:$0xff]
    %v261 = vld [vmem:[#allocation5 + $0x110] sm:$0xff]
    %v262 = vld [vmem:[#allocation5 + $0x118] sm:$0xff]
    %v263 = vld [vmem:[#allocation5 + $0x120] sm:$0xff]
    %v264 = vld [vmem:[#allocation5 + $0x128] sm:$0xff]
    %v265 = vld [vmem:[#allocation5 + $0x130] sm:$0xff]
    %v266 = vld [vmem:[#allocation5 + $0x138] sm:$0xff]
    %v267 = vld [vmem:[#allocation5 + $0x140] sm:$0xff]
    %v268 = vld [vmem:[#allocation5 + $0x148] sm:$0xff]
    %v269 = vld [vmem:[#allocation5 + $0x150] sm:$0xff]
    %v270 = vld [vmem:[#allocation5 + $0x158] sm:$0xff]
    %v271 = vld [vmem:[#allocation5 + $0x160] sm:$0xff]
    %v272 = vld [vmem:[#allocation5 + $0x168] sm:$0xff]
    %v273 = vld [vmem:[#allocation5 + $0x170] sm:$0xff]
    %v274 = vld [vmem:[#allocation5 + $0x178] sm:$0xff]
    %v275 = vld [vmem:[#allocation8 + $0x2] sm:$0x1]
    %v276 = vlaneseq
    %v277 = vshrl.u32 %v276, 7
    %v278 = vsub.s32 0, %v277
    %v279 = vrot.slane %v275, %v278
    %280 = vmatprep.subr.mxu0 0.0
    %281 = vmatpush1.msra.mxu0 %v259
    %282 = vmatprep.subr.mxu0 0.0
    %283 = vmatpush1.msra.mxu0 %v260
    %284 = vmatprep.subr.mxu0 0.0
    %285 = vmatpush1.msra.mxu0 %v261
    %286 = vmatprep.subr.mxu0 0.0
    %287 = vmatpush1.msra.mxu0 %v262
    %288 = vmatprep.subr.mxu0 0.0
    %289 = vmatpush1.msra.mxu0 %v263
    %290 = vmatprep.subr.mxu0 0.0
    %291 = vmatpush1.msra.mxu0 %v264
    %292 = vmatprep.subr.mxu0 0.0
    %293 = vmatpush1.msra.mxu0 %v265
    %294 = vmatprep.subr.mxu0 0.0
    %295 = vmatpush1.msra.mxu0 %v266
    %296 = vmatprep.subr.mxu0 0.0
    %297 = vmatpush1.msra.mxu0 %v267
    %298 = vmatprep.subr.mxu0 0.0
    %299 = vmatpush1.msra.mxu0 %v268
    %300 = vmatprep.subr.mxu0 0.0
    %301 = vmatpush1.msra.mxu0 %v269
    %302 = vmatprep.subr.mxu0 0.0
    %303 = vmatpush1.msra.mxu0 %v270
    %304 = vmatprep.subr.mxu0 0.0
    %305 = vmatpush1.msra.mxu0 %v271
    %306 = vmatprep.subr.mxu0 0.0
    %307 = vmatpush1.msra.mxu0 %v272
    %308 = vmatprep.subr.mxu0 0.0
    %309 = vmatpush1.msra.mxu0 %v273
    %310 = vmatprep.subr.mxu0 0.0
    %311 = vmatpush1.msra.mxu0 %v274
    %312 = vmatprep.subr.mxu0 0.0
    %313 = vmatpush1.msra.mxu0 0.0
    %314 = vmatprep.subr.mxu0 0.0
    %315 = vmatpush1.msra.mxu0 0.0
    %316 = vmatprep.subr.mxu0 0.0
    %317 = vmatpush1.msra.mxu0 0.0
    %318 = vmatprep.subr.mxu0 0.0
    %319 = vmatpush1.msra.mxu0 0.0
    %320 = vmatprep.subr.mxu0 0.0
    %321 = vmatpush1.msra.mxu0 0.0
    %322 = vmatprep.subr.mxu0 0.0
    %323 = vmatpush1.msra.mxu0 0.0
    %324 = vmatprep.subr.mxu0 0.0
    %325 = vmatpush1.msra.mxu0 0.0
    %326 = vmatprep.subr.mxu0 0.0
    %327 = vmatpush1.msra.mxu0 0.0
    %328 = vmatprep.subr.mxu0 0.0
    %329 = vmatpush1.msra.mxu0 0.0
    %330 = vmatprep.subr.mxu0 0.0
    %331 = vmatpush1.msra.mxu0 0.0
    %332 = vmatprep.subr.mxu0 0.0
    %333 = vmatpush1.msra.mxu0 0.0
    %334 = vmatprep.subr.mxu0 0.0
    %335 = vmatpush1.msra.mxu0 0.0
    %336 = vmatprep.subr.mxu0 0.0
    %337 = vmatpush1.msra.mxu0 0.0
    %338 = vmatprep.subr.mxu0 0.0
    %339 = vmatpush1.msra.mxu0 0.0
    %340 = vmatprep.subr.mxu0 0.0
    %341 = vmatpush1.msra.mxu0 0.0
    %342 = vmatprep.subr.mxu0 0.0
    %343 = vmatpush1.msra.mxu0 0.0
    %344 = vmatprep.mubr.f32.mxu0 0.0
    %345 = vmatmul.mubr.f32.gmra.mrb[0].mxu0 %v256
    %v346 = vpop.f32.mrb[0].mxu0
    %v347 = vadd.f32 %v279, %v346
    %v348 = vpop.f32.mrb[0].mxu0
    %349 = vdwg.mxu0
    %350 = vst [vmem:[#allocation10] sm:$0xff] %v347
    %v351 = vlaneseq
    %v352 = vand.u32 %v351, 127
    %vm353 = vcmp.lt.s32.totalorder %v352, 32
    %v354 = vld [vmem:[#allocation8 + $0x3] sm:$0x1]
    %v355 = vld [vmem:[#allocation8 + $0x4] sm:$0x1]
    %v356 = vpack.c.bf16 %v75, %v75
    %v357 = vld [vmem:[#allocation7] sm:$0xf]
    %v358 = vld [vmem:[#allocation7 + $0x4] sm:$0xf]
    %v359 = vld [vmem:[#allocation7 + $0x8] sm:$0xf]
    %v360 = vld [vmem:[#allocation7 + $0xc] sm:$0xf]
    %v361 = vld [vmem:[#allocation7 + $0x10] sm:$0xf]
    %v362 = vld [vmem:[#allocation7 + $0x14] sm:$0xf]
    %v363 = vld [vmem:[#allocation7 + $0x18] sm:$0xf]
    %v364 = vld [vmem:[#allocation7 + $0x1c] sm:$0xf]
    %v365 = vld [vmem:[#allocation7 + $0x20] sm:$0xf]
    %v366 = vld [vmem:[#allocation7 + $0x24] sm:$0xf]
    %v367 = vld [vmem:[#allocation7 + $0x28] sm:$0xf]
    %v368 = vld [vmem:[#allocation7 + $0x2c] sm:$0xf]
    %v369 = vld [vmem:[#allocation7 + $0x30] sm:$0xf]
    %v370 = vld [vmem:[#allocation7 + $0x34] sm:$0xf]
    %v371 = vld [vmem:[#allocation7 + $0x38] sm:$0xf]
    %v372 = vld [vmem:[#allocation7 + $0x3c] sm:$0xf]
    %v373 = vlaneseq
    %v374 = vshrl.u32 %v373, 7
    %v375 = vsub.s32 0, %v374
    %v376 = vrot.slane %v354, %v375
    %v393 = vunpack.c.l.b16 %v357
    %v394 = vunpack.c.l.b16 %v358
    %v395 = vunpack.c.l.b16 %v359
    %v396 = vunpack.c.l.b16 %v360
    %v397 = vunpack.c.l.b16 %v361
    %v398 = vunpack.c.l.b16 %v362
    %v399 = vunpack.c.l.b16 %v363
    %v400 = vunpack.c.l.b16 %v364
    %v401 = vunpack.c.l.b16 %v365
    %v402 = vunpack.c.l.b16 %v366
    %v403 = vunpack.c.l.b16 %v367
    %v404 = vunpack.c.l.b16 %v368
    %v405 = vunpack.c.l.b16 %v369
    %v406 = vunpack.c.l.b16 %v370
    %v407 = vunpack.c.l.b16 %v371
    %v408 = vunpack.c.l.b16 %v372
    %v409 = vpack.c.b16 %v394, %v393
    %v410 = vpack.c.b16 %v396, %v395
    %v411 = vpack.c.b16 %v398, %v397
    %v412 = vpack.c.b16 %v400, %v399
    %v413 = vpack.c.b16 %v402, %v401
    %v414 = vpack.c.b16 %v404, %v403
    %v415 = vpack.c.b16 %v406, %v405
    %v416 = vpack.c.b16 %v408, %v407
    %425 = vmatprep.subr.bf16.mxu0 0
    %426 = vmatpush1.bf16.msra.mxu0 %v409
    %427 = vmatprep.subr.bf16.mxu0 0
    %428 = vmatpush1.bf16.msra.mxu0 %v410
    %429 = vmatprep.subr.bf16.mxu0 0
    %430 = vmatpush1.bf16.msra.mxu0 %v411
    %431 = vmatprep.subr.bf16.mxu0 0
    %432 = vmatpush1.bf16.msra.mxu0 %v412
    %433 = vmatprep.subr.bf16.mxu0 0
    %434 = vmatpush1.bf16.msra.mxu0 %v413
    %435 = vmatprep.subr.bf16.mxu0 0
    %436 = vmatpush1.bf16.msra.mxu0 %v414
    %437 = vmatprep.subr.bf16.mxu0 0
    %438 = vmatpush1.bf16.msra.mxu0 %v415
    %439 = vmatprep.subr.bf16.mxu0 0
    %440 = vmatpush1.bf16.msra.mxu0 %v416
    %441 = vmatprep.subr.bf16.mxu0 0
    %442 = vmatpush1.bf16.msra.mxu0 0
    %443 = vmatprep.subr.bf16.mxu0 0
    %444 = vmatpush1.bf16.msra.mxu0 0
    %445 = vmatprep.subr.bf16.mxu0 0
    %446 = vmatpush1.bf16.msra.mxu0 0
    %447 = vmatprep.subr.bf16.mxu0 0
    %448 = vmatpush1.bf16.msra.mxu0 0
    %449 = vmatprep.subr.bf16.mxu0 0
    %450 = vmatpush1.bf16.msra.mxu0 0
    %451 = vmatprep.subr.bf16.mxu0 0
    %452 = vmatpush1.bf16.msra.mxu0 0
    %453 = vmatprep.subr.bf16.mxu0 0
    %454 = vmatpush1.bf16.msra.mxu0 0
    %455 = vmatprep.subr.bf16.mxu0 0
    %456 = vmatpush1.bf16.msra.mxu0 0
    %457 = vmatprep.mubr.bf16.mxu0 0
    %458 = vmatmul.mubr.bf16.gmra.mrb[0].mxu0 %v356
    %v459 = vpop.f32.mrb[0].mxu0
    %v460 = vadd.f32 %v376, %v459
    %v461 = vpop.f32.mrb[0].mxu0
    %v462 = vpop.f32.mrb[0].mxu0
    %v463 = vpop.f32.mrb[0].mxu0
    %464 = vdwg.mxu0
    %v465 = vxor.u32 %v460, 2147483648
    %v466 = vmul.f32 %v465, 1.442695
    %v467 = vpow.pop %v466
    %v468 = vadd.f32 %v467, 1.0
    %v469 = vrcp.pop %v468
    %v470 = vmul.f32 1.0, %v469
    %471 = vrot.lane.b32.xlu0 %v470, 64
    %v472 = vpop.permute.xlu0 %471
    %v473 = vmul.f32 %v472, %v355
    %v474 = vadd.f32 %v460, %v473
    %v475 = vtanh.pop %v474
    %476 = vrot.lane.b32.xlu0 %v475, 64
    %v477 = vpop.permute.xlu0 %476
    %478 = vrot.lane.b32.xlu0 %v470, 96
    %v479 = vpop.permute.xlu0 %478
    %v480 = vmul.f32 %v479, %v477
    %v481 = vsub.f32 %v477, %v480
    %v482 = vsel %vm353, %v481, 0.0
    %v483 = vpack.c.bf16 %v482, %v482
    %v484 = vld [vmem:[#allocation7 + $0x40] sm:$0xf]
    %v485 = vld [vmem:[#allocation7 + $0x44] sm:$0xf]
    %v486 = vld [vmem:[#allocation7 + $0x48] sm:$0xf]
    %v487 = vld [vmem:[#allocation7 + $0x4c] sm:$0xf]
    %v488 = vld [vmem:[#allocation7 + $0x50] sm:$0xf]
    %v489 = vld [vmem:[#allocation7 + $0x54] sm:$0xf]
    %v490 = vld [vmem:[#allocation7 + $0x58] sm:$0xf]
    %v491 = vld [vmem:[#allocation7 + $0x5c] sm:$0xf]
    %v492 = vld [vmem:[#allocation7 + $0x60] sm:$0xf]
    %v493 = vld [vmem:[#allocation7 + $0x64] sm:$0xf]
    %v494 = vld [vmem:[#allocation7 + $0x68] sm:$0xf]
    %v495 = vld [vmem:[#allocation7 + $0x6c] sm:$0xf]
    %v496 = vld [vmem:[#allocation7 + $0x70] sm:$0xf]
    %v497 = vld [vmem:[#allocation7 + $0x74] sm:$0xf]
    %v498 = vld [vmem:[#allocation7 + $0x78] sm:$0xf]
    %v499 = vld [vmem:[#allocation7 + $0x7c] sm:$0xf]
    %v516 = vunpack.c.l.b16 %v484
    %v517 = vunpack.c.l.b16 %v485
    %v518 = vunpack.c.l.b16 %v486
    %v519 = vunpack.c.l.b16 %v487
    %v520 = vunpack.c.l.b16 %v488
    %v521 = vunpack.c.l.b16 %v489
    %v522 = vunpack.c.l.b16 %v490
    %v523 = vunpack.c.l.b16 %v491
    %v524 = vunpack.c.l.b16 %v492
    %v525 = vunpack.c.l.b16 %v493
    %v526 = vunpack.c.l.b16 %v494
    %v527 = vunpack.c.l.b16 %v495
    %v528 = vunpack.c.l.b16 %v496
    %v529 = vunpack.c.l.b16 %v497
    %v530 = vunpack.c.l.b16 %v498
    %v531 = vunpack.c.l.b16 %v499
    %v532 = vpack.c.b16 %v517, %v516
    %v533 = vpack.c.b16 %v519, %v518
    %v534 = vpack.c.b16 %v521, %v520
    %v535 = vpack.c.b16 %v523, %v522
    %v536 = vpack.c.b16 %v525, %v524
    %v537 = vpack.c.b16 %v527, %v526
    %v538 = vpack.c.b16 %v529, %v528
    %v539 = vpack.c.b16 %v531, %v530
    %548 = vmatprep.subr.bf16.mxu0 0
    %549 = vmatpush1.bf16.msra.mxu0 %v532
    %550 = vmatprep.subr.bf16.mxu0 0
    %551 = vmatpush1.bf16.msra.mxu0 %v533
    %552 = vmatprep.subr.bf16.mxu0 0
    %553 = vmatpush1.bf16.msra.mxu0 %v534
    %554 = vmatprep.subr.bf16.mxu0 0
    %555 = vmatpush1.bf16.msra.mxu0 %v535
    %556 = vmatprep.subr.bf16.mxu0 0
    %557 = vmatpush1.bf16.msra.mxu0 %v536
    %558 = vmatprep.subr.bf16.mxu0 0
    %559 = vmatpush1.bf16.msra.mxu0 %v537
    %560 = vmatprep.subr.bf16.mxu0 0
    %561 = vmatpush1.bf16.msra.mxu0 %v538
    %562 = vmatprep.subr.bf16.mxu0 0
    %563 = vmatpush1.bf16.msra.mxu0 %v539
    %564 = vmatprep.subr.bf16.mxu0 0
    %565 = vmatpush1.bf16.msra.mxu0 0
    %566 = vmatprep.subr.bf16.mxu0 0
    %567 = vmatpush1.bf16.msra.mxu0 0
    %568 = vmatprep.subr.bf16.mxu0 0
    %569 = vmatpush1.bf16.msra.mxu0 0
    %570 = vmatprep.subr.bf16.mxu0 0
    %571 = vmatpush1.bf16.msra.mxu0 0
    %572 = vmatprep.subr.bf16.mxu0 0
    %573 = vmatpush1.bf16.msra.mxu0 0
    %574 = vmatprep.subr.bf16.mxu0 0
    %575 = vmatpush1.bf16.msra.mxu0 0
    %576 = vmatprep.subr.bf16.mxu0 0
    %577 = vmatpush1.bf16.msra.mxu0 0
    %578 = vmatprep.subr.bf16.mxu0 0
    %579 = vmatpush1.bf16.msra.mxu0 0
    %580 = vmatprep.mubr.bf16.mxu0 0
    %581 = vmatmul.mubr.bf16.gmra.mrb[0].mxu0 %v483
    %v582 = vpop.f32.mrb[0].mxu0
    %v583 = vadd.f32 0.0, %v582
    %v584 = vpop.f32.mrb[0].mxu0
    %v585 = vpop.f32.mrb[0].mxu0
    %v586 = vpop.f32.mrb[0].mxu0
    %587 = vdwg.mxu0
    %v589 = vrot.slane %v583, 7
    %v591 = vadd.f32 %v460, %v589
    %v592 = vxor.u32 %v591, 2147483648
    %v593 = vmul.f32 %v592, 1.442695
    %v594 = vpow.pop %v593
    %v595 = vadd.f32 %v594, 1.0
    %v596 = vrcp.pop %v595
    %v597 = vmul.f32 1.0, %v596
    %v599 = vrot.slane %v597, 1
    %601 = vrot.lane.b32.xlu0 %v599, 64
    %v602 = vpop.permute.xlu0 %601
    %v603 = vadd.f32 %v583, %v355
    %v604 = vmul.f32 %v602, %v603
    %v606 = vrot.slane %v604, 7
    %v608 = vadd.f32 %v460, %v606
    %v609 = vtanh.pop %v608
    %v611 = vrot.slane %v609, 1
    %613 = vrot.lane.b32.xlu0 %v611, 64
    %v614 = vpop.permute.xlu0 %613
    %615 = vrot.lane.b32.xlu0 %v599, 96
    %v616 = vpop.permute.xlu0 %615
    %v617 = vsub.f32 %v482, %v614
    %v618 = vmul.f32 %v616, %v617
    %v619 = vadd.f32 %v614, %v618
    %v620 = vsel %vm353, %v619, 0.0
    %v621 = vpack.c.bf16 %v620, %v620
    %622 = vmatprep.subr.bf16.mxu0 0
    %623 = vmatpush1.bf16.msra.mxu0 %v532
    %624 = vmatprep.subr.bf16.mxu0 0
    %625 = vmatpush1.bf16.msra.mxu0 %v533
    %626 = vmatprep.subr.bf16.mxu0 0
    %627 = vmatpush1.bf16.msra.mxu0 %v534
    %628 = vmatprep.subr.bf16.mxu0 0
    %629 = vmatpush1.bf16.msra.mxu0 %v535
    %630 = vmatprep.subr.bf16.mxu0 0
    %631 = vmatpush1.bf16.msra.mxu0 %v536
    %632 = vmatprep.subr.bf16.mxu0 0
    %633 = vmatpush1.bf16.msra.mxu0 %v537
    %634 = vmatprep.subr.bf16.mxu0 0
    %635 = vmatpush1.bf16.msra.mxu0 %v538
    %636 = vmatprep.subr.bf16.mxu0 0
    %637 = vmatpush1.bf16.msra.mxu0 %v539
    %638 = vmatprep.subr.bf16.mxu0 0
    %639 = vmatpush1.bf16.msra.mxu0 0
    %640 = vmatprep.subr.bf16.mxu0 0
    %641 = vmatpush1.bf16.msra.mxu0 0
    %642 = vmatprep.subr.bf16.mxu0 0
    %643 = vmatpush1.bf16.msra.mxu0 0
    %644 = vmatprep.subr.bf16.mxu0 0
    %645 = vmatpush1.bf16.msra.mxu0 0
    %646 = vmatprep.subr.bf16.mxu0 0
    %647 = vmatpush1.bf16.msra.mxu0 0
    %648 = vmatprep.subr.bf16.mxu0 0
    %649 = vmatpush1.bf16.msra.mxu0 0
    %650 = vmatprep.subr.bf16.mxu0 0
    %651 = vmatpush1.bf16.msra.mxu0 0
    %652 = vmatprep.subr.bf16.mxu0 0
    %653 = vmatpush1.bf16.msra.mxu0 0
    %654 = vmatprep.mubr.bf16.mxu0 0
    %655 = vmatmul.mubr.bf16.gmra.mrb[0].mxu0 %v621
    %v656 = vpop.f32.mrb[0].mxu0
    %v657 = vadd.f32 0.0, %v656
    %v658 = vpop.f32.mrb[0].mxu0
    %v659 = vpop.f32.mrb[0].mxu0
    %v660 = vpop.f32.mrb[0].mxu0
    %661 = vdwg.mxu0
    %v663 = vrot.slane %v657, 6
    %v665 = vadd.f32 %v460, %v663
    %v666 = vxor.u32 %v665, 2147483648
    %v667 = vmul.f32 %v666, 1.442695
    %v668 = vpow.pop %v667
    %v669 = vadd.f32 %v668, 1.0
    %v670 = vrcp.pop %v669
    %v671 = vmul.f32 1.0, %v670
    %v673 = vrot.slane %v671, 2
    %675 = vrot.lane.b32.xlu0 %v673, 64
    %v676 = vpop.permute.xlu0 %675
    %v677 = vadd.f32 %v657, %v355
    %v678 = vmul.f32 %v676, %v677
    %v680 = vrot.slane %v678, 6
    %v682 = vadd.f32 %v460, %v680
    %v683 = vtanh.pop %v682
    %v685 = vrot.slane %v683, 2
    %687 = vrot.lane.b32.xlu0 %v685, 64
    %v688 = vpop.permute.xlu0 %687
    %689 = vrot.lane.b32.xlu0 %v673, 96
    %v690 = vpop.permute.xlu0 %689
    %v691 = vsub.f32 %v620, %v688
    %v692 = vmul.f32 %v690, %v691
    %v693 = vadd.f32 %v688, %v692
    %v694 = vsel %vm353, %v693, 0.0
    %v695 = vpack.c.bf16 %v694, %v694
    %696 = vmatprep.subr.bf16.mxu0 0
    %697 = vmatpush1.bf16.msra.mxu0 %v532
    %698 = vmatprep.subr.bf16.mxu0 0
    %699 = vmatpush1.bf16.msra.mxu0 %v533
    %700 = vmatprep.subr.bf16.mxu0 0
    %701 = vmatpush1.bf16.msra.mxu0 %v534
    %702 = vmatprep.subr.bf16.mxu0 0
    %703 = vmatpush1.bf16.msra.mxu0 %v535
    %704 = vmatprep.subr.bf16.mxu0 0
    %705 = vmatpush1.bf16.msra.mxu0 %v536
    %706 = vmatprep.subr.bf16.mxu0 0
    %707 = vmatpush1.bf16.msra.mxu0 %v537
    %708 = vmatprep.subr.bf16.mxu0 0
    %709 = vmatpush1.bf16.msra.mxu0 %v538
    %710 = vmatprep.subr.bf16.mxu0 0
    %711 = vmatpush1.bf16.msra.mxu0 %v539
    %712 = vmatprep.subr.bf16.mxu0 0
    %713 = vmatpush1.bf16.msra.mxu0 0
    %714 = vmatprep.subr.bf16.mxu0 0
    %715 = vmatpush1.bf16.msra.mxu0 0
    %716 = vmatprep.subr.bf16.mxu0 0
    %717 = vmatpush1.bf16.msra.mxu0 0
    %718 = vmatprep.subr.bf16.mxu0 0
    %719 = vmatpush1.bf16.msra.mxu0 0
    %720 = vmatprep.subr.bf16.mxu0 0
    %721 = vmatpush1.bf16.msra.mxu0 0
    %722 = vmatprep.subr.bf16.mxu0 0
    %723 = vmatpush1.bf16.msra.mxu0 0
    %724 = vmatprep.subr.bf16.mxu0 0
    %725 = vmatpush1.bf16.msra.mxu0 0
    %726 = vmatprep.subr.bf16.mxu0 0
    %727 = vmatpush1.bf16.msra.mxu0 0
    %728 = vmatprep.mubr.bf16.mxu0 0
    %729 = vmatmul.mubr.bf16.gmra.mrb[0].mxu0 %v695
    %v730 = vpop.f32.mrb[0].mxu0
    %v731 = vadd.f32 0.0, %v730
    %v732 = vpop.f32.mrb[0].mxu0
    %v733 = vpop.f32.mrb[0].mxu0
    %v734 = vpop.f32.mrb[0].mxu0
    %735 = vdwg.mxu0
    %v737 = vrot.slane %v731, 5
    %v739 = vadd.f32 %v460, %v737
    %v740 = vxor.u32 %v739, 2147483648
    %v741 = vmul.f32 %v740, 1.442695
    %v742 = vpow.pop %v741
    %v743 = vadd.f32 %v742, 1.0
    %v744 = vrcp.pop %v743
    %v745 = vmul.f32 1.0, %v744
    %v747 = vrot.slane %v745, 3
    %749 = vrot.lane.b32.xlu0 %v747, 64
    %v750 = vpop.permute.xlu0 %749
    %v751 = vadd.f32 %v731, %v355
    %v752 = vmul.f32 %v750, %v751
    %v754 = vrot.slane %v752, 5
    %v756 = vadd.f32 %v460, %v754
    %v757 = vtanh.pop %v756
    %v759 = vrot.slane %v757, 3
    %761 = vrot.lane.b32.xlu0 %v759, 64
    %v762 = vpop.permute.xlu0 %761
    %763 = vrot.lane.b32.xlu0 %v747, 96
    %v764 = vpop.permute.xlu0 %763
    %v765 = vsub.f32 %v694, %v762
    %v766 = vmul.f32 %v764, %v765
    %v767 = vadd.f32 %v762, %v766
    %v768 = vsel %vm353, %v767, 0.0
    %v769 = vpack.c.bf16 %v768, %v768
    %770 = vmatprep.subr.bf16.mxu0 0
    %771 = vmatpush1.bf16.msra.mxu0 %v532
    %772 = vmatprep.subr.bf16.mxu0 0
    %773 = vmatpush1.bf16.msra.mxu0 %v533
    %774 = vmatprep.subr.bf16.mxu0 0
    %775 = vmatpush1.bf16.msra.mxu0 %v534
    %776 = vmatprep.subr.bf16.mxu0 0
    %777 = vmatpush1.bf16.msra.mxu0 %v535
    %778 = vmatprep.subr.bf16.mxu0 0
    %779 = vmatpush1.bf16.msra.mxu0 %v536
    %780 = vmatprep.subr.bf16.mxu0 0
    %781 = vmatpush1.bf16.msra.mxu0 %v537
    %782 = vmatprep.subr.bf16.mxu0 0
    %783 = vmatpush1.bf16.msra.mxu0 %v538
    %784 = vmatprep.subr.bf16.mxu0 0
    %785 = vmatpush1.bf16.msra.mxu0 %v539
    %786 = vmatprep.subr.bf16.mxu0 0
    %787 = vmatpush1.bf16.msra.mxu0 0
    %788 = vmatprep.subr.bf16.mxu0 0
    %789 = vmatpush1.bf16.msra.mxu0 0
    %790 = vmatprep.subr.bf16.mxu0 0
    %791 = vmatpush1.bf16.msra.mxu0 0
    %792 = vmatprep.subr.bf16.mxu0 0
    %793 = vmatpush1.bf16.msra.mxu0 0
    %794 = vmatprep.subr.bf16.mxu0 0
    %795 = vmatpush1.bf16.msra.mxu0 0
    %796 = vmatprep.subr.bf16.mxu0 0
    %797 = vmatpush1.bf16.msra.mxu0 0
    %798 = vmatprep.subr.bf16.mxu0 0
    %799 = vmatpush1.bf16.msra.mxu0 0
    %800 = vmatprep.subr.bf16.mxu0 0
    %801 = vmatpush1.bf16.msra.mxu0 0
    %802 = vmatprep.mubr.bf16.mxu0 0
    %803 = vmatmul.mubr.bf16.gmra.mrb[0].mxu0 %v769
    %v804 = vpop.f32.mrb[0].mxu0
    %v805 = vadd.f32 0.0, %v804
    %v806 = vpop.f32.mrb[0].mxu0
    %v807 = vpop.f32.mrb[0].mxu0
    %v808 = vpop.f32.mrb[0].mxu0
    %809 = vdwg.mxu0
    %v811 = vrot.slane %v805, 4
    %v813 = vadd.f32 %v460, %v811
    %v814 = vxor.u32 %v813, 2147483648
    %v815 = vmul.f32 %v814, 1.442695
    %v816 = vpow.pop %v815
    %v817 = vadd.f32 %v816, 1.0
    %v818 = vrcp.pop %v817
    %v819 = vmul.f32 1.0, %v818
    %v821 = vrot.slane %v819, 4
    %823 = vrot.lane.b32.xlu0 %v821, 64
    %v824 = vpop.permute.xlu0 %823
    %v825 = vadd.f32 %v805, %v355
    %v826 = vmul.f32 %v824, %v825
    %v828 = vrot.slane %v826, 4
    %v830 = vadd.f32 %v460, %v828
    %v831 = vtanh.pop %v830
    %v833 = vrot.slane %v831, 4
    %835 = vrot.lane.b32.xlu0 %v833, 64
    %v836 = vpop.permute.xlu0 %835
    %837 = vrot.lane.b32.xlu0 %v821, 96
    %v838 = vpop.permute.xlu0 %837
    %v839 = vsub.f32 %v768, %v836
    %v840 = vmul.f32 %v838, %v839
    %v841 = vadd.f32 %v836, %v840
    %v842 = vsel %vm353, %v841, 0.0
    %v843 = vpack.c.bf16 %v842, %v842
    %844 = vmatprep.subr.bf16.mxu0 0
    %845 = vmatpush1.bf16.msra.mxu0 %v532
    %846 = vmatprep.subr.bf16.mxu0 0
    %847 = vmatpush1.bf16.msra.mxu0 %v533
    %848 = vmatprep.subr.bf16.mxu0 0
    %849 = vmatpush1.bf16.msra.mxu0 %v534
    %850 = vmatprep.subr.bf16.mxu0 0
    %851 = vmatpush1.bf16.msra.mxu0 %v535
    %852 = vmatprep.subr.bf16.mxu0 0
    %853 = vmatpush1.bf16.msra.mxu0 %v536
    %854 = vmatprep.subr.bf16.mxu0 0
    %855 = vmatpush1.bf16.msra.mxu0 %v537
    %856 = vmatprep.subr.bf16.mxu0 0
    %857 = vmatpush1.bf16.msra.mxu0 %v538
    %858 = vmatprep.subr.bf16.mxu0 0
    %859 = vmatpush1.bf16.msra.mxu0 %v539
    %860 = vmatprep.subr.bf16.mxu0 0
    %861 = vmatpush1.bf16.msra.mxu0 0
    %862 = vmatprep.subr.bf16.mxu0 0
    %863 = vmatpush1.bf16.msra.mxu0 0
    %864 = vmatprep.subr.bf16.mxu0 0
    %865 = vmatpush1.bf16.msra.mxu0 0
    %866 = vmatprep.subr.bf16.mxu0 0
    %867 = vmatpush1.bf16.msra.mxu0 0
    %868 = vmatprep.subr.bf16.mxu0 0
    %869 = vmatpush1.bf16.msra.mxu0 0
    %870 = vmatprep.subr.bf16.mxu0 0
    %871 = vmatpush1.bf16.msra.mxu0 0
    %872 = vmatprep.subr.bf16.mxu0 0
    %873 = vmatpush1.bf16.msra.mxu0 0
    %874 = vmatprep.subr.bf16.mxu0 0
    %875 = vmatpush1.bf16.msra.mxu0 0
    %876 = vmatprep.mubr.bf16.mxu0 0
    %877 = vmatmul.mubr.bf16.gmra.mrb[0].mxu0 %v843
    %v878 = vpop.f32.mrb[0].mxu0
    %v879 = vadd.f32 0.0, %v878
    %v880 = vpop.f32.mrb[0].mxu0
    %v881 = vpop.f32.mrb[0].mxu0
    %v882 = vpop.f32.mrb[0].mxu0
    %883 = vdwg.mxu0
    %v885 = vrot.slane %v879, 3
    %v887 = vadd.f32 %v460, %v885
    %v888 = vxor.u32 %v887, 2147483648
    %v889 = vmul.f32 %v888, 1.442695
    %v890 = vpow.pop %v889
    %v891 = vadd.f32 %v890, 1.0
    %v892 = vrcp.pop %v891
    %v893 = vmul.f32 1.0, %v892
    %v895 = vrot.slane %v893, 5
    %897 = vrot.lane.b32.xlu0 %v895, 64
    %v898 = vpop.permute.xlu0 %897
    %v899 = vadd.f32 %v879, %v355
    %v900 = vmul.f32 %v898, %v899
    %v902 = vrot.slane %v900, 3
    %v904 = vadd.f32 %v460, %v902
    %v905 = vtanh.pop %v904
    %v907 = vrot.slane %v905, 5
    %909 = vrot.lane.b32.xlu0 %v907, 64
    %v910 = vpop.permute.xlu0 %909
    %911 = vrot.lane.b32.xlu0 %v895, 96
    %v912 = vpop.permute.xlu0 %911
    %v913 = vsub.f32 %v842, %v910
    %v914 = vmul.f32 %v912, %v913
    %v915 = vadd.f32 %v910, %v914
    %v916 = vsel %vm353, %v915, 0.0
    %v917 = vpack.c.bf16 %v916, %v916
    %918 = vmatprep.subr.bf16.mxu0 0
    %919 = vmatpush1.bf16.msra.mxu0 %v532
    %920 = vmatprep.subr.bf16.mxu0 0
    %921 = vmatpush1.bf16.msra.mxu0 %v533
    %922 = vmatprep.subr.bf16.mxu0 0
    %923 = vmatpush1.bf16.msra.mxu0 %v534
    %924 = vmatprep.subr.bf16.mxu0 0
    %925 = vmatpush1.bf16.msra.mxu0 %v535
    %926 = vmatprep.subr.bf16.mxu0 0
    %927 = vmatpush1.bf16.msra.mxu0 %v536
    %928 = vmatprep.subr.bf16.mxu0 0
    %929 = vmatpush1.bf16.msra.mxu0 %v537
    %930 = vmatprep.subr.bf16.mxu0 0
    %931 = vmatpush1.bf16.msra.mxu0 %v538
    %932 = vmatprep.subr.bf16.mxu0 0
    %933 = vmatpush1.bf16.msra.mxu0 %v539
    %934 = vmatprep.subr.bf16.mxu0 0
    %935 = vmatpush1.bf16.msra.mxu0 0
    %936 = vmatprep.subr.bf16.mxu0 0
    %937 = vmatpush1.bf16.msra.mxu0 0
    %938 = vmatprep.subr.bf16.mxu0 0
    %939 = vmatpush1.bf16.msra.mxu0 0
    %940 = vmatprep.subr.bf16.mxu0 0
    %941 = vmatpush1.bf16.msra.mxu0 0
    %942 = vmatprep.subr.bf16.mxu0 0
    %943 = vmatpush1.bf16.msra.mxu0 0
    %944 = vmatprep.subr.bf16.mxu0 0
    %945 = vmatpush1.bf16.msra.mxu0 0
    %946 = vmatprep.subr.bf16.mxu0 0
    %947 = vmatpush1.bf16.msra.mxu0 0
    %948 = vmatprep.subr.bf16.mxu0 0
    %949 = vmatpush1.bf16.msra.mxu0 0
    %950 = vmatprep.mubr.bf16.mxu0 0
    %951 = vmatmul.mubr.bf16.gmra.mrb[0].mxu0 %v917
    %v952 = vpop.f32.mrb[0].mxu0
    %v953 = vadd.f32 0.0, %v952
    %v954 = vpop.f32.mrb[0].mxu0
    %v955 = vpop.f32.mrb[0].mxu0
    %v956 = vpop.f32.mrb[0].mxu0
    %957 = vdwg.mxu0
    %v959 = vrot.slane %v953, 2
    %v961 = vadd.f32 %v460, %v959
    %v962 = vxor.u32 %v961, 2147483648
    %v963 = vmul.f32 %v962, 1.442695
    %v964 = vpow.pop %v963
    %v965 = vadd.f32 %v964, 1.0
    %v966 = vrcp.pop %v965
    %v967 = vmul.f32 1.0, %v966
    %v969 = vrot.slane %v967, 6
    %971 = vrot.lane.b32.xlu0 %v969, 64
    %v972 = vpop.permute.xlu0 %971
    %v973 = vadd.f32 %v953, %v355
    %v974 = vmul.f32 %v972, %v973
    %v976 = vrot.slane %v974, 2
    %v978 = vadd.f32 %v460, %v976
    %v979 = vtanh.pop %v978
    %v981 = vrot.slane %v979, 6
    %983 = vrot.lane.b32.xlu0 %v981, 64
    %v984 = vpop.permute.xlu0 %983
    %985 = vrot.lane.b32.xlu0 %v969, 96
    %v986 = vpop.permute.xlu0 %985
    %v987 = vsub.f32 %v916, %v984
    %v988 = vmul.f32 %v986, %v987
    %v989 = vadd.f32 %v984, %v988
    %v990 = vsel %vm353, %v989, 0.0
    %v991 = vpack.c.bf16 %v990, %v990
    %992 = vmatprep.subr.bf16.mxu0 0
    %993 = vmatpush1.bf16.msra.mxu0 %v532
    %994 = vmatprep.subr.bf16.mxu0 0
    %995 = vmatpush1.bf16.msra.mxu0 %v533
    %996 = vmatprep.subr.bf16.mxu0 0
    %997 = vmatpush1.bf16.msra.mxu0 %v534
    %998 = vmatprep.subr.bf16.mxu0 0
    %999 = vmatpush1.bf16.msra.mxu0 %v535
    %1000 = vmatprep.subr.bf16.mxu0 0
    %1001 = vmatpush1.bf16.msra.mxu0 %v536
    %1002 = vmatprep.subr.bf16.mxu0 0
    %1003 = vmatpush1.bf16.msra.mxu0 %v537
    %1004 = vmatprep.subr.bf16.mxu0 0
    %1005 = vmatpush1.bf16.msra.mxu0 %v538
    %1006 = vmatprep.subr.bf16.mxu0 0
    %1007 = vmatpush1.bf16.msra.mxu0 %v539
    %1008 = vmatprep.subr.bf16.mxu0 0
    %1009 = vmatpush1.bf16.msra.mxu0 0
    %1010 = vmatprep.subr.bf16.mxu0 0
    %1011 = vmatpush1.bf16.msra.mxu0 0
    %1012 = vmatprep.subr.bf16.mxu0 0
    %1013 = vmatpush1.bf16.msra.mxu0 0
    %1014 = vmatprep.subr.bf16.mxu0 0
    %1015 = vmatpush1.bf16.msra.mxu0 0
    %1016 = vmatprep.subr.bf16.mxu0 0
    %1017 = vmatpush1.bf16.msra.mxu0 0
    %1018 = vmatprep.subr.bf16.mxu0 0
    %1019 = vmatpush1.bf16.msra.mxu0 0
    %1020 = vmatprep.subr.bf16.mxu0 0
    %1021 = vmatpush1.bf16.msra.mxu0 0
    %1022 = vmatprep.subr.bf16.mxu0 0
    %1023 = vmatpush1.bf16.msra.mxu0 0
    %1024 = vmatprep.mubr.bf16.mxu0 0
    %1025 = vmatmul.mubr.bf16.gmra.mrb[0].mxu0 %v991
    %v1026 = vpop.f32.mrb[0].mxu0
    %v1027 = vadd.f32 0.0, %v1026
    %v1028 = vpop.f32.mrb[0].mxu0
    %v1029 = vpop.f32.mrb[0].mxu0
    %v1030 = vpop.f32.mrb[0].mxu0
    %1031 = vdwg.mxu0
    %v1033 = vrot.slane %v1027, 1
    %v1035 = vadd.f32 %v460, %v1033
    %v1036 = vxor.u32 %v1035, 2147483648
    %v1037 = vmul.f32 %v1036, 1.442695
    %v1038 = vpow.pop %v1037
    %v1039 = vadd.f32 %v1038, 1.0
    %v1040 = vrcp.pop %v1039
    %v1041 = vmul.f32 1.0, %v1040
    %v1043 = vrot.slane %v1041, 7
    %1045 = vrot.lane.b32.xlu0 %v1043, 64
    %v1046 = vpop.permute.xlu0 %1045
    %v1047 = vadd.f32 %v1027, %v355
    %v1048 = vmul.f32 %v1046, %v1047
    %v1050 = vrot.slane %v1048, 1
    %v1052 = vadd.f32 %v460, %v1050
    %v1053 = vtanh.pop %v1052
    %v1055 = vrot.slane %v1053, 7
    %1057 = vrot.lane.b32.xlu0 %v1055, 64
    %v1058 = vpop.permute.xlu0 %1057
    %1059 = vrot.lane.b32.xlu0 %v1043, 96
    %v1060 = vpop.permute.xlu0 %1059
    %v1061 = vsub.f32 %v990, %v1058
    %v1062 = vmul.f32 %v1060, %v1061
    %v1063 = vadd.f32 %v1058, %v1062
    %v1064 = vsel %vm353, %v1063, 0.0
    %v1066 = vrot.slane %v620, 7
    %v1069 = vrot.slane %v694, 6
    %v1072 = vrot.slane %v768, 5
    %v1075 = vrot.slane %v842, 4
    %v1078 = vrot.slane %v916, 3
    %v1081 = vrot.slane %v990, 2
    %v1084 = vrot.slane %v1064, 1
    %vm1086 = vcmask 1040384
    %v1087 = vsel %vm1086, %v482, %v1066
    %vm1088 = vcmask 1041408
    %v1089 = vsel %vm1088, %v1087, %v1069
    %vm1090 = vcmask 1042432
    %v1091 = vsel %vm1090, %v1089, %v1072
    %vm1092 = vcmask 1043456
    %v1093 = vsel %vm1092, %v1091, %v1075
    %vm1094 = vcmask 1044480
    %v1095 = vsel %vm1094, %v1093, %v1078
    %vm1096 = vcmask 1045504
    %v1097 = vsel %vm1096, %v1095, %v1081
    %vm1098 = vcmask 1046528
    %v1099 = vsel %vm1098, %v1097, %v1084
    %v1100 = vld [vmem:[#allocation8 + $0x5] sm:$0x1]
    %v1101 = vld [vmem:[#allocation8 + $0x6] sm:$0x1]
    %v1102 = vpack.c.bf16 %v1099, %v1099
    %v1103 = vld [vmem:[#allocation7 + $0x80] sm:$0xf]
    %v1104 = vld [vmem:[#allocation7 + $0x84] sm:$0xf]
    %v1105 = vld [vmem:[#allocation7 + $0x88] sm:$0xf]
    %v1106 = vld [vmem:[#allocation7 + $0x8c] sm:$0xf]
    %v1107 = vld [vmem:[#allocation7 + $0x90] sm:$0xf]
    %v1108 = vld [vmem:[#allocation7 + $0x94] sm:$0xf]
    %v1109 = vld [vmem:[#allocation7 + $0x98] sm:$0xf]
    %v1110 = vld [vmem:[#allocation7 + $0x9c] sm:$0xf]
    %v1111 = vld [vmem:[#allocation7 + $0xa0] sm:$0xf]
    %v1112 = vld [vmem:[#allocation7 + $0xa4] sm:$0xf]
    %v1113 = vld [vmem:[#allocation7 + $0xa8] sm:$0xf]
    %v1114 = vld [vmem:[#allocation7 + $0xac] sm:$0xf]
    %v1115 = vld [vmem:[#allocation7 + $0xb0] sm:$0xf]
    %v1116 = vld [vmem:[#allocation7 + $0xb4] sm:$0xf]
    %v1117 = vld [vmem:[#allocation7 + $0xb8] sm:$0xf]
    %v1118 = vld [vmem:[#allocation7 + $0xbc] sm:$0xf]
    %v1119 = vlaneseq
    %v1120 = vshrl.u32 %v1119, 7
    %v1121 = vsub.s32 0, %v1120
    %v1122 = vrot.slane %v1100, %v1121
    %v1139 = vunpack.c.l.b16 %v1103
    %v1140 = vunpack.c.l.b16 %v1104
    %v1141 = vunpack.c.l.b16 %v1105
    %v1142 = vunpack.c.l.b16 %v1106
    %v1143 = vunpack.c.l.b16 %v1107
    %v1144 = vunpack.c.l.b16 %v1108
    %v1145 = vunpack.c.l.b16 %v1109
    %v1146 = vunpack.c.l.b16 %v1110
    %v1147 = vunpack.c.l.b16 %v1111
    %v1148 = vunpack.c.l.b16 %v1112
    %v1149 = vunpack.c.l.b16 %v1113
    %v1150 = vunpack.c.l.b16 %v1114
    %v1151 = vunpack.c.l.b16 %v1115
    %v1152 = vunpack.c.l.b16 %v1116
    %v1153 = vunpack.c.l.b16 %v1117
    %v1154 = vunpack.c.l.b16 %v1118
    %v1155 = vpack.c.b16 %v1140, %v1139
    %v1156 = vpack.c.b16 %v1142, %v1141
    %v1157 = vpack.c.b16 %v1144, %v1143
    %v1158 = vpack.c.b16 %v1146, %v1145
    %v1159 = vpack.c.b16 %v1148, %v1147
    %v1160 = vpack.c.b16 %v1150, %v1149
    %v1161 = vpack.c.b16 %v1152, %v1151
    %v1162 = vpack.c.b16 %v1154, %v1153
    %1171 = vmatprep.subr.bf16.mxu0 0
    %1172 = vmatpush1.bf16.msra.mxu0 %v1155
    %1173 = vmatprep.subr.bf16.mxu0 0
    %1174 = vmatpush1.bf16.msra.mxu0 %v1156
    %1175 = vmatprep.subr.bf16.mxu0 0
    %1176 = vmatpush1.bf16.msra.mxu0 %v1157
    %1177 = vmatprep.subr.bf16.mxu0 0
    %1178 = vmatpush1.bf16.msra.mxu0 %v1158
    %1179 = vmatprep.subr.bf16.mxu0 0
    %1180 = vmatpush1.bf16.msra.mxu0 %v1159
    %1181 = vmatprep.subr.bf16.mxu0 0
    %1182 = vmatpush1.bf16.msra.mxu0 %v1160
    %1183 = vmatprep.subr.bf16.mxu0 0
    %1184 = vmatpush1.bf16.msra.mxu0 %v1161
    %1185 = vmatprep.subr.bf16.mxu0 0
    %1186 = vmatpush1.bf16.msra.mxu0 %v1162
    %1187 = vmatprep.subr.bf16.mxu0 0
    %1188 = vmatpush1.bf16.msra.mxu0 0
    %1189 = vmatprep.subr.bf16.mxu0 0
    %1190 = vmatpush1.bf16.msra.mxu0 0
    %1191 = vmatprep.subr.bf16.mxu0 0
    %1192 = vmatpush1.bf16.msra.mxu0 0
    %1193 = vmatprep.subr.bf16.mxu0 0
    %1194 = vmatpush1.bf16.msra.mxu0 0
    %1195 = vmatprep.subr.bf16.mxu0 0
    %1196 = vmatpush1.bf16.msra.mxu0 0
    %1197 = vmatprep.subr.bf16.mxu0 0
    %1198 = vmatpush1.bf16.msra.mxu0 0
    %1199 = vmatprep.subr.bf16.mxu0 0
    %1200 = vmatpush1.bf16.msra.mxu0 0
    %1201 = vmatprep.subr.bf16.mxu0 0
    %1202 = vmatpush1.bf16.msra.mxu0 0
    %1203 = vmatprep.mubr.bf16.mxu0 0
    %1204 = vmatmul.mubr.bf16.gmra.mrb[0].mxu0 %v1102
    %v1205 = vpop.f32.mrb[0].mxu0
    %v1206 = vadd.f32 %v1122, %v1205
    %v1207 = vpop.f32.mrb[0].mxu0
    %v1208 = vpop.f32.mrb[0].mxu0
    %v1209 = vpop.f32.mrb[0].mxu0
    %1210 = vdwg.mxu0
    %v1211 = vxor.u32 %v1206, 2147483648
    %v1212 = vmul.f32 %v1211, 1.442695
    %v1213 = vpow.pop %v1212
    %v1214 = vadd.f32 %v1213, 1.0
    %v1215 = vrcp.pop %v1214
    %v1216 = vmul.f32 1.0, %v1215
    %1217 = vrot.lane.b32.xlu0 %v1216, 64
    %v1218 = vpop.permute.xlu0 %1217
    %v1219 = vmul.f32 %v1218, %v1101
    %v1220 = vadd.f32 %v1206, %v1219
    %v1221 = vtanh.pop %v1220
    %1222 = vrot.lane.b32.xlu0 %v1221, 64
    %v1223 = vpop.permute.xlu0 %1222
    %1224 = vrot.lane.b32.xlu0 %v1216, 96
    %v1225 = vpop.permute.xlu0 %1224
    %v1226 = vmul.f32 %v1225, %v1223
    %v1227 = vsub.f32 %v1223, %v1226
    %v1228 = vsel %vm353, %v1227, 0.0
    %v1229 = vpack.c.bf16 %v1228, %v1228
    %v1230 = vld [vmem:[#allocation7 + $0xc0] sm:$0xf]
    %v1231 = vld [vmem:[#allocation7 + $0xc4] sm:$0xf]
    %v1232 = vld [vmem:[#allocation7 + $0xc8] sm:$0xf]
    %v1233 = vld [vmem:[#allocation7 + $0xcc] sm:$0xf]
    %v1234 = vld [vmem:[#allocation7 + $0xd0] sm:$0xf]
    %v1235 = vld [vmem:[#allocation7 + $0xd4] sm:$0xf]
    %v1236 = vld [vmem:[#allocation7 + $0xd8] sm:$0xf]
    %v1237 = vld [vmem:[#allocation7 + $0xdc] sm:$0xf]
    %v1238 = vld [vmem:[#allocation7 + $0xe0] sm:$0xf]
    %v1239 = vld [vmem:[#allocation7 + $0xe4] sm:$0xf]
    %v1240 = vld [vmem:[#allocation7 + $0xe8] sm:$0xf]
    %v1241 = vld [vmem:[#allocation7 + $0xec] sm:$0xf]
    %v1242 = vld [vmem:[#allocation7 + $0xf0] sm:$0xf]
    %v1243 = vld [vmem:[#allocation7 + $0xf4] sm:$0xf]
    %v1244 = vld [vmem:[#allocation7 + $0xf8] sm:$0xf]
    %v1245 = vld [vmem:[#allocation7 + $0xfc] sm:$0xf]
    %v1262 = vunpack.c.l.b16 %v1230
    %v1263 = vunpack.c.l.b16 %v1231
    %v1264 = vunpack.c.l.b16 %v1232
    %v1265 = vunpack.c.l.b16 %v1233
    %v1266 = vunpack.c.l.b16 %v1234
    %v1267 = vunpack.c.l.b16 %v1235
    %v1268 = vunpack.c.l.b16 %v1236
    %v1269 = vunpack.c.l.b16 %v1237
    %v1270 = vunpack.c.l.b16 %v1238
    %v1271 = vunpack.c.l.b16 %v1239
    %v1272 = vunpack.c.l.b16 %v1240
    %v1273 = vunpack.c.l.b16 %v1241
    %v1274 = vunpack.c.l.b16 %v1242
    %v1275 = vunpack.c.l.b16 %v1243
    %v1276 = vunpack.c.l.b16 %v1244
    %v1277 = vunpack.c.l.b16 %v1245
    %v1278 = vpack.c.b16 %v1263, %v1262
    %v1279 = vpack.c.b16 %v1265, %v1264
    %v1280 = vpack.c.b16 %v1267, %v1266
    %v1281 = vpack.c.b16 %v1269, %v1268
    %v1282 = vpack.c.b16 %v1271, %v1270
    %v1283 = vpack.c.b16 %v1273, %v1272
    %v1284 = vpack.c.b16 %v1275, %v1274
    %v1285 = vpack.c.b16 %v1277, %v1276
    %1294 = vmatprep.subr.bf16.mxu0 0
    %1295 = vmatpush1.bf16.msra.mxu0 %v1278
    %1296 = vmatprep.subr.bf16.mxu0 0
    %1297 = vmatpush1.bf16.msra.mxu0 %v1279
    %1298 = vmatprep.subr.bf16.mxu0 0
    %1299 = vmatpush1.bf16.msra.mxu0 %v1280
    %1300 = vmatprep.subr.bf16.mxu0 0
    %1301 = vmatpush1.bf16.msra.mxu0 %v1281
    %1302 = vmatprep.subr.bf16.mxu0 0
    %1303 = vmatpush1.bf16.msra.mxu0 %v1282
    %1304 = vmatprep.subr.bf16.mxu0 0
    %1305 = vmatpush1.bf16.msra.mxu0 %v1283
    %1306 = vmatprep.subr.bf16.mxu0 0
    %1307 = vmatpush1.bf16.msra.mxu0 %v1284
    %1308 = vmatprep.subr.bf16.mxu0 0
    %1309 = vmatpush1.bf16.msra.mxu0 %v1285
    %1310 = vmatprep.subr.bf16.mxu0 0
    %1311 = vmatpush1.bf16.msra.mxu0 0
    %1312 = vmatprep.subr.bf16.mxu0 0
    %1313 = vmatpush1.bf16.msra.mxu0 0
    %1314 = vmatprep.subr.bf16.mxu0 0
    %1315 = vmatpush1.bf16.msra.mxu0 0
    %1316 = vmatprep.subr.bf16.mxu0 0
    %1317 = vmatpush1.bf16.msra.mxu0 0
    %1318 = vmatprep.subr.bf16.mxu0 0
    %1319 = vmatpush1.bf16.msra.mxu0 0
    %1320 = vmatprep.subr.bf16.mxu0 0
    %1321 = vmatpush1.bf16.msra.mxu0 0
    %1322 = vmatprep.subr.bf16.mxu0 0
    %1323 = vmatpush1.bf16.msra.mxu0 0
    %1324 = vmatprep.subr.bf16.mxu0 0
    %1325 = vmatpush1.bf16.msra.mxu0 0
    %1326 = vmatprep.mubr.bf16.mxu0 0
    %1327 = vmatmul.mubr.bf16.gmra.mrb[0].mxu0 %v1229
    %v1328 = vpop.f32.mrb[0].mxu0
    %v1329 = vadd.f32 0.0, %v1328
    %v1330 = vpop.f32.mrb[0].mxu0
    %v1331 = vpop.f32.mrb[0].mxu0
    %v1332 = vpop.f32.mrb[0].mxu0
    %1333 = vdwg.mxu0
    %v1335 = vrot.slane %v1329, 7
    %v1337 = vadd.f32 %v1206, %v1335
    %v1338 = vxor.u32 %v1337, 2147483648
    %v1339 = vmul.f32 %v1338, 1.442695
    %v1340 = vpow.pop %v1339
    %v1341 = vadd.f32 %v1340, 1.0
    %v1342 = vrcp.pop %v1341
    %v1343 = vmul.f32 1.0, %v1342
    %v1345 = vrot.slane %v1343, 1
    %1347 = vrot.lane.b32.xlu0 %v1345, 64
    %v1348 = vpop.permute.xlu0 %1347
    %v1349 = vadd.f32 %v1329, %v1101
    %v1350 = vmul.f32 %v1348, %v1349
    %v1352 = vrot.slane %v1350, 7
    %v1354 = vadd.f32 %v1206, %v1352
    %v1355 = vtanh.pop %v1354
    %v1357 = vrot.slane %v1355, 1
    %1359 = vrot.lane.b32.xlu0 %v1357, 64
    %v1360 = vpop.permute.xlu0 %1359
    %1361 = vrot.lane.b32.xlu0 %v1345, 96
    %v1362 = vpop.permute.xlu0 %1361
    %v1363 = vsub.f32 %v1228, %v1360
    %v1364 = vmul.f32 %v1362, %v1363
    %v1365 = vadd.f32 %v1360, %v1364
    %v1366 = vsel %vm353, %v1365, 0.0
    %v1367 = vpack.c.bf16 %v1366, %v1366
    %1368 = vmatprep.subr.bf16.mxu0 0
    %1369 = vmatpush1.bf16.msra.mxu0 %v1278
    %1370 = vmatprep.subr.bf16.mxu0 0
    %1371 = vmatpush1.bf16.msra.mxu0 %v1279
    %1372 = vmatprep.subr.bf16.mxu0 0
    %1373 = vmatpush1.bf16.msra.mxu0 %v1280
    %1374 = vmatprep.subr.bf16.mxu0 0
    %1375 = vmatpush1.bf16.msra.mxu0 %v1281
    %1376 = vmatprep.subr.bf16.mxu0 0
    %1377 = vmatpush1.bf16.msra.mxu0 %v1282
    %1378 = vmatprep.subr.bf16.mxu0 0
    %1379 = vmatpush1.bf16.msra.mxu0 %v1283
    %1380 = vmatprep.subr.bf16.mxu0 0
    %1381 = vmatpush1.bf16.msra.mxu0 %v1284
    %1382 = vmatprep.subr.bf16.mxu0 0
    %1383 = vmatpush1.bf16.msra.mxu0 %v1285
    %1384 = vmatprep.subr.bf16.mxu0 0
    %1385 = vmatpush1.bf16.msra.mxu0 0
    %1386 = vmatprep.subr.bf16.mxu0 0
    %1387 = vmatpush1.bf16.msra.mxu0 0
    %1388 = vmatprep.subr.bf16.mxu0 0
    %1389 = vmatpush1.bf16.msra.mxu0 0
    %1390 = vmatprep.subr.bf16.mxu0 0
    %1391 = vmatpush1.bf16.msra.mxu0 0
    %1392 = vmatprep.subr.bf16.mxu0 0
    %1393 = vmatpush1.bf16.msra.mxu0 0
    %1394 = vmatprep.subr.bf16.mxu0 0
    %1395 = vmatpush1.bf16.msra.mxu0 0
    %1396 = vmatprep.subr.bf16.mxu0 0
    %1397 = vmatpush1.bf16.msra.mxu0 0
    %1398 = vmatprep.subr.bf16.mxu0 0
    %1399 = vmatpush1.bf16.msra.mxu0 0
    %1400 = vmatprep.mubr.bf16.mxu0 0
    %1401 = vmatmul.mubr.bf16.gmra.mrb[0].mxu0 %v1367
    %v1402 = vpop.f32.mrb[0].mxu0
    %v1403 = vadd.f32 0.0, %v1402
    %v1404 = vpop.f32.mrb[0].mxu0
    %v1405 = vpop.f32.mrb[0].mxu0
    %v1406 = vpop.f32.mrb[0].mxu0
    %1407 = vdwg.mxu0
    %v1409 = vrot.slane %v1403, 6
    %v1411 = vadd.f32 %v1206, %v1409
    %v1412 = vxor.u32 %v1411, 2147483648
    %v1413 = vmul.f32 %v1412, 1.442695
    %v1414 = vpow.pop %v1413
    %v1415 = vadd.f32 %v1414, 1.0
    %v1416 = vrcp.pop %v1415
    %v1417 = vmul.f32 1.0, %v1416
    %v1419 = vrot.slane %v1417, 2
    %1421 = vrot.lane.b32.xlu0 %v1419, 64
    %v1422 = vpop.permute.xlu0 %1421
    %v1423 = vadd.f32 %v1403, %v1101
    %v1424 = vmul.f32 %v1422, %v1423
    %v1426 = vrot.slane %v1424, 6
    %v1428 = vadd.f32 %v1206, %v1426
    %v1429 = vtanh.pop %v1428
    %v1431 = vrot.slane %v1429, 2
    %1433 = vrot.lane.b32.xlu0 %v1431, 64
    %v1434 = vpop.permute.xlu0 %1433
    %1435 = vrot.lane.b32.xlu0 %v1419, 96
    %v1436 = vpop.permute.xlu0 %1435
    %v1437 = vsub.f32 %v1366, %v1434
    %v1438 = vmul.f32 %v1436, %v1437
    %v1439 = vadd.f32 %v1434, %v1438
    %v1440 = vsel %vm353, %v1439, 0.0
    %v1441 = vpack.c.bf16 %v1440, %v1440
    %1442 = vmatprep.subr.bf16.mxu0 0
    %1443 = vmatpush1.bf16.msra.mxu0 %v1278
    %1444 = vmatprep.subr.bf16.mxu0 0
    %1445 = vmatpush1.bf16.msra.mxu0 %v1279
    %1446 = vmatprep.subr.bf16.mxu0 0
    %1447 = vmatpush1.bf16.msra.mxu0 %v1280
    %1448 = vmatprep.subr.bf16.mxu0 0
    %1449 = vmatpush1.bf16.msra.mxu0 %v1281
    %1450 = vmatprep.subr.bf16.mxu0 0
    %1451 = vmatpush1.bf16.msra.mxu0 %v1282
    %1452 = vmatprep.subr.bf16.mxu0 0
    %1453 = vmatpush1.bf16.msra.mxu0 %v1283
    %1454 = vmatprep.subr.bf16.mxu0 0
    %1455 = vmatpush1.bf16.msra.mxu0 %v1284
    %1456 = vmatprep.subr.bf16.mxu0 0
    %1457 = vmatpush1.bf16.msra.mxu0 %v1285
    %1458 = vmatprep.subr.bf16.mxu0 0
    %1459 = vmatpush1.bf16.msra.mxu0 0
    %1460 = vmatprep.subr.bf16.mxu0 0
    %1461 = vmatpush1.bf16.msra.mxu0 0
    %1462 = vmatprep.subr.bf16.mxu0 0
    %1463 = vmatpush1.bf16.msra.mxu0 0
    %1464 = vmatprep.subr.bf16.mxu0 0
    %1465 = vmatpush1.bf16.msra.mxu0 0
    %1466 = vmatprep.subr.bf16.mxu0 0
    %1467 = vmatpush1.bf16.msra.mxu0 0
    %1468 = vmatprep.subr.bf16.mxu0 0
    %1469 = vmatpush1.bf16.msra.mxu0 0
    %1470 = vmatprep.subr.bf16.mxu0 0
    %1471 = vmatpush1.bf16.msra.mxu0 0
    %1472 = vmatprep.subr.bf16.mxu0 0
    %1473 = vmatpush1.bf16.msra.mxu0 0
    %1474 = vmatprep.mubr.bf16.mxu0 0
    %1475 = vmatmul.mubr.bf16.gmra.mrb[0].mxu0 %v1441
    %v1476 = vpop.f32.mrb[0].mxu0
    %v1477 = vadd.f32 0.0, %v1476
    %v1478 = vpop.f32.mrb[0].mxu0
    %v1479 = vpop.f32.mrb[0].mxu0
    %v1480 = vpop.f32.mrb[0].mxu0
    %1481 = vdwg.mxu0
    %v1483 = vrot.slane %v1477, 5
    %v1485 = vadd.f32 %v1206, %v1483
    %v1486 = vxor.u32 %v1485, 2147483648
    %v1487 = vmul.f32 %v1486, 1.442695
    %v1488 = vpow.pop %v1487
    %v1489 = vadd.f32 %v1488, 1.0
    %v1490 = vrcp.pop %v1489
    %v1491 = vmul.f32 1.0, %v1490
    %v1493 = vrot.slane %v1491, 3
    %1495 = vrot.lane.b32.xlu0 %v1493, 64
    %v1496 = vpop.permute.xlu0 %1495
    %v1497 = vadd.f32 %v1477, %v1101
    %v1498 = vmul.f32 %v1496, %v1497
    %v1500 = vrot.slane %v1498, 5
    %v1502 = vadd.f32 %v1206, %v1500
    %v1503 = vtanh.pop %v1502
    %v1505 = vrot.slane %v1503, 3
    %1507 = vrot.lane.b32.xlu0 %v1505, 64
    %v1508 = vpop.permute.xlu0 %1507
    %1509 = vrot.lane.b32.xlu0 %v1493, 96
    %v1510 = vpop.permute.xlu0 %1509
    %v1511 = vsub.f32 %v1440, %v1508
    %v1512 = vmul.f32 %v1510, %v1511
    %v1513 = vadd.f32 %v1508, %v1512
    %v1514 = vsel %vm353, %v1513, 0.0
    %v1515 = vpack.c.bf16 %v1514, %v1514
    %1516 = vmatprep.subr.bf16.mxu0 0
    %1517 = vmatpush1.bf16.msra.mxu0 %v1278
    %1518 = vmatprep.subr.bf16.mxu0 0
    %1519 = vmatpush1.bf16.msra.mxu0 %v1279
    %1520 = vmatprep.subr.bf16.mxu0 0
    %1521 = vmatpush1.bf16.msra.mxu0 %v1280
    %1522 = vmatprep.subr.bf16.mxu0 0
    %1523 = vmatpush1.bf16.msra.mxu0 %v1281
    %1524 = vmatprep.subr.bf16.mxu0 0
    %1525 = vmatpush1.bf16.msra.mxu0 %v1282
    %1526 = vmatprep.subr.bf16.mxu0 0
    %1527 = vmatpush1.bf16.msra.mxu0 %v1283
    %1528 = vmatprep.subr.bf16.mxu0 0
    %1529 = vmatpush1.bf16.msra.mxu0 %v1284
    %1530 = vmatprep.subr.bf16.mxu0 0
    %1531 = vmatpush1.bf16.msra.mxu0 %v1285
    %1532 = vmatprep.subr.bf16.mxu0 0
    %1533 = vmatpush1.bf16.msra.mxu0 0
    %1534 = vmatprep.subr.bf16.mxu0 0
    %1535 = vmatpush1.bf16.msra.mxu0 0
    %1536 = vmatprep.subr.bf16.mxu0 0
    %1537 = vmatpush1.bf16.msra.mxu0 0
    %1538 = vmatprep.subr.bf16.mxu0 0
    %1539 = vmatpush1.bf16.msra.mxu0 0
    %1540 = vmatprep.subr.bf16.mxu0 0
    %1541 = vmatpush1.bf16.msra.mxu0 0
    %1542 = vmatprep.subr.bf16.mxu0 0
    %1543 = vmatpush1.bf16.msra.mxu0 0
    %1544 = vmatprep.subr.bf16.mxu0 0
    %1545 = vmatpush1.bf16.msra.mxu0 0
    %1546 = vmatprep.subr.bf16.mxu0 0
    %1547 = vmatpush1.bf16.msra.mxu0 0
    %1548 = vmatprep.mubr.bf16.mxu0 0
    %1549 = vmatmul.mubr.bf16.gmra.mrb[0].mxu0 %v1515
    %v1550 = vpop.f32.mrb[0].mxu0
    %v1551 = vadd.f32 0.0, %v1550
    %v1552 = vpop.f32.mrb[0].mxu0
    %v1553 = vpop.f32.mrb[0].mxu0
    %v1554 = vpop.f32.mrb[0].mxu0
    %1555 = vdwg.mxu0
    %v1557 = vrot.slane %v1551, 4
    %v1559 = vadd.f32 %v1206, %v1557
    %v1560 = vxor.u32 %v1559, 2147483648
    %v1561 = vmul.f32 %v1560, 1.442695
    %v1562 = vpow.pop %v1561
    %v1563 = vadd.f32 %v1562, 1.0
    %v1564 = vrcp.pop %v1563
    %v1565 = vmul.f32 1.0, %v1564
    %v1567 = vrot.slane %v1565, 4
    %1569 = vrot.lane.b32.xlu0 %v1567, 64
    %v1570 = vpop.permute.xlu0 %1569
    %v1571 = vadd.f32 %v1551, %v1101
    %v1572 = vmul.f32 %v1570, %v1571
    %v1574 = vrot.slane %v1572, 4
    %v1576 = vadd.f32 %v1206, %v1574
    %v1577 = vtanh.pop %v1576
    %v1579 = vrot.slane %v1577, 4
    %1581 = vrot.lane.b32.xlu0 %v1579, 64
    %v1582 = vpop.permute.xlu0 %1581
    %1583 = vrot.lane.b32.xlu0 %v1567, 96
    %v1584 = vpop.permute.xlu0 %1583
    %v1585 = vsub.f32 %v1514, %v1582
    %v1586 = vmul.f32 %v1584, %v1585
    %v1587 = vadd.f32 %v1582, %v1586
    %v1588 = vsel %vm353, %v1587, 0.0
    %v1589 = vpack.c.bf16 %v1588, %v1588
    %1590 = vmatprep.subr.bf16.mxu0 0
    %1591 = vmatpush1.bf16.msra.mxu0 %v1278
    %1592 = vmatprep.subr.bf16.mxu0 0
    %1593 = vmatpush1.bf16.msra.mxu0 %v1279
    %1594 = vmatprep.subr.bf16.mxu0 0
    %1595 = vmatpush1.bf16.msra.mxu0 %v1280
    %1596 = vmatprep.subr.bf16.mxu0 0
    %1597 = vmatpush1.bf16.msra.mxu0 %v1281
    %1598 = vmatprep.subr.bf16.mxu0 0
    %1599 = vmatpush1.bf16.msra.mxu0 %v1282
    %1600 = vmatprep.subr.bf16.mxu0 0
    %1601 = vmatpush1.bf16.msra.mxu0 %v1283
    %1602 = vmatprep.subr.bf16.mxu0 0
    %1603 = vmatpush1.bf16.msra.mxu0 %v1284
    %1604 = vmatprep.subr.bf16.mxu0 0
    %1605 = vmatpush1.bf16.msra.mxu0 %v1285
    %1606 = vmatprep.subr.bf16.mxu0 0
    %1607 = vmatpush1.bf16.msra.mxu0 0
    %1608 = vmatprep.subr.bf16.mxu0 0
    %1609 = vmatpush1.bf16.msra.mxu0 0
    %1610 = vmatprep.subr.bf16.mxu0 0
    %1611 = vmatpush1.bf16.msra.mxu0 0
    %1612 = vmatprep.subr.bf16.mxu0 0
    %1613 = vmatpush1.bf16.msra.mxu0 0
    %1614 = vmatprep.subr.bf16.mxu0 0
    %1615 = vmatpush1.bf16.msra.mxu0 0
    %1616 = vmatprep.subr.bf16.mxu0 0
    %1617 = vmatpush1.bf16.msra.mxu0 0
    %1618 = vmatprep.subr.bf16.mxu0 0
    %1619 = vmatpush1.bf16.msra.mxu0 0
    %1620 = vmatprep.subr.bf16.mxu0 0
    %1621 = vmatpush1.bf16.msra.mxu0 0
    %1622 = vmatprep.mubr.bf16.mxu0 0
    %1623 = vmatmul.mubr.bf16.gmra.mrb[0].mxu0 %v1589
    %v1624 = vpop.f32.mrb[0].mxu0
    %v1625 = vadd.f32 0.0, %v1624
    %v1626 = vpop.f32.mrb[0].mxu0
    %v1627 = vpop.f32.mrb[0].mxu0
    %v1628 = vpop.f32.mrb[0].mxu0
    %1629 = vdwg.mxu0
    %v1631 = vrot.slane %v1625, 3
    %v1633 = vadd.f32 %v1206, %v1631
    %v1634 = vxor.u32 %v1633, 2147483648
    %v1635 = vmul.f32 %v1634, 1.442695
    %v1636 = vpow.pop %v1635
    %v1637 = vadd.f32 %v1636, 1.0
    %v1638 = vrcp.pop %v1637
    %v1639 = vmul.f32 1.0, %v1638
    %v1641 = vrot.slane %v1639, 5
    %1643 = vrot.lane.b32.xlu0 %v1641, 64
    %v1644 = vpop.permute.xlu0 %1643
    %v1645 = vadd.f32 %v1625, %v1101
    %v1646 = vmul.f32 %v1644, %v1645
    %v1648 = vrot.slane %v1646, 3
    %v1650 = vadd.f32 %v1206, %v1648
    %v1651 = vtanh.pop %v1650
    %v1653 = vrot.slane %v1651, 5
    %1655 = vrot.lane.b32.xlu0 %v1653, 64
    %v1656 = vpop.permute.xlu0 %1655
    %1657 = vrot.lane.b32.xlu0 %v1641, 96
    %v1658 = vpop.permute.xlu0 %1657
    %v1659 = vsub.f32 %v1588, %v1656
    %v1660 = vmul.f32 %v1658, %v1659
    %v1661 = vadd.f32 %v1656, %v1660
    %v1662 = vsel %vm353, %v1661, 0.0
    %v1663 = vpack.c.bf16 %v1662, %v1662
    %1664 = vmatprep.subr.bf16.mxu0 0
    %1665 = vmatpush1.bf16.msra.mxu0 %v1278
    %1666 = vmatprep.subr.bf16.mxu0 0
    %1667 = vmatpush1.bf16.msra.mxu0 %v1279
    %1668 = vmatprep.subr.bf16.mxu0 0
    %1669 = vmatpush1.bf16.msra.mxu0 %v1280
    %1670 = vmatprep.subr.bf16.mxu0 0
    %1671 = vmatpush1.bf16.msra.mxu0 %v1281
    %1672 = vmatprep.subr.bf16.mxu0 0
    %1673 = vmatpush1.bf16.msra.mxu0 %v1282
    %1674 = vmatprep.subr.bf16.mxu0 0
    %1675 = vmatpush1.bf16.msra.mxu0 %v1283
    %1676 = vmatprep.subr.bf16.mxu0 0
    %1677 = vmatpush1.bf16.msra.mxu0 %v1284
    %1678 = vmatprep.subr.bf16.mxu0 0
    %1679 = vmatpush1.bf16.msra.mxu0 %v1285
    %1680 = vmatprep.subr.bf16.mxu0 0
    %1681 = vmatpush1.bf16.msra.mxu0 0
    %1682 = vmatprep.subr.bf16.mxu0 0
    %1683 = vmatpush1.bf16.msra.mxu0 0
    %1684 = vmatprep.subr.bf16.mxu0 0
    %1685 = vmatpush1.bf16.msra.mxu0 0
    %1686 = vmatprep.subr.bf16.mxu0 0
    %1687 = vmatpush1.bf16.msra.mxu0 0
    %1688 = vmatprep.subr.bf16.mxu0 0
    %1689 = vmatpush1.bf16.msra.mxu0 0
    %1690 = vmatprep.subr.bf16.mxu0 0
    %1691 = vmatpush1.bf16.msra.mxu0 0
    %1692 = vmatprep.subr.bf16.mxu0 0
    %1693 = vmatpush1.bf16.msra.mxu0 0
    %1694 = vmatprep.subr.bf16.mxu0 0
    %1695 = vmatpush1.bf16.msra.mxu0 0
    %1696 = vmatprep.mubr.bf16.mxu0 0
    %1697 = vmatmul.mubr.bf16.gmra.mrb[0].mxu0 %v1663
    %v1698 = vpop.f32.mrb[0].mxu0
    %v1699 = vadd.f32 0.0, %v1698
    %v1700 = vpop.f32.mrb[0].mxu0
    %v1701 = vpop.f32.mrb[0].mxu0
    %v1702 = vpop.f32.mrb[0].mxu0
    %1703 = vdwg.mxu0
    %v1705 = vrot.slane %v1699, 2
    %v1707 = vadd.f32 %v1206, %v1705
    %v1708 = vxor.u32 %v1707, 2147483648
    %v1709 = vmul.f32 %v1708, 1.442695
    %v1710 = vpow.pop %v1709
    %v1711 = vadd.f32 %v1710, 1.0
    %v1712 = vrcp.pop %v1711
    %v1713 = vmul.f32 1.0, %v1712
    %v1715 = vrot.slane %v1713, 6
    %1717 = vrot.lane.b32.xlu0 %v1715, 64
    %v1718 = vpop.permute.xlu0 %1717
    %v1719 = vadd.f32 %v1699, %v1101
    %v1720 = vmul.f32 %v1718, %v1719
    %v1722 = vrot.slane %v1720, 2
    %v1724 = vadd.f32 %v1206, %v1722
    %v1725 = vtanh.pop %v1724
    %v1727 = vrot.slane %v1725, 6
    %1729 = vrot.lane.b32.xlu0 %v1727, 64
    %v1730 = vpop.permute.xlu0 %1729
    %1731 = vrot.lane.b32.xlu0 %v1715, 96
    %v1732 = vpop.permute.xlu0 %1731
    %v1733 = vsub.f32 %v1662, %v1730
    %v1734 = vmul.f32 %v1732, %v1733
    %v1735 = vadd.f32 %v1730, %v1734
    %v1736 = vsel %vm353, %v1735, 0.0
    %v1737 = vpack.c.bf16 %v1736, %v1736
    %1738 = vmatprep.subr.bf16.mxu0 0
    %1739 = vmatpush1.bf16.msra.mxu0 %v1278
    %1740 = vmatprep.subr.bf16.mxu0 0
    %1741 = vmatpush1.bf16.msra.mxu0 %v1279
    %1742 = vmatprep.subr.bf16.mxu0 0
    %1743 = vmatpush1.bf16.msra.mxu0 %v1280
    %1744 = vmatprep.subr.bf16.mxu0 0
    %1745 = vmatpush1.bf16.msra.mxu0 %v1281
    %1746 = vmatprep.subr.bf16.mxu0 0
    %1747 = vmatpush1.bf16.msra.mxu0 %v1282
    %1748 = vmatprep.subr.bf16.mxu0 0
    %1749 = vmatpush1.bf16.msra.mxu0 %v1283
    %1750 = vmatprep.subr.bf16.mxu0 0
    %1751 = vmatpush1.bf16.msra.mxu0 %v1284
    %1752 = vmatprep.subr.bf16.mxu0 0
    %1753 = vmatpush1.bf16.msra.mxu0 %v1285
    %1754 = vmatprep.subr.bf16.mxu0 0
    %1755 = vmatpush1.bf16.msra.mxu0 0
    %1756 = vmatprep.subr.bf16.mxu0 0
    %1757 = vmatpush1.bf16.msra.mxu0 0
    %1758 = vmatprep.subr.bf16.mxu0 0
    %1759 = vmatpush1.bf16.msra.mxu0 0
    %1760 = vmatprep.subr.bf16.mxu0 0
    %1761 = vmatpush1.bf16.msra.mxu0 0
    %1762 = vmatprep.subr.bf16.mxu0 0
    %1763 = vmatpush1.bf16.msra.mxu0 0
    %1764 = vmatprep.subr.bf16.mxu0 0
    %1765 = vmatpush1.bf16.msra.mxu0 0
    %1766 = vmatprep.subr.bf16.mxu0 0
    %1767 = vmatpush1.bf16.msra.mxu0 0
    %1768 = vmatprep.subr.bf16.mxu0 0
    %1769 = vmatpush1.bf16.msra.mxu0 0
    %1770 = vmatprep.mubr.bf16.mxu0 0
    %1771 = vmatmul.mubr.bf16.gmra.mrb[0].mxu0 %v1737
    %v1772 = vpop.f32.mrb[0].mxu0
    %v1773 = vadd.f32 0.0, %v1772
    %v1774 = vpop.f32.mrb[0].mxu0
    %v1775 = vpop.f32.mrb[0].mxu0
    %v1776 = vpop.f32.mrb[0].mxu0
    %1777 = vdwg.mxu0
    %v1779 = vrot.slane %v1773, 1
    %v1781 = vadd.f32 %v1206, %v1779
    %v1782 = vxor.u32 %v1781, 2147483648
    %v1783 = vmul.f32 %v1782, 1.442695
    %v1784 = vpow.pop %v1783
    %v1785 = vadd.f32 %v1784, 1.0
    %v1786 = vrcp.pop %v1785
    %v1787 = vmul.f32 1.0, %v1786
    %v1789 = vrot.slane %v1787, 7
    %1791 = vrot.lane.b32.xlu0 %v1789, 64
    %v1792 = vpop.permute.xlu0 %1791
    %v1793 = vadd.f32 %v1773, %v1101
    %v1794 = vmul.f32 %v1792, %v1793
    %v1796 = vrot.slane %v1794, 1
    %v1798 = vadd.f32 %v1206, %v1796
    %v1799 = vtanh.pop %v1798
    %v1801 = vrot.slane %v1799, 7
    %1803 = vrot.lane.b32.xlu0 %v1801, 64
    %v1804 = vpop.permute.xlu0 %1803
    %1805 = vrot.lane.b32.xlu0 %v1789, 96
    %v1806 = vpop.permute.xlu0 %1805
    %v1807 = vsub.f32 %v1736, %v1804
    %v1808 = vmul.f32 %v1806, %v1807
    %v1809 = vadd.f32 %v1804, %v1808
    %v1810 = vsel %vm353, %v1809, 0.0
    %v1812 = vrot.slane %v1366, 7
    %v1815 = vrot.slane %v1440, 6
    %v1818 = vrot.slane %v1514, 5
    %v1821 = vrot.slane %v1588, 4
    %v1824 = vrot.slane %v1662, 3
    %v1827 = vrot.slane %v1736, 2
    %v1830 = vrot.slane %v1810, 1
    %v1832 = vsel %vm1086, %v1228, %v1812
    %v1833 = vsel %vm1088, %v1832, %v1815
    %v1834 = vsel %vm1090, %v1833, %v1818
    %v1835 = vsel %vm1092, %v1834, %v1821
    %v1836 = vsel %vm1094, %v1835, %v1824
    %v1837 = vsel %vm1096, %v1836, %v1827
    %v1838 = vsel %vm1098, %v1837, %v1830
    %v1839 = vld [vmem:[#allocation8 + $0x7] sm:$0x1]
    %v1840 = vld [vmem:[#allocation8 + $0x8] sm:$0x1]
    %v1841 = vpack.c.bf16 %v1838, %v1838
    %v1842 = vld [vmem:[#allocation7 + $0x100] sm:$0xf]
    %v1843 = vld [vmem:[#allocation7 + $0x104] sm:$0xf]
    %v1844 = vld [vmem:[#allocation7 + $0x108] sm:$0xf]
    %v1845 = vld [vmem:[#allocation7 + $0x10c] sm:$0xf]
    %v1846 = vld [vmem:[#allocation7 + $0x110] sm:$0xf]
    %v1847 = vld [vmem:[#allocation7 + $0x114] sm:$0xf]
    %v1848 = vld [vmem:[#allocation7 + $0x118] sm:$0xf]
    %v1849 = vld [vmem:[#allocation7 + $0x11c] sm:$0xf]
    %v1850 = vld [vmem:[#allocation7 + $0x120] sm:$0xf]
    %v1851 = vld [vmem:[#allocation7 + $0x124] sm:$0xf]
    %v1852 = vld [vmem:[#allocation7 + $0x128] sm:$0xf]
    %v1853 = vld [vmem:[#allocation7 + $0x12c] sm:$0xf]
    %v1854 = vld [vmem:[#allocation7 + $0x130] sm:$0xf]
    %v1855 = vld [vmem:[#allocation7 + $0x134] sm:$0xf]
    %v1856 = vld [vmem:[#allocation7 + $0x138] sm:$0xf]
    %v1857 = vld [vmem:[#allocation7 + $0x13c] sm:$0xf]
    %v1858 = vlaneseq
    %v1859 = vshrl.u32 %v1858, 7
    %v1860 = vsub.s32 0, %v1859
    %v1861 = vrot.slane %v1839, %v1860
    %v1878 = vunpack.c.l.b16 %v1842
    %v1879 = vunpack.c.l.b16 %v1843
    %v1880 = vunpack.c.l.b16 %v1844
    %v1881 = vunpack.c.l.b16 %v1845
    %v1882 = vunpack.c.l.b16 %v1846
    %v1883 = vunpack.c.l.b16 %v1847
    %v1884 = vunpack.c.l.b16 %v1848
    %v1885 = vunpack.c.l.b16 %v1849
    %v1886 = vunpack.c.l.b16 %v1850
    %v1887 = vunpack.c.l.b16 %v1851
    %v1888 = vunpack.c.l.b16 %v1852
    %v1889 = vunpack.c.l.b16 %v1853
    %v1890 = vunpack.c.l.b16 %v1854
    %v1891 = vunpack.c.l.b16 %v1855
    %v1892 = vunpack.c.l.b16 %v1856
    %v1893 = vunpack.c.l.b16 %v1857
    %v1894 = vpack.c.b16 %v1879, %v1878
    %v1895 = vpack.c.b16 %v1881, %v1880
    %v1896 = vpack.c.b16 %v1883, %v1882
    %v1897 = vpack.c.b16 %v1885, %v1884
    %v1898 = vpack.c.b16 %v1887, %v1886
    %v1899 = vpack.c.b16 %v1889, %v1888
    %v1900 = vpack.c.b16 %v1891, %v1890
    %v1901 = vpack.c.b16 %v1893, %v1892
    %1910 = vmatprep.subr.bf16.mxu0 0
    %1911 = vmatpush1.bf16.msra.mxu0 %v1894
    %1912 = vmatprep.subr.bf16.mxu0 0
    %1913 = vmatpush1.bf16.msra.mxu0 %v1895
    %1914 = vmatprep.subr.bf16.mxu0 0
    %1915 = vmatpush1.bf16.msra.mxu0 %v1896
    %1916 = vmatprep.subr.bf16.mxu0 0
    %1917 = vmatpush1.bf16.msra.mxu0 %v1897
    %1918 = vmatprep.subr.bf16.mxu0 0
    %1919 = vmatpush1.bf16.msra.mxu0 %v1898
    %1920 = vmatprep.subr.bf16.mxu0 0
    %1921 = vmatpush1.bf16.msra.mxu0 %v1899
    %1922 = vmatprep.subr.bf16.mxu0 0
    %1923 = vmatpush1.bf16.msra.mxu0 %v1900
    %1924 = vmatprep.subr.bf16.mxu0 0
    %1925 = vmatpush1.bf16.msra.mxu0 %v1901
    %1926 = vmatprep.subr.bf16.mxu0 0
    %1927 = vmatpush1.bf16.msra.mxu0 0
    %1928 = vmatprep.subr.bf16.mxu0 0
    %1929 = vmatpush1.bf16.msra.mxu0 0
    %1930 = vmatprep.subr.bf16.mxu0 0
    %1931 = vmatpush1.bf16.msra.mxu0 0
    %1932 = vmatprep.subr.bf16.mxu0 0
    %1933 = vmatpush1.bf16.msra.mxu0 0
    %1934 = vmatprep.subr.bf16.mxu0 0
    %1935 = vmatpush1.bf16.msra.mxu0 0
    %1936 = vmatprep.subr.bf16.mxu0 0
    %1937 = vmatpush1.bf16.msra.mxu0 0
    %1938 = vmatprep.subr.bf16.mxu0 0
    %1939 = vmatpush1.bf16.msra.mxu0 0
    %1940 = vmatprep.subr.bf16.mxu0 0
    %1941 = vmatpush1.bf16.msra.mxu0 0
    %1942 = vmatprep.mubr.bf16.mxu0 0
    %1943 = vmatmul.mubr.bf16.gmra.mrb[0].mxu0 %v1841
    %v1944 = vpop.f32.mrb[0].mxu0
    %v1945 = vadd.f32 %v1861, %v1944
    %v1946 = vpop.f32.mrb[0].mxu0
    %v1947 = vpop.f32.mrb[0].mxu0
    %v1948 = vpop.f32.mrb[0].mxu0
    %1949 = vdwg.mxu0
    %v1950 = vxor.u32 %v1945, 2147483648
    %v1951 = vmul.f32 %v1950, 1.442695
    %v1952 = vpow.pop %v1951
    %v1953 = vadd.f32 %v1952, 1.0
    %v1954 = vrcp.pop %v1953
    %v1955 = vmul.f32 1.0, %v1954
    %1956 = vrot.lane.b32.xlu0 %v1955, 64
    %v1957 = vpop.permute.xlu0 %1956
    %v1958 = vmul.f32 %v1957, %v1840
    %v1959 = vadd.f32 %v1945, %v1958
    %v1960 = vtanh.pop %v1959
    %1961 = vrot.lane.b32.xlu0 %v1960, 64
    %v1962 = vpop.permute.xlu0 %1961
    %1963 = vrot.lane.b32.xlu0 %v1955, 96
    %v1964 = vpop.permute.xlu0 %1963
    %v1965 = vmul.f32 %v1964, %v1962
    %v1966 = vsub.f32 %v1962, %v1965
    %v1967 = vsel %vm353, %v1966, 0.0
    %v1968 = vpack.c.bf16 %v1967, %v1967
    %v1969 = vld [vmem:[#allocation7 + $0x140] sm:$0xf]
    %v1970 = vld [vmem:[#allocation7 + $0x144] sm:$0xf]
    %v1971 = vld [vmem:[#allocation7 + $0x148] sm:$0xf]
    %v1972 = vld [vmem:[#allocation7 + $0x14c] sm:$0xf]
    %v1973 = vld [vmem:[#allocation7 + $0x150] sm:$0xf]
    %v1974 = vld [vmem:[#allocation7 + $0x154] sm:$0xf]
    %v1975 = vld [vmem:[#allocation7 + $0x158] sm:$0xf]
    %v1976 = vld [vmem:[#allocation7 + $0x15c] sm:$0xf]
    %v1977 = vld [vmem:[#allocation7 + $0x160] sm:$0xf]
    %v1978 = vld [vmem:[#allocation7 + $0x164] sm:$0xf]
    %v1979 = vld [vmem:[#allocation7 + $0x168] sm:$0xf]
    %v1980 = vld [vmem:[#allocation7 + $0x16c] sm:$0xf]
    %v1981 = vld [vmem:[#allocation7 + $0x170] sm:$0xf]
    %v1982 = vld [vmem:[#allocation7 + $0x174] sm:$0xf]
    %v1983 = vld [vmem:[#allocation7 + $0x178] sm:$0xf]
    %v1984 = vld [vmem:[#allocation7 + $0x17c] sm:$0xf]
    %v2001 = vunpack.c.l.b16 %v1969
    %v2002 = vunpack.c.l.b16 %v1970
    %v2003 = vunpack.c.l.b16 %v1971
    %v2004 = vunpack.c.l.b16 %v1972
    %v2005 = vunpack.c.l.b16 %v1973
    %v2006 = vunpack.c.l.b16 %v1974
    %v2007 = vunpack.c.l.b16 %v1975
    %v2008 = vunpack.c.l.b16 %v1976
    %v2009 = vunpack.c.l.b16 %v1977
    %v2010 = vunpack.c.l.b16 %v1978
    %v2011 = vunpack.c.l.b16 %v1979
    %v2012 = vunpack.c.l.b16 %v1980
    %v2013 = vunpack.c.l.b16 %v1981
    %v2014 = vunpack.c.l.b16 %v1982
    %v2015 = vunpack.c.l.b16 %v1983
    %v2016 = vunpack.c.l.b16 %v1984
    %v2017 = vpack.c.b16 %v2002, %v2001
    %v2018 = vpack.c.b16 %v2004, %v2003
    %v2019 = vpack.c.b16 %v2006, %v2005
    %v2020 = vpack.c.b16 %v2008, %v2007
    %v2021 = vpack.c.b16 %v2010, %v2009
    %v2022 = vpack.c.b16 %v2012, %v2011
    %v2023 = vpack.c.b16 %v2014, %v2013
    %v2024 = vpack.c.b16 %v2016, %v2015
    %2033 = vmatprep.subr.bf16.mxu0 0
    %2034 = vmatpush1.bf16.msra.mxu0 %v2017
    %2035 = vmatprep.subr.bf16.mxu0 0
    %2036 = vmatpush1.bf16.msra.mxu0 %v2018
    %2037 = vmatprep.subr.bf16.mxu0 0
    %2038 = vmatpush1.bf16.msra.mxu0 %v2019
    %2039 = vmatprep.subr.bf16.mxu0 0
    %2040 = vmatpush1.bf16.msra.mxu0 %v2020
    %2041 = vmatprep.subr.bf16.mxu0 0
    %2042 = vmatpush1.bf16.msra.mxu0 %v2021
    %2043 = vmatprep.subr.bf16.mxu0 0
    %2044 = vmatpush1.bf16.msra.mxu0 %v2022
    %2045 = vmatprep.subr.bf16.mxu0 0
    %2046 = vmatpush1.bf16.msra.mxu0 %v2023
    %2047 = vmatprep.subr.bf16.mxu0 0
    %2048 = vmatpush1.bf16.msra.mxu0 %v2024
    %2049 = vmatprep.subr.bf16.mxu0 0
    %2050 = vmatpush1.bf16.msra.mxu0 0
    %2051 = vmatprep.subr.bf16.mxu0 0
    %2052 = vmatpush1.bf16.msra.mxu0 0
    %2053 = vmatprep.subr.bf16.mxu0 0
    %2054 = vmatpush1.bf16.msra.mxu0 0
    %2055 = vmatprep.subr.bf16.mxu0 0
    %2056 = vmatpush1.bf16.msra.mxu0 0
    %2057 = vmatprep.subr.bf16.mxu0 0
    %2058 = vmatpush1.bf16.msra.mxu0 0
    %2059 = vmatprep.subr.bf16.mxu0 0
    %2060 = vmatpush1.bf16.msra.mxu0 0
    %2061 = vmatprep.subr.bf16.mxu0 0
    %2062 = vmatpush1.bf16.msra.mxu0 0
    %2063 = vmatprep.subr.bf16.mxu0 0
    %2064 = vmatpush1.bf16.msra.mxu0 0
    %2065 = vmatprep.mubr.bf16.mxu0 0
    %2066 = vmatmul.mubr.bf16.gmra.mrb[0].mxu0 %v1968
    %v2067 = vpop.f32.mrb[0].mxu0
    %v2068 = vadd.f32 0.0, %v2067
    %v2069 = vpop.f32.mrb[0].mxu0
    %v2070 = vpop.f32.mrb[0].mxu0
    %v2071 = vpop.f32.mrb[0].mxu0
    %2072 = vdwg.mxu0
    %v2074 = vrot.slane %v2068, 7
    %v2076 = vadd.f32 %v1945, %v2074
    %v2077 = vxor.u32 %v2076, 2147483648
    %v2078 = vmul.f32 %v2077, 1.442695
    %v2079 = vpow.pop %v2078
    %v2080 = vadd.f32 %v2079, 1.0
    %v2081 = vrcp.pop %v2080
    %v2082 = vmul.f32 1.0, %v2081
    %v2084 = vrot.slane %v2082, 1
    %2086 = vrot.lane.b32.xlu0 %v2084, 64
    %v2087 = vpop.permute.xlu0 %2086
    %v2088 = vadd.f32 %v2068, %v1840
    %v2089 = vmul.f32 %v2087, %v2088
    %v2091 = vrot.slane %v2089, 7
    %v2093 = vadd.f32 %v1945, %v2091
    %v2094 = vtanh.pop %v2093
    %v2096 = vrot.slane %v2094, 1
    %2098 = vrot.lane.b32.xlu0 %v2096, 64
    %v2099 = vpop.permute.xlu0 %2098
    %2100 = vrot.lane.b32.xlu0 %v2084, 96
    %v2101 = vpop.permute.xlu0 %2100
    %v2102 = vsub.f32 %v1967, %v2099
    %v2103 = vmul.f32 %v2101, %v2102
    %v2104 = vadd.f32 %v2099, %v2103
    %v2105 = vsel %vm353, %v2104, 0.0
    %v2106 = vpack.c.bf16 %v2105, %v2105
    %2107 = vmatprep.subr.bf16.mxu0 0
    %2108 = vmatpush1.bf16.msra.mxu0 %v2017
    %2109 = vmatprep.subr.bf16.mxu0 0
    %2110 = vmatpush1.bf16.msra.mxu0 %v2018
    %2111 = vmatprep.subr.bf16.mxu0 0
    %2112 = vmatpush1.bf16.msra.mxu0 %v2019
    %2113 = vmatprep.subr.bf16.mxu0 0
    %2114 = vmatpush1.bf16.msra.mxu0 %v2020
    %2115 = vmatprep.subr.bf16.mxu0 0
    %2116 = vmatpush1.bf16.msra.mxu0 %v2021
    %2117 = vmatprep.subr.bf16.mxu0 0
    %2118 = vmatpush1.bf16.msra.mxu0 %v2022
    %2119 = vmatprep.subr.bf16.mxu0 0
    %2120 = vmatpush1.bf16.msra.mxu0 %v2023
    %2121 = vmatprep.subr.bf16.mxu0 0
    %2122 = vmatpush1.bf16.msra.mxu0 %v2024
    %2123 = vmatprep.subr.bf16.mxu0 0
    %2124 = vmatpush1.bf16.msra.mxu0 0
    %2125 = vmatprep.subr.bf16.mxu0 0
    %2126 = vmatpush1.bf16.msra.mxu0 0
    %2127 = vmatprep.subr.bf16.mxu0 0
    %2128 = vmatpush1.bf16.msra.mxu0 0
    %2129 = vmatprep.subr.bf16.mxu0 0
    %2130 = vmatpush1.bf16.msra.mxu0 0
    %2131 = vmatprep.subr.bf16.mxu0 0
    %2132 = vmatpush1.bf16.msra.mxu0 0
    %2133 = vmatprep.subr.bf16.mxu0 0
    %2134 = vmatpush1.bf16.msra.mxu0 0
    %2135 = vmatprep.subr.bf16.mxu0 0
    %2136 = vmatpush1.bf16.msra.mxu0 0
    %2137 = vmatprep.subr.bf16.mxu0 0
    %2138 = vmatpush1.bf16.msra.mxu0 0
    %2139 = vmatprep.mubr.bf16.mxu0 0
    %2140 = vmatmul.mubr.bf16.gmra.mrb[0].mxu0 %v2106
    %v2141 = vpop.f32.mrb[0].mxu0
    %v2142 = vadd.f32 0.0, %v2141
    %v2143 = vpop.f32.mrb[0].mxu0
    %v2144 = vpop.f32.mrb[0].mxu0
    %v2145 = vpop.f32.mrb[0].mxu0
    %2146 = vdwg.mxu0
    %v2148 = vrot.slane %v2142, 6
    %v2150 = vadd.f32 %v1945, %v2148
    %v2151 = vxor.u32 %v2150, 2147483648
    %v2152 = vmul.f32 %v2151, 1.442695
    %v2153 = vpow.pop %v2152
    %v2154 = vadd.f32 %v2153, 1.0
    %v2155 = vrcp.pop %v2154
    %v2156 = vmul.f32 1.0, %v2155
    %v2158 = vrot.slane %v2156, 2
    %2160 = vrot.lane.b32.xlu0 %v2158, 64
    %v2161 = vpop.permute.xlu0 %2160
    %v2162 = vadd.f32 %v2142, %v1840
    %v2163 = vmul.f32 %v2161, %v2162
    %v2165 = vrot.slane %v2163, 6
    %v2167 = vadd.f32 %v1945, %v2165
    %v2168 = vtanh.pop %v2167
    %v2170 = vrot.slane %v2168, 2
    %2172 = vrot.lane.b32.xlu0 %v2170, 64
    %v2173 = vpop.permute.xlu0 %2172
    %2174 = vrot.lane.b32.xlu0 %v2158, 96
    %v2175 = vpop.permute.xlu0 %2174
    %v2176 = vsub.f32 %v2105, %v2173
    %v2177 = vmul.f32 %v2175, %v2176
    %v2178 = vadd.f32 %v2173, %v2177
    %v2179 = vsel %vm353, %v2178, 0.0
    %v2180 = vpack.c.bf16 %v2179, %v2179
    %2181 = vmatprep.subr.bf16.mxu0 0
    %2182 = vmatpush1.bf16.msra.mxu0 %v2017
    %2183 = vmatprep.subr.bf16.mxu0 0
    %2184 = vmatpush1.bf16.msra.mxu0 %v2018
    %2185 = vmatprep.subr.bf16.mxu0 0
    %2186 = vmatpush1.bf16.msra.mxu0 %v2019
    %2187 = vmatprep.subr.bf16.mxu0 0
    %2188 = vmatpush1.bf16.msra.mxu0 %v2020
    %2189 = vmatprep.subr.bf16.mxu0 0
    %2190 = vmatpush1.bf16.msra.mxu0 %v2021
    %2191 = vmatprep.subr.bf16.mxu0 0
    %2192 = vmatpush1.bf16.msra.mxu0 %v2022
    %2193 = vmatprep.subr.bf16.mxu0 0
    %2194 = vmatpush1.bf16.msra.mxu0 %v2023
    %2195 = vmatprep.subr.bf16.mxu0 0
    %2196 = vmatpush1.bf16.msra.mxu0 %v2024
    %2197 = vmatprep.subr.bf16.mxu0 0
    %2198 = vmatpush1.bf16.msra.mxu0 0
    %2199 = vmatprep.subr.bf16.mxu0 0
    %2200 = vmatpush1.bf16.msra.mxu0 0
    %2201 = vmatprep.subr.bf16.mxu0 0
    %2202 = vmatpush1.bf16.msra.mxu0 0
    %2203 = vmatprep.subr.bf16.mxu0 0
    %2204 = vmatpush1.bf16.msra.mxu0 0
    %2205 = vmatprep.subr.bf16.mxu0 0
    %2206 = vmatpush1.bf16.msra.mxu0 0
    %2207 = vmatprep.subr.bf16.mxu0 0
    %2208 = vmatpush1.bf16.msra.mxu0 0
    %2209 = vmatprep.subr.bf16.mxu0 0
    %2210 = vmatpush1.bf16.msra.mxu0 0
    %2211 = vmatprep.subr.bf16.mxu0 0
    %2212 = vmatpush1.bf16.msra.mxu0 0
    %2213 = vmatprep.mubr.bf16.mxu0 0
    %2214 = vmatmul.mubr.bf16.gmra.mrb[0].mxu0 %v2180
    %v2215 = vpop.f32.mrb[0].mxu0
    %v2216 = vadd.f32 0.0, %v2215
    %v2217 = vpop.f32.mrb[0].mxu0
    %v2218 = vpop.f32.mrb[0].mxu0
    %v2219 = vpop.f32.mrb[0].mxu0
    %2220 = vdwg.mxu0
    %v2222 = vrot.slane %v2216, 5
    %v2224 = vadd.f32 %v1945, %v2222
    %v2225 = vxor.u32 %v2224, 2147483648
    %v2226 = vmul.f32 %v2225, 1.442695
    %v2227 = vpow.pop %v2226
    %v2228 = vadd.f32 %v2227, 1.0
    %v2229 = vrcp.pop %v2228
    %v2230 = vmul.f32 1.0, %v2229
    %v2232 = vrot.slane %v2230, 3
    %2234 = vrot.lane.b32.xlu0 %v2232, 64
    %v2235 = vpop.permute.xlu0 %2234
    %v2236 = vadd.f32 %v2216, %v1840
    %v2237 = vmul.f32 %v2235, %v2236
    %v2239 = vrot.slane %v2237, 5
    %v2241 = vadd.f32 %v1945, %v2239
    %v2242 = vtanh.pop %v2241
    %v2244 = vrot.slane %v2242, 3
    %2246 = vrot.lane.b32.xlu0 %v2244, 64
    %v2247 = vpop.permute.xlu0 %2246
    %2248 = vrot.lane.b32.xlu0 %v2232, 96
    %v2249 = vpop.permute.xlu0 %2248
    %v2250 = vsub.f32 %v2179, %v2247
    %v2251 = vmul.f32 %v2249, %v2250
    %v2252 = vadd.f32 %v2247, %v2251
    %v2253 = vsel %vm353, %v2252, 0.0
    %v2254 = vpack.c.bf16 %v2253, %v2253
    %2255 = vmatprep.subr.bf16.mxu0 0
    %2256 = vmatpush1.bf16.msra.mxu0 %v2017
    %2257 = vmatprep.subr.bf16.mxu0 0
    %2258 = vmatpush1.bf16.msra.mxu0 %v2018
    %2259 = vmatprep.subr.bf16.mxu0 0
    %2260 = vmatpush1.bf16.msra.mxu0 %v2019
    %2261 = vmatprep.subr.bf16.mxu0 0
    %2262 = vmatpush1.bf16.msra.mxu0 %v2020
    %2263 = vmatprep.subr.bf16.mxu0 0
    %2264 = vmatpush1.bf16.msra.mxu0 %v2021
    %2265 = vmatprep.subr.bf16.mxu0 0
    %2266 = vmatpush1.bf16.msra.mxu0 %v2022
    %2267 = vmatprep.subr.bf16.mxu0 0
    %2268 = vmatpush1.bf16.msra.mxu0 %v2023
    %2269 = vmatprep.subr.bf16.mxu0 0
    %2270 = vmatpush1.bf16.msra.mxu0 %v2024
    %2271 = vmatprep.subr.bf16.mxu0 0
    %2272 = vmatpush1.bf16.msra.mxu0 0
    %2273 = vmatprep.subr.bf16.mxu0 0
    %2274 = vmatpush1.bf16.msra.mxu0 0
    %2275 = vmatprep.subr.bf16.mxu0 0
    %2276 = vmatpush1.bf16.msra.mxu0 0
    %2277 = vmatprep.subr.bf16.mxu0 0
    %2278 = vmatpush1.bf16.msra.mxu0 0
    %2279 = vmatprep.subr.bf16.mxu0 0
    %2280 = vmatpush1.bf16.msra.mxu0 0
    %2281 = vmatprep.subr.bf16.mxu0 0
    %2282 = vmatpush1.bf16.msra.mxu0 0
    %2283 = vmatprep.subr.bf16.mxu0 0
    %2284 = vmatpush1.bf16.msra.mxu0 0
    %2285 = vmatprep.subr.bf16.mxu0 0
    %2286 = vmatpush1.bf16.msra.mxu0 0
    %2287 = vmatprep.mubr.bf16.mxu0 0
    %2288 = vmatmul.mubr.bf16.gmra.mrb[0].mxu0 %v2254
    %v2289 = vpop.f32.mrb[0].mxu0
    %v2290 = vadd.f32 0.0, %v2289
    %v2291 = vpop.f32.mrb[0].mxu0
    %v2292 = vpop.f32.mrb[0].mxu0
    %v2293 = vpop.f32.mrb[0].mxu0
    %2294 = vdwg.mxu0
    %v2296 = vrot.slane %v2290, 4
    %v2298 = vadd.f32 %v1945, %v2296
    %v2299 = vxor.u32 %v2298, 2147483648
    %v2300 = vmul.f32 %v2299, 1.442695
    %v2301 = vpow.pop %v2300
    %v2302 = vadd.f32 %v2301, 1.0
    %v2303 = vrcp.pop %v2302
    %v2304 = vmul.f32 1.0, %v2303
    %v2306 = vrot.slane %v2304, 4
    %2308 = vrot.lane.b32.xlu0 %v2306, 64
    %v2309 = vpop.permute.xlu0 %2308
    %v2310 = vadd.f32 %v2290, %v1840
    %v2311 = vmul.f32 %v2309, %v2310
    %v2313 = vrot.slane %v2311, 4
    %v2315 = vadd.f32 %v1945, %v2313
    %v2316 = vtanh.pop %v2315
    %v2318 = vrot.slane %v2316, 4
    %2320 = vrot.lane.b32.xlu0 %v2318, 64
    %v2321 = vpop.permute.xlu0 %2320
    %2322 = vrot.lane.b32.xlu0 %v2306, 96
    %v2323 = vpop.permute.xlu0 %2322
    %v2324 = vsub.f32 %v2253, %v2321
    %v2325 = vmul.f32 %v2323, %v2324
    %v2326 = vadd.f32 %v2321, %v2325
    %v2327 = vsel %vm353, %v2326, 0.0
    %v2328 = vpack.c.bf16 %v2327, %v2327
    %2329 = vmatprep.subr.bf16.mxu0 0
    %2330 = vmatpush1.bf16.msra.mxu0 %v2017
    %2331 = vmatprep.subr.bf16.mxu0 0
    %2332 = vmatpush1.bf16.msra.mxu0 %v2018
    %2333 = vmatprep.subr.bf16.mxu0 0
    %2334 = vmatpush1.bf16.msra.mxu0 %v2019
    %2335 = vmatprep.subr.bf16.mxu0 0
    %2336 = vmatpush1.bf16.msra.mxu0 %v2020
    %2337 = vmatprep.subr.bf16.mxu0 0
    %2338 = vmatpush1.bf16.msra.mxu0 %v2021
    %2339 = vmatprep.subr.bf16.mxu0 0
    %2340 = vmatpush1.bf16.msra.mxu0 %v2022
    %2341 = vmatprep.subr.bf16.mxu0 0
    %2342 = vmatpush1.bf16.msra.mxu0 %v2023
    %2343 = vmatprep.subr.bf16.mxu0 0
    %2344 = vmatpush1.bf16.msra.mxu0 %v2024
    %2345 = vmatprep.subr.bf16.mxu0 0
    %2346 = vmatpush1.bf16.msra.mxu0 0
    %2347 = vmatprep.subr.bf16.mxu0 0
    %2348 = vmatpush1.bf16.msra.mxu0 0
    %2349 = vmatprep.subr.bf16.mxu0 0
    %2350 = vmatpush1.bf16.msra.mxu0 0
    %2351 = vmatprep.subr.bf16.mxu0 0
    %2352 = vmatpush1.bf16.msra.mxu0 0
    %2353 = vmatprep.subr.bf16.mxu0 0
    %2354 = vmatpush1.bf16.msra.mxu0 0
    %2355 = vmatprep.subr.bf16.mxu0 0
    %2356 = vmatpush1.bf16.msra.mxu0 0
    %2357 = vmatprep.subr.bf16.mxu0 0
    %2358 = vmatpush1.bf16.msra.mxu0 0
    %2359 = vmatprep.subr.bf16.mxu0 0
    %2360 = vmatpush1.bf16.msra.mxu0 0
    %2361 = vmatprep.mubr.bf16.mxu0 0
    %2362 = vmatmul.mubr.bf16.gmra.mrb[0].mxu0 %v2328
    %v2363 = vpop.f32.mrb[0].mxu0
    %v2364 = vadd.f32 0.0, %v2363
    %v2365 = vpop.f32.mrb[0].mxu0
    %v2366 = vpop.f32.mrb[0].mxu0
    %v2367 = vpop.f32.mrb[0].mxu0
    %2368 = vdwg.mxu0
    %v2370 = vrot.slane %v2364, 3
    %v2372 = vadd.f32 %v1945, %v2370
    %v2373 = vxor.u32 %v2372, 2147483648
    %v2374 = vmul.f32 %v2373, 1.442695
    %v2375 = vpow.pop %v2374
    %v2376 = vadd.f32 %v2375, 1.0
    %v2377 = vrcp.pop %v2376
    %v2378 = vmul.f32 1.0, %v2377
    %v2380 = vrot.slane %v2378, 5
    %2382 = vrot.lane.b32.xlu0 %v2380, 64
    %v2383 = vpop.permute.xlu0 %2382
    %v2384 = vadd.f32 %v2364, %v1840
    %v2385 = vmul.f32 %v2383, %v2384
    %v2387 = vrot.slane %v2385, 3
    %v2389 = vadd.f32 %v1945, %v2387
    %v2390 = vtanh.pop %v2389
    %v2392 = vrot.slane %v2390, 5
    %2394 = vrot.lane.b32.xlu0 %v2392, 64
    %v2395 = vpop.permute.xlu0 %2394
    %2396 = vrot.lane.b32.xlu0 %v2380, 96
    %v2397 = vpop.permute.xlu0 %2396
    %v2398 = vsub.f32 %v2327, %v2395
    %v2399 = vmul.f32 %v2397, %v2398
    %v2400 = vadd.f32 %v2395, %v2399
    %v2401 = vsel %vm353, %v2400, 0.0
    %v2402 = vpack.c.bf16 %v2401, %v2401
    %2403 = vmatprep.subr.bf16.mxu0 0
    %2404 = vmatpush1.bf16.msra.mxu0 %v2017
    %2405 = vmatprep.subr.bf16.mxu0 0
    %2406 = vmatpush1.bf16.msra.mxu0 %v2018
    %2407 = vmatprep.subr.bf16.mxu0 0
    %2408 = vmatpush1.bf16.msra.mxu0 %v2019
    %2409 = vmatprep.subr.bf16.mxu0 0
    %2410 = vmatpush1.bf16.msra.mxu0 %v2020
    %2411 = vmatprep.subr.bf16.mxu0 0
    %2412 = vmatpush1.bf16.msra.mxu0 %v2021
    %2413 = vmatprep.subr.bf16.mxu0 0
    %2414 = vmatpush1.bf16.msra.mxu0 %v2022
    %2415 = vmatprep.subr.bf16.mxu0 0
    %2416 = vmatpush1.bf16.msra.mxu0 %v2023
    %2417 = vmatprep.subr.bf16.mxu0 0
    %2418 = vmatpush1.bf16.msra.mxu0 %v2024
    %2419 = vmatprep.subr.bf16.mxu0 0
    %2420 = vmatpush1.bf16.msra.mxu0 0
    %2421 = vmatprep.subr.bf16.mxu0 0
    %2422 = vmatpush1.bf16.msra.mxu0 0
    %2423 = vmatprep.subr.bf16.mxu0 0
    %2424 = vmatpush1.bf16.msra.mxu0 0
    %2425 = vmatprep.subr.bf16.mxu0 0
    %2426 = vmatpush1.bf16.msra.mxu0 0
    %2427 = vmatprep.subr.bf16.mxu0 0
    %2428 = vmatpush1.bf16.msra.mxu0 0
    %2429 = vmatprep.subr.bf16.mxu0 0
    %2430 = vmatpush1.bf16.msra.mxu0 0
    %2431 = vmatprep.subr.bf16.mxu0 0
    %2432 = vmatpush1.bf16.msra.mxu0 0
    %2433 = vmatprep.subr.bf16.mxu0 0
    %2434 = vmatpush1.bf16.msra.mxu0 0
    %2435 = vmatprep.mubr.bf16.mxu0 0
    %2436 = vmatmul.mubr.bf16.gmra.mrb[0].mxu0 %v2402
    %v2437 = vpop.f32.mrb[0].mxu0
    %v2438 = vadd.f32 0.0, %v2437
    %v2439 = vpop.f32.mrb[0].mxu0
    %v2440 = vpop.f32.mrb[0].mxu0
    %v2441 = vpop.f32.mrb[0].mxu0
    %2442 = vdwg.mxu0
    %v2444 = vrot.slane %v2438, 2
    %v2446 = vadd.f32 %v1945, %v2444
    %v2447 = vxor.u32 %v2446, 2147483648
    %v2448 = vmul.f32 %v2447, 1.442695
    %v2449 = vpow.pop %v2448
    %v2450 = vadd.f32 %v2449, 1.0
    %v2451 = vrcp.pop %v2450
    %v2452 = vmul.f32 1.0, %v2451
    %v2454 = vrot.slane %v2452, 6
    %2456 = vrot.lane.b32.xlu0 %v2454, 64
    %v2457 = vpop.permute.xlu0 %2456
    %v2458 = vadd.f32 %v2438, %v1840
    %v2459 = vmul.f32 %v2457, %v2458
    %v2461 = vrot.slane %v2459, 2
    %v2463 = vadd.f32 %v1945, %v2461
    %v2464 = vtanh.pop %v2463
    %v2466 = vrot.slane %v2464, 6
    %2468 = vrot.lane.b32.xlu0 %v2466, 64
    %v2469 = vpop.permute.xlu0 %2468
    %2470 = vrot.lane.b32.xlu0 %v2454, 96
    %v2471 = vpop.permute.xlu0 %2470
    %v2472 = vsub.f32 %v2401, %v2469
    %v2473 = vmul.f32 %v2471, %v2472
    %v2474 = vadd.f32 %v2469, %v2473
    %v2475 = vsel %vm353, %v2474, 0.0
    %v2476 = vpack.c.bf16 %v2475, %v2475
    %2477 = vmatprep.subr.bf16.mxu0 0
    %2478 = vmatpush1.bf16.msra.mxu0 %v2017
    %2479 = vmatprep.subr.bf16.mxu0 0
    %2480 = vmatpush1.bf16.msra.mxu0 %v2018
    %2481 = vmatprep.subr.bf16.mxu0 0
    %2482 = vmatpush1.bf16.msra.mxu0 %v2019
    %2483 = vmatprep.subr.bf16.mxu0 0
    %2484 = vmatpush1.bf16.msra.mxu0 %v2020
    %2485 = vmatprep.subr.bf16.mxu0 0
    %2486 = vmatpush1.bf16.msra.mxu0 %v2021
    %2487 = vmatprep.subr.bf16.mxu0 0
    %2488 = vmatpush1.bf16.msra.mxu0 %v2022
    %2489 = vmatprep.subr.bf16.mxu0 0
    %2490 = vmatpush1.bf16.msra.mxu0 %v2023
    %2491 = vmatprep.subr.bf16.mxu0 0
    %2492 = vmatpush1.bf16.msra.mxu0 %v2024
    %2493 = vmatprep.subr.bf16.mxu0 0
    %2494 = vmatpush1.bf16.msra.mxu0 0
    %2495 = vmatprep.subr.bf16.mxu0 0
    %2496 = vmatpush1.bf16.msra.mxu0 0
    %2497 = vmatprep.subr.bf16.mxu0 0
    %2498 = vmatpush1.bf16.msra.mxu0 0
    %2499 = vmatprep.subr.bf16.mxu0 0
    %2500 = vmatpush1.bf16.msra.mxu0 0
    %2501 = vmatprep.subr.bf16.mxu0 0
    %2502 = vmatpush1.bf16.msra.mxu0 0
    %2503 = vmatprep.subr.bf16.mxu0 0
    %2504 = vmatpush1.bf16.msra.mxu0 0
    %2505 = vmatprep.subr.bf16.mxu0 0
    %2506 = vmatpush1.bf16.msra.mxu0 0
    %2507 = vmatprep.subr.bf16.mxu0 0
    %2508 = vmatpush1.bf16.msra.mxu0 0
    %2509 = vmatprep.mubr.bf16.mxu0 0
    %2510 = vmatmul.mubr.bf16.gmra.mrb[0].mxu0 %v2476
    %v2511 = vpop.f32.mrb[0].mxu0
    %v2512 = vadd.f32 0.0, %v2511
    %v2513 = vpop.f32.mrb[0].mxu0
    %v2514 = vpop.f32.mrb[0].mxu0
    %v2515 = vpop.f32.mrb[0].mxu0
    %2516 = vdwg.mxu0
    %v2518 = vrot.slane %v2512, 1
    %v2520 = vadd.f32 %v1945, %v2518
    %v2521 = vxor.u32 %v2520, 2147483648
    %v2522 = vmul.f32 %v2521, 1.442695
    %v2523 = vpow.pop %v2522
    %v2524 = vadd.f32 %v2523, 1.0
    %v2525 = vrcp.pop %v2524
    %v2526 = vmul.f32 1.0, %v2525
    %v2528 = vrot.slane %v2526, 7
    %2530 = vrot.lane.b32.xlu0 %v2528, 64
    %v2531 = vpop.permute.xlu0 %2530
    %v2532 = vadd.f32 %v2512, %v1840
    %v2533 = vmul.f32 %v2531, %v2532
    %v2535 = vrot.slane %v2533, 1
    %v2537 = vadd.f32 %v1945, %v2535
    %v2538 = vtanh.pop %v2537
    %v2540 = vrot.slane %v2538, 7
    %2542 = vrot.lane.b32.xlu0 %v2540, 64
    %v2543 = vpop.permute.xlu0 %2542
    %2544 = vrot.lane.b32.xlu0 %v2528, 96
    %v2545 = vpop.permute.xlu0 %2544
    %v2546 = vsub.f32 %v2475, %v2543
    %v2547 = vmul.f32 %v2545, %v2546
    %v2548 = vadd.f32 %v2543, %v2547
    %v2549 = vsel %vm353, %v2548, 0.0
    %v2551 = vrot.slane %v2105, 7
    %v2554 = vrot.slane %v2179, 6
    %v2557 = vrot.slane %v2253, 5
    %v2560 = vrot.slane %v2327, 4
    %v2563 = vrot.slane %v2401, 3
    %v2566 = vrot.slane %v2475, 2
    %v2569 = vrot.slane %v2549, 1
    %v2571 = vsel %vm1086, %v1967, %v2551
    %v2572 = vsel %vm1088, %v2571, %v2554
    %v2573 = vsel %vm1090, %v2572, %v2557
    %v2574 = vsel %vm1092, %v2573, %v2560
    %v2575 = vsel %vm1094, %v2574, %v2563
    %v2576 = vsel %vm1096, %v2575, %v2566
    %v2577 = vsel %vm1098, %v2576, %v2569
    %2578 = vst [vmem:[#allocation11] sm:$0xff] %v2577
    // Predicated region
    $region34: #{tpu_custom_call.1} parent=1 // pred_check
      _
    $region35: #{tpu_custom_call.1} parent=1 // pred_check_branch
      %2580 = sbr.rel (0) target = $region37
    $region36: #{tpu_custom_call.1} parent=1 // pred_region
      %s2582 = ssub.s32 128, 128
      %2583 = vsyncadd [#allocation4], %s2582
      %s2585 = sshll.u32 [#allocation10], 4
      %s2586 = int_to_ptr.vmem [resolvable:$true] %s2585
      %2588 = dma.vmem_to_hbm [thread:$0]  %s2586, 128, %s4, [#allocation4]
    $region37: #{tpu_custom_call.1} parent=1 // pred_fallthru
      _
    // Predicated region
    $region38: #{tpu_custom_call.1} parent=1 // pred_check
      _
    $region39: #{tpu_custom_call.1} parent=1 // pred_check_branch
      %2590 = sbr.rel (0) target = $region41
    $region40: #{tpu_custom_call.1} parent=1 // pred_region
      %s2592 = ssub.s32 128, 128
      %2593 = vsyncadd [#allocation12], %s2592
      %s2595 = sshll.u32 [#allocation11], 4
      %s2596 = int_to_ptr.vmem [resolvable:$true] %s2595
      %2598 = dma.vmem_to_hbm [thread:$0]  %s2596, 128, %s5, [#allocation12]
    $region41: #{tpu_custom_call.1} parent=1 // pred_fallthru
      _
    // Predicated region
    $region42: #{tpu_custom_call.1} parent=1 // pred_check
      _
    $region43: #{tpu_custom_call.1} parent=1 // pred_check_branch
      %2600 = sbr.rel (0) target = $region45
    $region44: #{tpu_custom_call.1} parent=1 // pred_region
      %2601 = dma.done [#allocation4], 128
    $region45: #{tpu_custom_call.1} parent=1 // pred_fallthru
      _
    // Predicated region
    $region46: #{tpu_custom_call.1} parent=1 // pred_check
      _
    $region47: #{tpu_custom_call.1} parent=1 // pred_check_branch
      %2603 = sbr.rel (0) target = $region49
    $region48: #{tpu_custom_call.1} parent=1 // pred_region
      %2604 = dma.done [#allocation12], 128
    $region49: #{tpu_custom_call.1} parent=1 // pred_fallthru
      _
    %2605 = vsyncpa [#allocation3], 1
    %2606 = vsyncpa [#allocation6], 1
    %2607 = vsyncpa [#allocation9], 1
    %2608 = vsyncpa [#allocation4], 1
    %2609 = vsyncpa [#allocation12], 1

</llo_original>
